<compile_context>
chip_gen: v7x
topology: tpu7x:2x2x1
jax: 0.10.0
libtpu: 0.0.40
codegen_flags: <defaults>
</compile_context>

<pallas_src>
import functools

import jax
import jax.numpy as jnp
from jax.experimental import pallas as pl
from jax.experimental.pallas import tpu as pltpu


def pointer_net_kernel(num_layers, output_size, score_dtype, x_ref, *refs):
    """Everything after the embedding lookup, fully inside VMEM.

    Layouts are time/step-major: x_ref [S, tb, E], hseq [S, tb, H],
    dhseq [out, tb, H], pred [out, tb, S].
    """
    n_enc = 3 * num_layers
    enc_refs = refs[:n_enc]
    (dec_whh_ref, dec_b_ref,
     w1_ref, w2_ref, b12_ref,
     v_w_ref, v_b_ref,
     pred_ref, xproj_ref, hseq_ref, dhseq_ref) = refs[n_enc:]

    f32, bf16 = jnp.float32, jnp.bfloat16

    S, tb, _ = x_ref.shape
    H = dec_whh_ref.shape[0]
    G = 4 * H

    # ---- Encoder: multi-layer LSTM, batch_first, zero initial state --------
    layer_in = x_ref[...]                              # [S, tb, E] bf16, time-major
    h_last = jnp.zeros((tb, H), f32)
    enc_unroll = True if S <= 16 else 4
    for l in range(num_layers):
        wih = enc_refs[3 * l][...]                     # [in_l, 4H] bf16
        whh = enc_refs[3 * l + 1][...]                 # [H, 4H]    bf16
        b = enc_refs[3 * l + 2][...]                   # [1, 4H]    f32 (bih + bhh)

        # Hoisted input projection: ONE matmul for all timesteps, bias folded in.
        in_dim = layer_in.shape[-1]
        xproj = jnp.dot(layer_in.reshape(S * tb, in_dim), wih,
                        preferred_element_type=f32) + b            # [S*tb, 4H]
        xproj_ref[...] = xproj.reshape(S, tb, G)

        # TODO(synk): weight-stationary MXU driving (pltpu.matmul_push_rhs /
        # matmul_acc_lhs) would avoid re-pushing whh on every serial step.
        def enc_step(t, carry, whh=whh):
            h, c = carry
            gates = xproj_ref[t] + jnp.dot(h.astype(bf16), whh,
                                           preferred_element_type=f32)
            i = jax.nn.sigmoid(gates[:, 0 * H:1 * H])
            f = jax.nn.sigmoid(gates[:, 1 * H:2 * H])
            g = jnp.tanh(gates[:, 2 * H:3 * H])
            o = jax.nn.sigmoid(gates[:, 3 * H:4 * H])
            c_new = f * c + i * g
            h_new = o * jnp.tanh(c_new)
            hseq_ref[t] = h_new.astype(hseq_ref.dtype)      # bf16 stash
            return h_new, c_new

        h0 = jnp.zeros((tb, H), f32)
        c0 = jnp.zeros((tb, H), f32)
        h_last, _ = jax.lax.fori_loop(0, S, enc_step, (h0, c0),
                                      unroll=enc_unroll)
        layer_in = hseq_ref[...]                       # [S, tb, H] bf16 next-layer input

    # ---- Decoder recurrence (input is always zeros -> only h @ W_hh + b) ----
    dec_whh = dec_whh_ref[...]                                    # [H, 4H] bf16
    dec_b = jnp.broadcast_to(dec_b_ref[...], (tb, G))             # hoisted broadcast
    dec_unroll = True if output_size <= 16 else 4

    def dec_step(i, carry):
        dh, dc = carry
        gates = jnp.dot(dh.astype(bf16), dec_whh,
                        preferred_element_type=f32) + dec_b
        ii = jax.nn.sigmoid(gates[:, 0 * H:1 * H])
        ff = jax.nn.sigmoid(gates[:, 1 * H:2 * H])
        gg = jnp.tanh(gates[:, 2 * H:3 * H])
        oo = jax.nn.sigmoid(gates[:, 3 * H:4 * H])
        dc_new = ff * dc + ii * gg
        dh_new = oo * jnp.tanh(dc_new)
        dhseq_ref[i] = dh_new.astype(dhseq_ref.dtype)             # bf16 stash
        return dh_new, dc_new

    dh0 = jnp.zeros((tb, H), f32)
    dc0 = h_last                                       # out_e.transpose(1, 0)[-1]
    jax.lax.fori_loop(0, output_size, dec_step, (dh0, dc0), unroll=dec_unroll)

    # ---- Attention / pointer scoring -----------------------------------------
    Wt = w1_ref.shape[1]
    # W1(out_e): one [S*tb, H] @ [H, Wt] matmul (bias folded into b12 below).
    w1oe = jnp.dot(hseq_ref[...].reshape(S * tb, H), w1_ref[...],
                   preferred_element_type=f32).reshape(S, tb, Wt)
    # W2(dh_i) for every decoder step: one [out*tb, H] @ [H, Wt] matmul,
    # with b12 = b1 + b2 applied to the smaller projection only.
    w2dh = (jnp.dot(dhseq_ref[...].reshape(output_size * tb, H), w2_ref[...],
                    preferred_element_type=f32) + b12_ref[...]
            ).reshape(output_size, tb, Wt)

    sd = score_dtype
    w1oe_sd = w1oe.astype(sd)                          # hoisted casts
    w2dh_sd = w2dh.astype(sd)
    vw_sd = v_w_ref[...].astype(sd)                    # [1, Wt]
    v_b = v_b_ref[...]                                 # [1, 1] f32

    # Short unrolled loop over the (small) output_size axis, reusing w1oe:
    # bounds the largest live intermediate to S*tb*Wt (v7x VMEM/vreg pressure)
    # while keeping the W1/W2 matmuls fully batched above.
    for o in range(output_size):
        u = jnp.tanh(w1oe_sd + w2dh_sd[o])                        # [S, tb, Wt]
        sc = jnp.sum((u * vw_sd).astype(jnp.float32), axis=-1) + v_b   # [S, tb]
        sc = sc.T                                                 # [tb, S] (lane-major S)
        # log_softmax over the sequence axis (dim=1 after the PyTorch transpose).
        m = jnp.max(sc, axis=-1, keepdims=True)
        z = sc - m
        lse = jnp.log(jnp.sum(jnp.exp(z), axis=-1, keepdims=True))
        pred_ref[o] = z - lse                                     # [tb, S]


def _default_score_dtype():
    """bf16 elementwise scoring on chips with a bf16 VPU/EUP (v6e and newer)."""
    try:
        kind = jax.devices()[0].device_kind.lower()
    except Exception:
        return jnp.float32
    if any(tag in kind for tag in ("v2", "v3", "v4", "v5")):
        return jnp.float32
    return jnp.bfloat16


def pointer_net_forward(tokens, params, *, hidden_size, weight_size,
                        output_size, num_layers, batch_tile=None,
                        score_dtype=None):
    H, Wt = hidden_size, weight_size
    f32, bf16 = jnp.float32, jnp.bfloat16
    if score_dtype is None:
        score_dtype = _default_score_dtype()

    B, S = tokens.shape
    E = params['embedding'].shape[1]

    # Embedding lookup (data-dependent gather) stays in plain JAX glue, done
    # directly in time-major order so the kernel never transposes activations.
    # TODO(synk): move in-kernel via PrefetchScalarGridSpec + pl.Element gather
    # once the kernel is DMA-bound at production sizes.
    x_tm = params['embedding'][tokens.T].astype(bf16)             # [S, B, E]

    # Default: whole batch in one grid step (no serial grid overhead on
    # single-TC v5e/v6e). On v7x pass batch_tile=B//2 so grid=(2,) maps onto
    # the two TensorCores. tb should stay a multiple of 8 to fill f32 sublanes.
    tb = B if batch_tile is None else batch_tile
    assert B % tb == 0, (B, tb)
    grid = (B // tb,)

    def _full(arr):
        nd = arr.ndim
        return pl.BlockSpec(arr.shape, lambda b, _nd=nd: (0,) * _nd)

    kernel_inputs = [x_tm]
    in_specs = [pl.BlockSpec((S, tb, E), lambda b: (0, b, 0))]

    for l in range(num_layers):
        wih_t = params[f'enc_wih_{l}'].T.astype(bf16)                        # [in_l, 4H]
        whh_t = params[f'enc_whh_{l}'].T.astype(bf16)                        # [H, 4H]
        b_l = (params[f'enc_bih_{l}'] + params[f'enc_bhh_{l}'])[None, :].astype(f32)
        kernel_inputs += [wih_t, whh_t, b_l]
        in_specs += [_full(wih_t), _full(whh_t), _full(b_l)]

    tail = [
        params['dec_whh'].T.astype(bf16),                                    # [H, 4H]
        (params['dec_bih'] + params['dec_bhh'])[None, :].astype(f32),        # [1, 4H]
        params['w1'].T.astype(bf16),                                         # [H, Wt]
        params['w2'].T.astype(bf16),                                         # [H, Wt]
        (params['b1'] + params['b2'])[None, :].astype(f32),                  # [1, Wt] folded bias
        params['v_w'].astype(f32),                                           # [1, Wt]
        params['v_b'][None, :].astype(f32),                                  # [1, 1]
    ]
    kernel_inputs += tail
    in_specs += [_full(a) for a in tail]

    # Advisory cost estimate so XLA schedules surrounding ops around the call.
    in_dims = [E] + [H] * (num_layers - 1)
    flops_per_b = sum(2 * S * d * 4 * H + 2 * S * H * 4 * H for d in in_dims)
    flops_per_b += 2 * S * H * Wt                                  # W1(out_e)
    flops_per_b += output_size * (2 * H * 4 * H + 2 * H * Wt)      # decoder + W2
    flops_per_b += 3 * output_size * S * Wt                        # scoring
    trans_per_b = (S * num_layers * 5 * H + output_size * 5 * H
                   + output_size * S * (Wt + 1))
    bytes_accessed = int(sum(a.size * a.dtype.itemsize for a in kernel_inputs)
                         + B * output_size * S * 4)
    cost = pl.CostEstimate(flops=int(B * flops_per_b),
                           transcendentals=int(B * trans_per_b),
                           bytes_accessed=bytes_accessed)

    # VMEM budget: scratch + double-buffered x/pred blocks + resident weights
    # + scoring intermediates. Raise the scoped limit only when needed so a
    # tile sized for v6e's 128 MiB does not silently OOM on v7x's 64 MiB.
    sd_bytes = jnp.dtype(score_dtype).itemsize
    weight_bytes = sum(a.size * a.dtype.itemsize for a in kernel_inputs[1:])
    vmem_est = (4 * S * tb * 4 * H                 # xproj scratch (f32)
                + 2 * S * tb * H                   # hseq scratch (bf16)
                + 2 * output_size * tb * H         # dhseq scratch (bf16)
                + 2 * (S * tb * E * 2)             # x block, double-buffered
                + 2 * (output_size * tb * S * 4)   # pred block, double-buffered
                + 2 * weight_bytes                 # resident weights
                + sd_bytes * S * tb * Wt           # per-step u
                + 4 * S * tb * Wt + 4 * output_size * tb * Wt)  # w1oe / w2dh
    compiler_kwargs = dict(dimension_semantics=("parallel",))
    if vmem_est > 16 * 2 ** 20:
        compiler_kwargs['vmem_limit_bytes'] = int(min(vmem_est * 5 // 4,
                                                      64 * 2 ** 20))

    kernel = functools.partial(pointer_net_kernel, num_layers, output_size,
                               score_dtype)
    pred_sbm = pl.pallas_call(                         # [out, B, S] step-major
        kernel,
        grid=grid,
        out_shape=jax.ShapeDtypeStruct((output_size, B, S), f32),
        in_specs=in_specs,
        out_specs=pl.BlockSpec((output_size, tb, S), lambda b: (0, b, 0)),
        scratch_shapes=[
            pltpu.VMEM((S, tb, 4 * H), f32),           # hoisted input projection
            pltpu.VMEM((S, tb, H), bf16),              # encoder hidden states
            pltpu.VMEM((output_size, tb, H), bf16),    # decoder hidden states
        ],
        compiler_params=pltpu.CompilerParams(**compiler_kwargs),
        cost_estimate=cost,
    )(*kernel_inputs)

    # Cheap XLA-side relayout to the PyTorch output convention [B, out, S].
    return jnp.swapaxes(pred_sbm, 0, 1)


if __name__ == "__main__":
    # Small, self-consistent sizes. B=8 fills a full sublane of f32 per
    # recurrence step (per perf review).
    B, S = 8, 8                       # batch, sequence length
    dict_size = 50
    E = 32                            # embed_size
    H = 32                            # hidden_size
    Wt = 32                           # weight_size
    output_size = 4
    num_layers = 1

    key = jax.random.PRNGKey(0)
    keys = iter(jax.random.split(key, 24))

    def init(shape):
        return (0.1 * jax.random.normal(next(keys), shape)).astype(jnp.float32)

    params = {'embedding': init((dict_size, E))}
    for l in range(num_layers):
        in_l = E if l == 0 else H
        params[f'enc_wih_{l}'] = init((4 * H, in_l))
        params[f'enc_whh_{l}'] = init((4 * H, H))
        params[f'enc_bih_{l}'] = init((4 * H,))
        params[f'enc_bhh_{l}'] = init((4 * H,))
    # Decoder LSTMCell. weight_ih is mathematically unused (input is always
    # zeros), so it is not materialized; both biases ARE used and included.
    params['dec_whh'] = init((4 * H, H))
    params['dec_bih'] = init((4 * H,))
    params['dec_bhh'] = init((4 * H,))
    params['w1'] = init((Wt, H)); params['b1'] = init((Wt,))
    params['w2'] = init((Wt, H)); params['b2'] = init((Wt,))
    params['v_w'] = init((1, Wt)); params['v_b'] = init((1,))

    tokens = jax.random.randint(jax.random.PRNGKey(1), (B, S), 0, dict_size,
                                dtype=jnp.int32)

    # Default batch_tile=None -> whole batch, grid=(1,) (per perf review for
    # single-TC v5e/v6e). On v7x call with batch_tile=B//2 for both cores.
    pred = pointer_net_forward(tokens, params, hidden_size=H, weight_size=Wt,
                               output_size=output_size, num_layers=num_layers)
    jax.block_until_ready(pred)
    assert pred.shape == (B, output_size, S), pred.shape
    assert bool(jnp.all(jnp.isfinite(pred)))
    # Each row is a log-softmax over the sequence axis -> logsumexp == 0.
    assert bool(jnp.allclose(jax.scipy.special.logsumexp(pred, axis=-1), 0.0,
                             atol=1e-5))
    print("KERNEL_OK")
</pallas_src>

<mosaic_0001>
module attributes {stable_mosaic.version = 11 : i64} {
  func.func @pointer_net_kernel(%arg0: i32, %arg1: memref<8x8x32xbf16, #tpu.memory_space<vmem>>, %arg2: memref<32x128xbf16, #tpu.memory_space<vmem>>, %arg3: memref<32x128xbf16, #tpu.memory_space<vmem>>, %arg4: memref<1x128xf32, #tpu.memory_space<vmem>>, %arg5: memref<32x128xbf16, #tpu.memory_space<vmem>>, %arg6: memref<1x128xf32, #tpu.memory_space<vmem>>, %arg7: memref<32x32xbf16, #tpu.memory_space<vmem>>, %arg8: memref<32x32xbf16, #tpu.memory_space<vmem>>, %arg9: memref<1x32xf32, #tpu.memory_space<vmem>>, %arg10: memref<1x32xf32, #tpu.memory_space<vmem>>, %arg11: memref<1x1xf32, #tpu.memory_space<vmem>>, %arg12: memref<4x8x8xf32, #tpu.memory_space<vmem>>, %arg13: memref<8x8x128xf32, #tpu.memory_space<vmem>>, %arg14: memref<8x8x32xbf16, #tpu.memory_space<vmem>>, %arg15: memref<4x8x32xbf16, #tpu.memory_space<vmem>>) attributes {dimension_semantics = [#tpu.dimension_semantics<parallel>], iteration_bounds = array<i64: 1>, scalar_prefetch = 0 : i64, scratch_operands = 3 : i64, tpu.core_type = #tpu.core_type<tc>, window_params = [{transform_indices = @transform_0, window_bounds = array<i64: 8, 8, 32>}, {pipeline_mode = #tpu.pipeline_mode<synchronous>, transform_indices = @transform_1, window_bounds = array<i64: 32, 128>}, {pipeline_mode = #tpu.pipeline_mode<synchronous>, transform_indices = @transform_2, window_bounds = array<i64: 32, 128>}, {pipeline_mode = #tpu.pipeline_mode<synchronous>, transform_indices = @transform_3, window_bounds = array<i64: 1, 128>}, {pipeline_mode = #tpu.pipeline_mode<synchronous>, transform_indices = @transform_4, window_bounds = array<i64: 32, 128>}, {pipeline_mode = #tpu.pipeline_mode<synchronous>, transform_indices = @transform_5, window_bounds = array<i64: 1, 128>}, {pipeline_mode = #tpu.pipeline_mode<synchronous>, transform_indices = @transform_6, window_bounds = array<i64: 32, 32>}, {pipeline_mode = #tpu.pipeline_mode<synchronous>, transform_indices = @transform_7, window_bounds = array<i64: 32, 32>}, {pipeline_mode = #tpu.pipeline_mode<synchronous>, transform_indices = @transform_8, window_bounds = array<i64: 1, 32>}, {pipeline_mode = #tpu.pipeline_mode<synchronous>, transform_indices = @transform_9, window_bounds = array<i64: 1, 32>}, {pipeline_mode = #tpu.pipeline_mode<synchronous>, transform_indices = @transform_10, window_bounds = array<i64: 1, 1>}, {transform_indices = @transform_11, window_bounds = array<i64: 4, 8, 8>}]} {
    %c0 = arith.constant 0 : index
    %c0_0 = arith.constant 0 : index
    %c0_1 = arith.constant 0 : index
    %0 = vector.load %arg1[%c0, %c0_0, %c0_1] : memref<8x8x32xbf16, #tpu.memory_space<vmem>>, vector<8x8x32xbf16>
    %c0_2 = arith.constant 0 : index
    %c0_3 = arith.constant 0 : index
    %1 = vector.load %arg2[%c0_2, %c0_3] : memref<32x128xbf16, #tpu.memory_space<vmem>>, vector<32x128xbf16>
    %c0_4 = arith.constant 0 : index
    %c0_5 = arith.constant 0 : index
    %2 = vector.load %arg3[%c0_4, %c0_5] : memref<32x128xbf16, #tpu.memory_space<vmem>>, vector<32x128xbf16>
    %c0_6 = arith.constant 0 : index
    %c0_7 = arith.constant 0 : index
    %3 = vector.load %arg4[%c0_6, %c0_7] : memref<1x128xf32, #tpu.memory_space<vmem>>, vector<1x128xf32>
    %4 = vector.shape_cast %0 : vector<8x8x32xbf16> to vector<64x32xbf16>
    %cst = arith.constant dense<0.000000e+00> : vector<64x128xf32>
    %5 = tpu.matmul %4, %1, %cst {dimension_numbers = #tpu.dot_dimension_numbers<[1], [0], [0], [1], [0, 0, 1, 1], [], []>} : vector<64x32xbf16>, vector<32x128xbf16>, vector<64x128xf32> -> vector<64x128xf32>
    %6 = vector.broadcast %3 : vector<1x128xf32> to vector<64x128xf32>
    %7 = arith.addf %5, %6 : vector<64x128xf32>
    %8 = vector.shape_cast %7 : vector<64x128xf32> to vector<8x8x128xf32>
    %c0_8 = arith.constant 0 : index
    %c0_9 = arith.constant 0 : index
    %c0_10 = arith.constant 0 : index
    %9 = vector.load %arg13[%c0_8, %c0_9, %c0_10] : memref<8x8x128xf32, #tpu.memory_space<vmem>>, vector<8x8x128xf32>
    tpu.vector_store %arg13[%c0_8, %c0_9, %c0_10], %8 {strides = array<i32>} : memref<8x8x128xf32, #tpu.memory_space<vmem>>, vector<8x8x128xf32>,
    %cst_11 = arith.constant 0.000000e+00 : f32
    %10 = vector.broadcast %cst_11 : f32 to vector<8x32xf32>
    %cst_12 = arith.constant 0.000000e+00 : f32
    %11 = vector.broadcast %cst_12 : f32 to vector<8x32xf32>
    %c0_i32 = arith.constant 0 : i32
    %12 = arith.index_cast %c0_i32 : i32 to index
    %c0_13 = arith.constant 0 : index
    %c0_14 = arith.constant 0 : index
    %13 = vector.load %arg13[%12, %c0_13, %c0_14] : memref<8x8x128xf32, #tpu.memory_space<vmem>>, vector<1x8x128xf32>
    %14 = vector.shape_cast %13 : vector<1x8x128xf32> to vector<8x128xf32>
    %15 = arith.truncf %10 : vector<8x32xf32> to vector<8x32xbf16>
    %cst_15 = arith.constant dense<0.000000e+00> : vector<8x128xf32>
    %16 = tpu.matmul %15, %2, %cst_15 {dimension_numbers = #tpu.dot_dimension_numbers<[1], [0], [0], [1], [0, 0, 1, 1], [], []>} : vector<8x32xbf16>, vector<32x128xbf16>, vector<8x128xf32> -> vector<8x128xf32>
    %17 = arith.addf %14, %16 : vector<8x128xf32>
    %18 = vector.extract_strided_slice %17 {offsets = [0, 0], sizes = [8, 32], strides = [1, 1]} : vector<8x128xf32> to vector<8x32xf32>
    %19 = arith.negf %18 : vector<8x32xf32>
    %20 = math.exp %19 : vector<8x32xf32>
    %cst_16 = arith.constant 1.000000e+00 : f32
    %21 = vector.broadcast %cst_16 : f32 to vector<8x32xf32>
    %22 = arith.addf %21, %20 : vector<8x32xf32>
    %23 = arith.divf %21, %22 : vector<8x32xf32>
    %24 = vector.extract_strided_slice %17 {offsets = [0, 32], sizes = [8, 32], strides = [1, 1]} : vector<8x128xf32> to vector<8x32xf32>
    %25 = arith.negf %24 : vector<8x32xf32>
    %26 = math.exp %25 : vector<8x32xf32>
    %cst_17 = arith.constant 1.000000e+00 : f32
    %27 = vector.broadcast %cst_17 : f32 to vector<8x32xf32>
    %28 = arith.addf %27, %26 : vector<8x32xf32>
    %29 = arith.divf %27, %28 : vector<8x32xf32>
    %30 = vector.extract_strided_slice %17 {offsets = [0, 64], sizes = [8, 32], strides = [1, 1]} : vector<8x128xf32> to vector<8x32xf32>
    %31 = math.tanh %30 : vector<8x32xf32>
    %32 = vector.extract_strided_slice %17 {offsets = [0, 96], sizes = [8, 32], strides = [1, 1]} : vector<8x128xf32> to vector<8x32xf32>
    %33 = arith.negf %32 : vector<8x32xf32>
    %34 = math.exp %33 : vector<8x32xf32>
    %cst_18 = arith.constant 1.000000e+00 : f32
    %35 = vector.broadcast %cst_18 : f32 to vector<8x32xf32>
    %36 = arith.addf %35, %34 : vector<8x32xf32>
    %37 = arith.divf %35, %36 : vector<8x32xf32>
    %38 = arith.mulf %29, %11 : vector<8x32xf32>
    %39 = arith.mulf %23, %31 : vector<8x32xf32>
    %40 = arith.addf %38, %39 : vector<8x32xf32>
    %41 = math.tanh %40 : vector<8x32xf32>
    %42 = arith.mulf %37, %41 : vector<8x32xf32>
    %43 = arith.truncf %42 : vector<8x32xf32> to vector<8x32xbf16>
    %44 = arith.index_cast %c0_i32 : i32 to index
    %c0_19 = arith.constant 0 : index
    %c0_20 = arith.constant 0 : index
    %45 = vector.load %arg14[%44, %c0_19, %c0_20] : memref<8x8x32xbf16, #tpu.memory_space<vmem>>, vector<1x8x32xbf16>
    %46 = vector.shape_cast %45 : vector<1x8x32xbf16> to vector<8x32xbf16>
    %47 = vector.shape_cast %43 : vector<8x32xbf16> to vector<1x8x32xbf16>
    tpu.vector_store %arg14[%44, %c0_19, %c0_20], %47 {strides = array<i32>} : memref<8x8x32xbf16, #tpu.memory_space<vmem>>, vector<1x8x32xbf16>,
    %c1_i32 = arith.constant 1 : i32
    %48 = arith.index_cast %c1_i32 : i32 to index
    %c0_21 = arith.constant 0 : index
    %c0_22 = arith.constant 0 : index
    %49 = vector.load %arg13[%48, %c0_21, %c0_22] : memref<8x8x128xf32, #tpu.memory_space<vmem>>, vector<1x8x128xf32>
    %50 = vector.shape_cast %49 : vector<1x8x128xf32> to vector<8x128xf32>
    %51 = arith.truncf %42 : vector<8x32xf32> to vector<8x32xbf16>
    %cst_23 = arith.constant dense<0.000000e+00> : vector<8x128xf32>
    %52 = tpu.matmul %51, %2, %cst_23 {dimension_numbers = #tpu.dot_dimension_numbers<[1], [0], [0], [1], [0, 0, 1, 1], [], []>} : vector<8x32xbf16>, vector<32x128xbf16>, vector<8x128xf32> -> vector<8x128xf32>
    %53 = arith.addf %50, %52 : vector<8x128xf32>
    %54 = vector.extract_strided_slice %53 {offsets = [0, 0], sizes = [8, 32], strides = [1, 1]} : vector<8x128xf32> to vector<8x32xf32>
    %55 = arith.negf %54 : vector<8x32xf32>
    %56 = math.exp %55 : vector<8x32xf32>
    %cst_24 = arith.constant 1.000000e+00 : f32
    %57 = vector.broadcast %cst_24 : f32 to vector<8x32xf32>
    %58 = arith.addf %57, %56 : vector<8x32xf32>
    %59 = arith.divf %57, %58 : vector<8x32xf32>
    %60 = vector.extract_strided_slice %53 {offsets = [0, 32], sizes = [8, 32], strides = [1, 1]} : vector<8x128xf32> to vector<8x32xf32>
    %61 = arith.negf %60 : vector<8x32xf32>
    %62 = math.exp %61 : vector<8x32xf32>
    %cst_25 = arith.constant 1.000000e+00 : f32
    %63 = vector.broadcast %cst_25 : f32 to vector<8x32xf32>
    %64 = arith.addf %63, %62 : vector<8x32xf32>
    %65 = arith.divf %63, %64 : vector<8x32xf32>
    %66 = vector.extract_strided_slice %53 {offsets = [0, 64], sizes = [8, 32], strides = [1, 1]} : vector<8x128xf32> to vector<8x32xf32>
    %67 = math.tanh %66 : vector<8x32xf32>
    %68 = vector.extract_strided_slice %53 {offsets = [0, 96], sizes = [8, 32], strides = [1, 1]} : vector<8x128xf32> to vector<8x32xf32>
    %69 = arith.negf %68 : vector<8x32xf32>
    %70 = math.exp %69 : vector<8x32xf32>
    %cst_26 = arith.constant 1.000000e+00 : f32
    %71 = vector.broadcast %cst_26 : f32 to vector<8x32xf32>
    %72 = arith.addf %71, %70 : vector<8x32xf32>
    %73 = arith.divf %71, %72 : vector<8x32xf32>
    %74 = arith.mulf %65, %40 : vector<8x32xf32>
    %75 = arith.mulf %59, %67 : vector<8x32xf32>
    %76 = arith.addf %74, %75 : vector<8x32xf32>
    %77 = math.tanh %76 : vector<8x32xf32>
    %78 = arith.mulf %73, %77 : vector<8x32xf32>
    %79 = arith.truncf %78 : vector<8x32xf32> to vector<8x32xbf16>
    %80 = arith.index_cast %c1_i32 : i32 to index
    %c0_27 = arith.constant 0 : index
    %c0_28 = arith.constant 0 : index
    %81 = vector.load %arg14[%80, %c0_27, %c0_28] : memref<8x8x32xbf16, #tpu.memory_space<vmem>>, vector<1x8x32xbf16>
    %82 = vector.shape_cast %81 : vector<1x8x32xbf16> to vector<8x32xbf16>
    %83 = vector.shape_cast %79 : vector<8x32xbf16> to vector<1x8x32xbf16>
    tpu.vector_store %arg14[%80, %c0_27, %c0_28], %83 {strides = array<i32>} : memref<8x8x32xbf16, #tpu.memory_space<vmem>>, vector<1x8x32xbf16>,
    %c2_i32 = arith.constant 2 : i32
    %84 = arith.index_cast %c2_i32 : i32 to index
    %c0_29 = arith.constant 0 : index
    %c0_30 = arith.constant 0 : index
    %85 = vector.load %arg13[%84, %c0_29, %c0_30] : memref<8x8x128xf32, #tpu.memory_space<vmem>>, vector<1x8x128xf32>
    %86 = vector.shape_cast %85 : vector<1x8x128xf32> to vector<8x128xf32>
    %87 = arith.truncf %78 : vector<8x32xf32> to vector<8x32xbf16>
    %cst_31 = arith.constant dense<0.000000e+00> : vector<8x128xf32>
    %88 = tpu.matmul %87, %2, %cst_31 {dimension_numbers = #tpu.dot_dimension_numbers<[1], [0], [0], [1], [0, 0, 1, 1], [], []>} : vector<8x32xbf16>, vector<32x128xbf16>, vector<8x128xf32> -> vector<8x128xf32>
    %89 = arith.addf %86, %88 : vector<8x128xf32>
    %90 = vector.extract_strided_slice %89 {offsets = [0, 0], sizes = [8, 32], strides = [1, 1]} : vector<8x128xf32> to vector<8x32xf32>
    %91 = arith.negf %90 : vector<8x32xf32>
    %92 = math.exp %91 : vector<8x32xf32>
    %cst_32 = arith.constant 1.000000e+00 : f32
    %93 = vector.broadcast %cst_32 : f32 to vector<8x32xf32>
    %94 = arith.addf %93, %92 : vector<8x32xf32>
    %95 = arith.divf %93, %94 : vector<8x32xf32>
    %96 = vector.extract_strided_slice %89 {offsets = [0, 32], sizes = [8, 32], strides = [1, 1]} : vector<8x128xf32> to vector<8x32xf32>
    %97 = arith.negf %96 : vector<8x32xf32>
    %98 = math.exp %97 : vector<8x32xf32>
    %cst_33 = arith.constant 1.000000e+00 : f32
    %99 = vector.broadcast %cst_33 : f32 to vector<8x32xf32>
    %100 = arith.addf %99, %98 : vector<8x32xf32>
    %101 = arith.divf %99, %100 : vector<8x32xf32>
    %102 = vector.extract_strided_slice %89 {offsets = [0, 64], sizes = [8, 32], strides = [1, 1]} : vector<8x128xf32> to vector<8x32xf32>
    %103 = math.tanh %102 : vector<8x32xf32>
    %104 = vector.extract_strided_slice %89 {offsets = [0, 96], sizes = [8, 32], strides = [1, 1]} : vector<8x128xf32> to vector<8x32xf32>
    %105 = arith.negf %104 : vector<8x32xf32>
    %106 = math.exp %105 : vector<8x32xf32>
    %cst_34 = arith.constant 1.000000e+00 : f32
    %107 = vector.broadcast %cst_34 : f32 to vector<8x32xf32>
    %108 = arith.addf %107, %106 : vector<8x32xf32>
    %109 = arith.divf %107, %108 : vector<8x32xf32>
    %110 = arith.mulf %101, %76 : vector<8x32xf32>
    %111 = arith.mulf %95, %103 : vector<8x32xf32>
    %112 = arith.addf %110, %111 : vector<8x32xf32>
    %113 = math.tanh %112 : vector<8x32xf32>
    %114 = arith.mulf %109, %113 : vector<8x32xf32>
    %115 = arith.truncf %114 : vector<8x32xf32> to vector<8x32xbf16>
    %116 = arith.index_cast %c2_i32 : i32 to index
    %c0_35 = arith.constant 0 : index
    %c0_36 = arith.constant 0 : index
    %117 = vector.load %arg14[%116, %c0_35, %c0_36] : memref<8x8x32xbf16, #tpu.memory_space<vmem>>, vector<1x8x32xbf16>
    %118 = vector.shape_cast %117 : vector<1x8x32xbf16> to vector<8x32xbf16>
    %119 = vector.shape_cast %115 : vector<8x32xbf16> to vector<1x8x32xbf16>
    tpu.vector_store %arg14[%116, %c0_35, %c0_36], %119 {strides = array<i32>} : memref<8x8x32xbf16, #tpu.memory_space<vmem>>, vector<1x8x32xbf16>,
    %c3_i32 = arith.constant 3 : i32
    %120 = arith.index_cast %c3_i32 : i32 to index
    %c0_37 = arith.constant 0 : index
    %c0_38 = arith.constant 0 : index
    %121 = vector.load %arg13[%120, %c0_37, %c0_38] : memref<8x8x128xf32, #tpu.memory_space<vmem>>, vector<1x8x128xf32>
    %122 = vector.shape_cast %121 : vector<1x8x128xf32> to vector<8x128xf32>
    %123 = arith.truncf %114 : vector<8x32xf32> to vector<8x32xbf16>
    %cst_39 = arith.constant dense<0.000000e+00> : vector<8x128xf32>
    %124 = tpu.matmul %123, %2, %cst_39 {dimension_numbers = #tpu.dot_dimension_numbers<[1], [0], [0], [1], [0, 0, 1, 1], [], []>} : vector<8x32xbf16>, vector<32x128xbf16>, vector<8x128xf32> -> vector<8x128xf32>
    %125 = arith.addf %122, %124 : vector<8x128xf32>
    %126 = vector.extract_strided_slice %125 {offsets = [0, 0], sizes = [8, 32], strides = [1, 1]} : vector<8x128xf32> to vector<8x32xf32>
    %127 = arith.negf %126 : vector<8x32xf32>
    %128 = math.exp %127 : vector<8x32xf32>
    %cst_40 = arith.constant 1.000000e+00 : f32
    %129 = vector.broadcast %cst_40 : f32 to vector<8x32xf32>
    %130 = arith.addf %129, %128 : vector<8x32xf32>
    %131 = arith.divf %129, %130 : vector<8x32xf32>
    %132 = vector.extract_strided_slice %125 {offsets = [0, 32], sizes = [8, 32], strides = [1, 1]} : vector<8x128xf32> to vector<8x32xf32>
    %133 = arith.negf %132 : vector<8x32xf32>
    %134 = math.exp %133 : vector<8x32xf32>
    %cst_41 = arith.constant 1.000000e+00 : f32
    %135 = vector.broadcast %cst_41 : f32 to vector<8x32xf32>
    %136 = arith.addf %135, %134 : vector<8x32xf32>
    %137 = arith.divf %135, %136 : vector<8x32xf32>
    %138 = vector.extract_strided_slice %125 {offsets = [0, 64], sizes = [8, 32], strides = [1, 1]} : vector<8x128xf32> to vector<8x32xf32>
    %139 = math.tanh %138 : vector<8x32xf32>
    %140 = vector.extract_strided_slice %125 {offsets = [0, 96], sizes = [8, 32], strides = [1, 1]} : vector<8x128xf32> to vector<8x32xf32>
    %141 = arith.negf %140 : vector<8x32xf32>
    %142 = math.exp %141 : vector<8x32xf32>
    %cst_42 = arith.constant 1.000000e+00 : f32
    %143 = vector.broadcast %cst_42 : f32 to vector<8x32xf32>
    %144 = arith.addf %143, %142 : vector<8x32xf32>
    %145 = arith.divf %143, %144 : vector<8x32xf32>
    %146 = arith.mulf %137, %112 : vector<8x32xf32>
    %147 = arith.mulf %131, %139 : vector<8x32xf32>
    %148 = arith.addf %146, %147 : vector<8x32xf32>
    %149 = math.tanh %148 : vector<8x32xf32>
    %150 = arith.mulf %145, %149 : vector<8x32xf32>
    %151 = arith.truncf %150 : vector<8x32xf32> to vector<8x32xbf16>
    %152 = arith.index_cast %c3_i32 : i32 to index
    %c0_43 = arith.constant 0 : index
    %c0_44 = arith.constant 0 : index
    %153 = vector.load %arg14[%152, %c0_43, %c0_44] : memref<8x8x32xbf16, #tpu.memory_space<vmem>>, vector<1x8x32xbf16>
    %154 = vector.shape_cast %153 : vector<1x8x32xbf16> to vector<8x32xbf16>
    %155 = vector.shape_cast %151 : vector<8x32xbf16> to vector<1x8x32xbf16>
    tpu.vector_store %arg14[%152, %c0_43, %c0_44], %155 {strides = array<i32>} : memref<8x8x32xbf16, #tpu.memory_space<vmem>>, vector<1x8x32xbf16>,
    %c4_i32 = arith.constant 4 : i32
    %156 = arith.index_cast %c4_i32 : i32 to index
    %c0_45 = arith.constant 0 : index
    %c0_46 = arith.constant 0 : index
    %157 = vector.load %arg13[%156, %c0_45, %c0_46] : memref<8x8x128xf32, #tpu.memory_space<vmem>>, vector<1x8x128xf32>
    %158 = vector.shape_cast %157 : vector<1x8x128xf32> to vector<8x128xf32>
    %159 = arith.truncf %150 : vector<8x32xf32> to vector<8x32xbf16>
    %cst_47 = arith.constant dense<0.000000e+00> : vector<8x128xf32>
    %160 = tpu.matmul %159, %2, %cst_47 {dimension_numbers = #tpu.dot_dimension_numbers<[1], [0], [0], [1], [0, 0, 1, 1], [], []>} : vector<8x32xbf16>, vector<32x128xbf16>, vector<8x128xf32> -> vector<8x128xf32>
    %161 = arith.addf %158, %160 : vector<8x128xf32>
    %162 = vector.extract_strided_slice %161 {offsets = [0, 0], sizes = [8, 32], strides = [1, 1]} : vector<8x128xf32> to vector<8x32xf32>
    %163 = arith.negf %162 : vector<8x32xf32>
    %164 = math.exp %163 : vector<8x32xf32>
    %cst_48 = arith.constant 1.000000e+00 : f32
    %165 = vector.broadcast %cst_48 : f32 to vector<8x32xf32>
    %166 = arith.addf %165, %164 : vector<8x32xf32>
    %167 = arith.divf %165, %166 : vector<8x32xf32>
    %168 = vector.extract_strided_slice %161 {offsets = [0, 32], sizes = [8, 32], strides = [1, 1]} : vector<8x128xf32> to vector<8x32xf32>
    %169 = arith.negf %168 : vector<8x32xf32>
    %170 = math.exp %169 : vector<8x32xf32>
    %cst_49 = arith.constant 1.000000e+00 : f32
    %171 = vector.broadcast %cst_49 : f32 to vector<8x32xf32>
    %172 = arith.addf %171, %170 : vector<8x32xf32>
    %173 = arith.divf %171, %172 : vector<8x32xf32>
    %174 = vector.extract_strided_slice %161 {offsets = [0, 64], sizes = [8, 32], strides = [1, 1]} : vector<8x128xf32> to vector<8x32xf32>
    %175 = math.tanh %174 : vector<8x32xf32>
    %176 = vector.extract_strided_slice %161 {offsets = [0, 96], sizes = [8, 32], strides = [1, 1]} : vector<8x128xf32> to vector<8x32xf32>
    %177 = arith.negf %176 : vector<8x32xf32>
    %178 = math.exp %177 : vector<8x32xf32>
    %cst_50 = arith.constant 1.000000e+00 : f32
    %179 = vector.broadcast %cst_50 : f32 to vector<8x32xf32>
    %180 = arith.addf %179, %178 : vector<8x32xf32>
    %181 = arith.divf %179, %180 : vector<8x32xf32>
    %182 = arith.mulf %173, %148 : vector<8x32xf32>
    %183 = arith.mulf %167, %175 : vector<8x32xf32>
    %184 = arith.addf %182, %183 : vector<8x32xf32>
    %185 = math.tanh %184 : vector<8x32xf32>
    %186 = arith.mulf %181, %185 : vector<8x32xf32>
    %187 = arith.truncf %186 : vector<8x32xf32> to vector<8x32xbf16>
    %188 = arith.index_cast %c4_i32 : i32 to index
    %c0_51 = arith.constant 0 : index
    %c0_52 = arith.constant 0 : index
    %189 = vector.load %arg14[%188, %c0_51, %c0_52] : memref<8x8x32xbf16, #tpu.memory_space<vmem>>, vector<1x8x32xbf16>
    %190 = vector.shape_cast %189 : vector<1x8x32xbf16> to vector<8x32xbf16>
    %191 = vector.shape_cast %187 : vector<8x32xbf16> to vector<1x8x32xbf16>
    tpu.vector_store %arg14[%188, %c0_51, %c0_52], %191 {strides = array<i32>} : memref<8x8x32xbf16, #tpu.memory_space<vmem>>, vector<1x8x32xbf16>,
    %c5_i32 = arith.constant 5 : i32
    %192 = arith.index_cast %c5_i32 : i32 to index
    %c0_53 = arith.constant 0 : index
    %c0_54 = arith.constant 0 : index
    %193 = vector.load %arg13[%192, %c0_53, %c0_54] : memref<8x8x128xf32, #tpu.memory_space<vmem>>, vector<1x8x128xf32>
    %194 = vector.shape_cast %193 : vector<1x8x128xf32> to vector<8x128xf32>
    %195 = arith.truncf %186 : vector<8x32xf32> to vector<8x32xbf16>
    %cst_55 = arith.constant dense<0.000000e+00> : vector<8x128xf32>
    %196 = tpu.matmul %195, %2, %cst_55 {dimension_numbers = #tpu.dot_dimension_numbers<[1], [0], [0], [1], [0, 0, 1, 1], [], []>} : vector<8x32xbf16>, vector<32x128xbf16>, vector<8x128xf32> -> vector<8x128xf32>
    %197 = arith.addf %194, %196 : vector<8x128xf32>
    %198 = vector.extract_strided_slice %197 {offsets = [0, 0], sizes = [8, 32], strides = [1, 1]} : vector<8x128xf32> to vector<8x32xf32>
    %199 = arith.negf %198 : vector<8x32xf32>
    %200 = math.exp %199 : vector<8x32xf32>
    %cst_56 = arith.constant 1.000000e+00 : f32
    %201 = vector.broadcast %cst_56 : f32 to vector<8x32xf32>
    %202 = arith.addf %201, %200 : vector<8x32xf32>
    %203 = arith.divf %201, %202 : vector<8x32xf32>
    %204 = vector.extract_strided_slice %197 {offsets = [0, 32], sizes = [8, 32], strides = [1, 1]} : vector<8x128xf32> to vector<8x32xf32>
    %205 = arith.negf %204 : vector<8x32xf32>
    %206 = math.exp %205 : vector<8x32xf32>
    %cst_57 = arith.constant 1.000000e+00 : f32
    %207 = vector.broadcast %cst_57 : f32 to vector<8x32xf32>
    %208 = arith.addf %207, %206 : vector<8x32xf32>
    %209 = arith.divf %207, %208 : vector<8x32xf32>
    %210 = vector.extract_strided_slice %197 {offsets = [0, 64], sizes = [8, 32], strides = [1, 1]} : vector<8x128xf32> to vector<8x32xf32>
    %211 = math.tanh %210 : vector<8x32xf32>
    %212 = vector.extract_strided_slice %197 {offsets = [0, 96], sizes = [8, 32], strides = [1, 1]} : vector<8x128xf32> to vector<8x32xf32>
    %213 = arith.negf %212 : vector<8x32xf32>
    %214 = math.exp %213 : vector<8x32xf32>
    %cst_58 = arith.constant 1.000000e+00 : f32
    %215 = vector.broadcast %cst_58 : f32 to vector<8x32xf32>
    %216 = arith.addf %215, %214 : vector<8x32xf32>
    %217 = arith.divf %215, %216 : vector<8x32xf32>
    %218 = arith.mulf %209, %184 : vector<8x32xf32>
    %219 = arith.mulf %203, %211 : vector<8x32xf32>
    %220 = arith.addf %218, %219 : vector<8x32xf32>
    %221 = math.tanh %220 : vector<8x32xf32>
    %222 = arith.mulf %217, %221 : vector<8x32xf32>
    %223 = arith.truncf %222 : vector<8x32xf32> to vector<8x32xbf16>
    %224 = arith.index_cast %c5_i32 : i32 to index
    %c0_59 = arith.constant 0 : index
    %c0_60 = arith.constant 0 : index
    %225 = vector.load %arg14[%224, %c0_59, %c0_60] : memref<8x8x32xbf16, #tpu.memory_space<vmem>>, vector<1x8x32xbf16>
    %226 = vector.shape_cast %225 : vector<1x8x32xbf16> to vector<8x32xbf16>
    %227 = vector.shape_cast %223 : vector<8x32xbf16> to vector<1x8x32xbf16>
    tpu.vector_store %arg14[%224, %c0_59, %c0_60], %227 {strides = array<i32>} : memref<8x8x32xbf16, #tpu.memory_space<vmem>>, vector<1x8x32xbf16>,
    %c6_i32 = arith.constant 6 : i32
    %228 = arith.index_cast %c6_i32 : i32 to index
    %c0_61 = arith.constant 0 : index
    %c0_62 = arith.constant 0 : index
    %229 = vector.load %arg13[%228, %c0_61, %c0_62] : memref<8x8x128xf32, #tpu.memory_space<vmem>>, vector<1x8x128xf32>
    %230 = vector.shape_cast %229 : vector<1x8x128xf32> to vector<8x128xf32>
    %231 = arith.truncf %222 : vector<8x32xf32> to vector<8x32xbf16>
    %cst_63 = arith.constant dense<0.000000e+00> : vector<8x128xf32>
    %232 = tpu.matmul %231, %2, %cst_63 {dimension_numbers = #tpu.dot_dimension_numbers<[1], [0], [0], [1], [0, 0, 1, 1], [], []>} : vector<8x32xbf16>, vector<32x128xbf16>, vector<8x128xf32> -> vector<8x128xf32>
    %233 = arith.addf %230, %232 : vector<8x128xf32>
    %234 = vector.extract_strided_slice %233 {offsets = [0, 0], sizes = [8, 32], strides = [1, 1]} : vector<8x128xf32> to vector<8x32xf32>
    %235 = arith.negf %234 : vector<8x32xf32>
    %236 = math.exp %235 : vector<8x32xf32>
    %cst_64 = arith.constant 1.000000e+00 : f32
    %237 = vector.broadcast %cst_64 : f32 to vector<8x32xf32>
    %238 = arith.addf %237, %236 : vector<8x32xf32>
    %239 = arith.divf %237, %238 : vector<8x32xf32>
    %240 = vector.extract_strided_slice %233 {offsets = [0, 32], sizes = [8, 32], strides = [1, 1]} : vector<8x128xf32> to vector<8x32xf32>
    %241 = arith.negf %240 : vector<8x32xf32>
    %242 = math.exp %241 : vector<8x32xf32>
    %cst_65 = arith.constant 1.000000e+00 : f32
    %243 = vector.broadcast %cst_65 : f32 to vector<8x32xf32>
    %244 = arith.addf %243, %242 : vector<8x32xf32>
    %245 = arith.divf %243, %244 : vector<8x32xf32>
    %246 = vector.extract_strided_slice %233 {offsets = [0, 64], sizes = [8, 32], strides = [1, 1]} : vector<8x128xf32> to vector<8x32xf32>
    %247 = math.tanh %246 : vector<8x32xf32>
    %248 = vector.extract_strided_slice %233 {offsets = [0, 96], sizes = [8, 32], strides = [1, 1]} : vector<8x128xf32> to vector<8x32xf32>
    %249 = arith.negf %248 : vector<8x32xf32>
    %250 = math.exp %249 : vector<8x32xf32>
    %cst_66 = arith.constant 1.000000e+00 : f32
    %251 = vector.broadcast %cst_66 : f32 to vector<8x32xf32>
    %252 = arith.addf %251, %250 : vector<8x32xf32>
    %253 = arith.divf %251, %252 : vector<8x32xf32>
    %254 = arith.mulf %245, %220 : vector<8x32xf32>
    %255 = arith.mulf %239, %247 : vector<8x32xf32>
    %256 = arith.addf %254, %255 : vector<8x32xf32>
    %257 = math.tanh %256 : vector<8x32xf32>
    %258 = arith.mulf %253, %257 : vector<8x32xf32>
    %259 = arith.truncf %258 : vector<8x32xf32> to vector<8x32xbf16>
    %260 = arith.index_cast %c6_i32 : i32 to index
    %c0_67 = arith.constant 0 : index
    %c0_68 = arith.constant 0 : index
    %261 = vector.load %arg14[%260, %c0_67, %c0_68] : memref<8x8x32xbf16, #tpu.memory_space<vmem>>, vector<1x8x32xbf16>
    %262 = vector.shape_cast %261 : vector<1x8x32xbf16> to vector<8x32xbf16>
    %263 = vector.shape_cast %259 : vector<8x32xbf16> to vector<1x8x32xbf16>
    tpu.vector_store %arg14[%260, %c0_67, %c0_68], %263 {strides = array<i32>} : memref<8x8x32xbf16, #tpu.memory_space<vmem>>, vector<1x8x32xbf16>,
    %c7_i32 = arith.constant 7 : i32
    %264 = arith.index_cast %c7_i32 : i32 to index
    %c0_69 = arith.constant 0 : index
    %c0_70 = arith.constant 0 : index
    %265 = vector.load %arg13[%264, %c0_69, %c0_70] : memref<8x8x128xf32, #tpu.memory_space<vmem>>, vector<1x8x128xf32>
    %266 = vector.shape_cast %265 : vector<1x8x128xf32> to vector<8x128xf32>
    %267 = arith.truncf %258 : vector<8x32xf32> to vector<8x32xbf16>
    %cst_71 = arith.constant dense<0.000000e+00> : vector<8x128xf32>
    %268 = tpu.matmul %267, %2, %cst_71 {dimension_numbers = #tpu.dot_dimension_numbers<[1], [0], [0], [1], [0, 0, 1, 1], [], []>} : vector<8x32xbf16>, vector<32x128xbf16>, vector<8x128xf32> -> vector<8x128xf32>
    %269 = arith.addf %266, %268 : vector<8x128xf32>
    %270 = vector.extract_strided_slice %269 {offsets = [0, 0], sizes = [8, 32], strides = [1, 1]} : vector<8x128xf32> to vector<8x32xf32>
    %271 = arith.negf %270 : vector<8x32xf32>
    %272 = math.exp %271 : vector<8x32xf32>
    %cst_72 = arith.constant 1.000000e+00 : f32
    %273 = vector.broadcast %cst_72 : f32 to vector<8x32xf32>
    %274 = arith.addf %273, %272 : vector<8x32xf32>
    %275 = arith.divf %273, %274 : vector<8x32xf32>
    %276 = vector.extract_strided_slice %269 {offsets = [0, 32], sizes = [8, 32], strides = [1, 1]} : vector<8x128xf32> to vector<8x32xf32>
    %277 = arith.negf %276 : vector<8x32xf32>
    %278 = math.exp %277 : vector<8x32xf32>
    %cst_73 = arith.constant 1.000000e+00 : f32
    %279 = vector.broadcast %cst_73 : f32 to vector<8x32xf32>
    %280 = arith.addf %279, %278 : vector<8x32xf32>
    %281 = arith.divf %279, %280 : vector<8x32xf32>
    %282 = vector.extract_strided_slice %269 {offsets = [0, 64], sizes = [8, 32], strides = [1, 1]} : vector<8x128xf32> to vector<8x32xf32>
    %283 = math.tanh %282 : vector<8x32xf32>
    %284 = vector.extract_strided_slice %269 {offsets = [0, 96], sizes = [8, 32], strides = [1, 1]} : vector<8x128xf32> to vector<8x32xf32>
    %285 = arith.negf %284 : vector<8x32xf32>
    %286 = math.exp %285 : vector<8x32xf32>
    %cst_74 = arith.constant 1.000000e+00 : f32
    %287 = vector.broadcast %cst_74 : f32 to vector<8x32xf32>
    %288 = arith.addf %287, %286 : vector<8x32xf32>
    %289 = arith.divf %287, %288 : vector<8x32xf32>
    %290 = arith.mulf %281, %256 : vector<8x32xf32>
    %291 = arith.mulf %275, %283 : vector<8x32xf32>
    %292 = arith.addf %290, %291 : vector<8x32xf32>
    %293 = math.tanh %292 : vector<8x32xf32>
    %294 = arith.mulf %289, %293 : vector<8x32xf32>
    %295 = arith.truncf %294 : vector<8x32xf32> to vector<8x32xbf16>
    %296 = arith.index_cast %c7_i32 : i32 to index
    %c0_75 = arith.constant 0 : index
    %c0_76 = arith.constant 0 : index
    %297 = vector.load %arg14[%296, %c0_75, %c0_76] : memref<8x8x32xbf16, #tpu.memory_space<vmem>>, vector<1x8x32xbf16>
    %298 = vector.shape_cast %297 : vector<1x8x32xbf16> to vector<8x32xbf16>
    %299 = vector.shape_cast %295 : vector<8x32xbf16> to vector<1x8x32xbf16>
    tpu.vector_store %arg14[%296, %c0_75, %c0_76], %299 {strides = array<i32>} : memref<8x8x32xbf16, #tpu.memory_space<vmem>>, vector<1x8x32xbf16>,
    %c8_i32 = arith.constant 8 : i32
    %c0_77 = arith.constant 0 : index
    %c0_78 = arith.constant 0 : index
    %300 = vector.load %arg5[%c0_77, %c0_78] : memref<32x128xbf16, #tpu.memory_space<vmem>>, vector<32x128xbf16>
    %c0_79 = arith.constant 0 : index
    %c0_80 = arith.constant 0 : index
    %301 = vector.load %arg6[%c0_79, %c0_80] : memref<1x128xf32, #tpu.memory_space<vmem>>, vector<1x128xf32>
    %302 = vector.shape_cast %301 : vector<1x128xf32> to vector<1x128xf32>
    %303 = vector.broadcast %302 : vector<1x128xf32> to vector<8x128xf32>
    %cst_81 = arith.constant 0.000000e+00 : f32
    %304 = vector.broadcast %cst_81 : f32 to vector<8x32xf32>
    %c0_i32_82 = arith.constant 0 : i32
    %305 = arith.truncf %304 : vector<8x32xf32> to vector<8x32xbf16>
    %cst_83 = arith.constant dense<0.000000e+00> : vector<8x128xf32>
    %306 = tpu.matmul %305, %300, %cst_83 {dimension_numbers = #tpu.dot_dimension_numbers<[1], [0], [0], [1], [0, 0, 1, 1], [], []>} : vector<8x32xbf16>, vector<32x128xbf16>, vector<8x128xf32> -> vector<8x128xf32>
    %307 = arith.addf %306, %303 : vector<8x128xf32>
    %308 = vector.extract_strided_slice %307 {offsets = [0, 0], sizes = [8, 32], strides = [1, 1]} : vector<8x128xf32> to vector<8x32xf32>
    %309 = arith.negf %308 : vector<8x32xf32>
    %310 = math.exp %309 : vector<8x32xf32>
    %cst_84 = arith.constant 1.000000e+00 : f32
    %311 = vector.broadcast %cst_84 : f32 to vector<8x32xf32>
    %312 = arith.addf %311, %310 : vector<8x32xf32>
    %313 = arith.divf %311, %312 : vector<8x32xf32>
    %314 = vector.extract_strided_slice %307 {offsets = [0, 32], sizes = [8, 32], strides = [1, 1]} : vector<8x128xf32> to vector<8x32xf32>
    %315 = arith.negf %314 : vector<8x32xf32>
    %316 = math.exp %315 : vector<8x32xf32>
    %cst_85 = arith.constant 1.000000e+00 : f32
    %317 = vector.broadcast %cst_85 : f32 to vector<8x32xf32>
    %318 = arith.addf %317, %316 : vector<8x32xf32>
    %319 = arith.divf %317, %318 : vector<8x32xf32>
    %320 = vector.extract_strided_slice %307 {offsets = [0, 64], sizes = [8, 32], strides = [1, 1]} : vector<8x128xf32> to vector<8x32xf32>
    %321 = math.tanh %320 : vector<8x32xf32>
    %322 = vector.extract_strided_slice %307 {offsets = [0, 96], sizes = [8, 32], strides = [1, 1]} : vector<8x128xf32> to vector<8x32xf32>
    %323 = arith.negf %322 : vector<8x32xf32>
    %324 = math.exp %323 : vector<8x32xf32>
    %cst_86 = arith.constant 1.000000e+00 : f32
    %325 = vector.broadcast %cst_86 : f32 to vector<8x32xf32>
    %326 = arith.addf %325, %324 : vector<8x32xf32>
    %327 = arith.divf %325, %326 : vector<8x32xf32>
    %328 = arith.mulf %319, %294 : vector<8x32xf32>
    %329 = arith.mulf %313, %321 : vector<8x32xf32>
    %330 = arith.addf %328, %329 : vector<8x32xf32>
    %331 = math.tanh %330 : vector<8x32xf32>
    %332 = arith.mulf %327, %331 : vector<8x32xf32>
    %333 = arith.truncf %332 : vector<8x32xf32> to vector<8x32xbf16>
    %334 = arith.index_cast %c0_i32_82 : i32 to index
    %c0_87 = arith.constant 0 : index
    %c0_88 = arith.constant 0 : index
    %335 = vector.load %arg15[%334, %c0_87, %c0_88] : memref<4x8x32xbf16, #tpu.memory_space<vmem>>, vector<1x8x32xbf16>
    %336 = vector.shape_cast %335 : vector<1x8x32xbf16> to vector<8x32xbf16>
    %337 = vector.shape_cast %333 : vector<8x32xbf16> to vector<1x8x32xbf16>
    tpu.vector_store %arg15[%334, %c0_87, %c0_88], %337 {strides = array<i32>} : memref<4x8x32xbf16, #tpu.memory_space<vmem>>, vector<1x8x32xbf16>,
    %c1_i32_89 = arith.constant 1 : i32
    %338 = arith.truncf %332 : vector<8x32xf32> to vector<8x32xbf16>
    %cst_90 = arith.constant dense<0.000000e+00> : vector<8x128xf32>
    %339 = tpu.matmul %338, %300, %cst_90 {dimension_numbers = #tpu.dot_dimension_numbers<[1], [0], [0], [1], [0, 0, 1, 1], [], []>} : vector<8x32xbf16>, vector<32x128xbf16>, vector<8x128xf32> -> vector<8x128xf32>
    %340 = arith.addf %339, %303 : vector<8x128xf32>
    %341 = vector.extract_strided_slice %340 {offsets = [0, 0], sizes = [8, 32], strides = [1, 1]} : vector<8x128xf32> to vector<8x32xf32>
    %342 = arith.negf %341 : vector<8x32xf32>
    %343 = math.exp %342 : vector<8x32xf32>
    %cst_91 = arith.constant 1.000000e+00 : f32
    %344 = vector.broadcast %cst_91 : f32 to vector<8x32xf32>
    %345 = arith.addf %344, %343 : vector<8x32xf32>
    %346 = arith.divf %344, %345 : vector<8x32xf32>
    %347 = vector.extract_strided_slice %340 {offsets = [0, 32], sizes = [8, 32], strides = [1, 1]} : vector<8x128xf32> to vector<8x32xf32>
    %348 = arith.negf %347 : vector<8x32xf32>
    %349 = math.exp %348 : vector<8x32xf32>
    %cst_92 = arith.constant 1.000000e+00 : f32
    %350 = vector.broadcast %cst_92 : f32 to vector<8x32xf32>
    %351 = arith.addf %350, %349 : vector<8x32xf32>
    %352 = arith.divf %350, %351 : vector<8x32xf32>
    %353 = vector.extract_strided_slice %340 {offsets = [0, 64], sizes = [8, 32], strides = [1, 1]} : vector<8x128xf32> to vector<8x32xf32>
    %354 = math.tanh %353 : vector<8x32xf32>
    %355 = vector.extract_strided_slice %340 {offsets = [0, 96], sizes = [8, 32], strides = [1, 1]} : vector<8x128xf32> to vector<8x32xf32>
    %356 = arith.negf %355 : vector<8x32xf32>
    %357 = math.exp %356 : vector<8x32xf32>
    %cst_93 = arith.constant 1.000000e+00 : f32
    %358 = vector.broadcast %cst_93 : f32 to vector<8x32xf32>
    %359 = arith.addf %358, %357 : vector<8x32xf32>
    %360 = arith.divf %358, %359 : vector<8x32xf32>
    %361 = arith.mulf %352, %330 : vector<8x32xf32>
    %362 = arith.mulf %346, %354 : vector<8x32xf32>
    %363 = arith.addf %361, %362 : vector<8x32xf32>
    %364 = math.tanh %363 : vector<8x32xf32>
    %365 = arith.mulf %360, %364 : vector<8x32xf32>
    %366 = arith.truncf %365 : vector<8x32xf32> to vector<8x32xbf16>
    %367 = arith.index_cast %c1_i32_89 : i32 to index
    %c0_94 = arith.constant 0 : index
    %c0_95 = arith.constant 0 : index
    %368 = vector.load %arg15[%367, %c0_94, %c0_95] : memref<4x8x32xbf16, #tpu.memory_space<vmem>>, vector<1x8x32xbf16>
    %369 = vector.shape_cast %368 : vector<1x8x32xbf16> to vector<8x32xbf16>
    %370 = vector.shape_cast %366 : vector<8x32xbf16> to vector<1x8x32xbf16>
    tpu.vector_store %arg15[%367, %c0_94, %c0_95], %370 {strides = array<i32>} : memref<4x8x32xbf16, #tpu.memory_space<vmem>>, vector<1x8x32xbf16>,
    %c2_i32_96 = arith.constant 2 : i32
    %371 = arith.truncf %365 : vector<8x32xf32> to vector<8x32xbf16>
    %cst_97 = arith.constant dense<0.000000e+00> : vector<8x128xf32>
    %372 = tpu.matmul %371, %300, %cst_97 {dimension_numbers = #tpu.dot_dimension_numbers<[1], [0], [0], [1], [0, 0, 1, 1], [], []>} : vector<8x32xbf16>, vector<32x128xbf16>, vector<8x128xf32> -> vector<8x128xf32>
    %373 = arith.addf %372, %303 : vector<8x128xf32>
    %374 = vector.extract_strided_slice %373 {offsets = [0, 0], sizes = [8, 32], strides = [1, 1]} : vector<8x128xf32> to vector<8x32xf32>
    %375 = arith.negf %374 : vector<8x32xf32>
    %376 = math.exp %375 : vector<8x32xf32>
    %cst_98 = arith.constant 1.000000e+00 : f32
    %377 = vector.broadcast %cst_98 : f32 to vector<8x32xf32>
    %378 = arith.addf %377, %376 : vector<8x32xf32>
    %379 = arith.divf %377, %378 : vector<8x32xf32>
    %380 = vector.extract_strided_slice %373 {offsets = [0, 32], sizes = [8, 32], strides = [1, 1]} : vector<8x128xf32> to vector<8x32xf32>
    %381 = arith.negf %380 : vector<8x32xf32>
    %382 = math.exp %381 : vector<8x32xf32>
    %cst_99 = arith.constant 1.000000e+00 : f32
    %383 = vector.broadcast %cst_99 : f32 to vector<8x32xf32>
    %384 = arith.addf %383, %382 : vector<8x32xf32>
    %385 = arith.divf %383, %384 : vector<8x32xf32>
    %386 = vector.extract_strided_slice %373 {offsets = [0, 64], sizes = [8, 32], strides = [1, 1]} : vector<8x128xf32> to vector<8x32xf32>
    %387 = math.tanh %386 : vector<8x32xf32>
    %388 = vector.extract_strided_slice %373 {offsets = [0, 96], sizes = [8, 32], strides = [1, 1]} : vector<8x128xf32> to vector<8x32xf32>
    %389 = arith.negf %388 : vector<8x32xf32>
    %390 = math.exp %389 : vector<8x32xf32>
    %cst_100 = arith.constant 1.000000e+00 : f32
    %391 = vector.broadcast %cst_100 : f32 to vector<8x32xf32>
    %392 = arith.addf %391, %390 : vector<8x32xf32>
    %393 = arith.divf %391, %392 : vector<8x32xf32>
    %394 = arith.mulf %385, %363 : vector<8x32xf32>
    %395 = arith.mulf %379, %387 : vector<8x32xf32>
    %396 = arith.addf %394, %395 : vector<8x32xf32>
    %397 = math.tanh %396 : vector<8x32xf32>
    %398 = arith.mulf %393, %397 : vector<8x32xf32>
    %399 = arith.truncf %398 : vector<8x32xf32> to vector<8x32xbf16>
    %400 = arith.index_cast %c2_i32_96 : i32 to index
    %c0_101 = arith.constant 0 : index
    %c0_102 = arith.constant 0 : index
    %401 = vector.load %arg15[%400, %c0_101, %c0_102] : memref<4x8x32xbf16, #tpu.memory_space<vmem>>, vector<1x8x32xbf16>
    %402 = vector.shape_cast %401 : vector<1x8x32xbf16> to vector<8x32xbf16>
    %403 = vector.shape_cast %399 : vector<8x32xbf16> to vector<1x8x32xbf16>
    tpu.vector_store %arg15[%400, %c0_101, %c0_102], %403 {strides = array<i32>} : memref<4x8x32xbf16, #tpu.memory_space<vmem>>, vector<1x8x32xbf16>,
    %c3_i32_103 = arith.constant 3 : i32
    %404 = arith.truncf %398 : vector<8x32xf32> to vector<8x32xbf16>
    %cst_104 = arith.constant dense<0.000000e+00> : vector<8x128xf32>
    %405 = tpu.matmul %404, %300, %cst_104 {dimension_numbers = #tpu.dot_dimension_numbers<[1], [0], [0], [1], [0, 0, 1, 1], [], []>} : vector<8x32xbf16>, vector<32x128xbf16>, vector<8x128xf32> -> vector<8x128xf32>
    %406 = arith.addf %405, %303 : vector<8x128xf32>
    %407 = vector.extract_strided_slice %406 {offsets = [0, 0], sizes = [8, 32], strides = [1, 1]} : vector<8x128xf32> to vector<8x32xf32>
    %408 = arith.negf %407 : vector<8x32xf32>
    %409 = math.exp %408 : vector<8x32xf32>
    %cst_105 = arith.constant 1.000000e+00 : f32
    %410 = vector.broadcast %cst_105 : f32 to vector<8x32xf32>
    %411 = arith.addf %410, %409 : vector<8x32xf32>
    %412 = arith.divf %410, %411 : vector<8x32xf32>
    %413 = vector.extract_strided_slice %406 {offsets = [0, 32], sizes = [8, 32], strides = [1, 1]} : vector<8x128xf32> to vector<8x32xf32>
    %414 = arith.negf %413 : vector<8x32xf32>
    %415 = math.exp %414 : vector<8x32xf32>
    %cst_106 = arith.constant 1.000000e+00 : f32
    %416 = vector.broadcast %cst_106 : f32 to vector<8x32xf32>
    %417 = arith.addf %416, %415 : vector<8x32xf32>
    %418 = arith.divf %416, %417 : vector<8x32xf32>
    %419 = vector.extract_strided_slice %406 {offsets = [0, 64], sizes = [8, 32], strides = [1, 1]} : vector<8x128xf32> to vector<8x32xf32>
    %420 = math.tanh %419 : vector<8x32xf32>
    %421 = vector.extract_strided_slice %406 {offsets = [0, 96], sizes = [8, 32], strides = [1, 1]} : vector<8x128xf32> to vector<8x32xf32>
    %422 = arith.negf %421 : vector<8x32xf32>
    %423 = math.exp %422 : vector<8x32xf32>
    %cst_107 = arith.constant 1.000000e+00 : f32
    %424 = vector.broadcast %cst_107 : f32 to vector<8x32xf32>
    %425 = arith.addf %424, %423 : vector<8x32xf32>
    %426 = arith.divf %424, %425 : vector<8x32xf32>
    %427 = arith.mulf %418, %396 : vector<8x32xf32>
    %428 = arith.mulf %412, %420 : vector<8x32xf32>
    %429 = arith.addf %427, %428 : vector<8x32xf32>
    %430 = math.tanh %429 : vector<8x32xf32>
    %431 = arith.mulf %426, %430 : vector<8x32xf32>
    %432 = arith.truncf %431 : vector<8x32xf32> to vector<8x32xbf16>
    %433 = arith.index_cast %c3_i32_103 : i32 to index
    %c0_108 = arith.constant 0 : index
    %c0_109 = arith.constant 0 : index
    %434 = vector.load %arg15[%433, %c0_108, %c0_109] : memref<4x8x32xbf16, #tpu.memory_space<vmem>>, vector<1x8x32xbf16>
    %435 = vector.shape_cast %434 : vector<1x8x32xbf16> to vector<8x32xbf16>
    %436 = vector.shape_cast %432 : vector<8x32xbf16> to vector<1x8x32xbf16>
    tpu.vector_store %arg15[%433, %c0_108, %c0_109], %436 {strides = array<i32>} : memref<4x8x32xbf16, #tpu.memory_space<vmem>>, vector<1x8x32xbf16>,
    %c4_i32_110 = arith.constant 4 : i32
    %c0_111 = arith.constant 0 : index
    %c0_112 = arith.constant 0 : index
    %c0_113 = arith.constant 0 : index
    %437 = vector.load %arg14[%c0_111, %c0_112, %c0_113] : memref<8x8x32xbf16, #tpu.memory_space<vmem>>, vector<8x8x32xbf16>
    %438 = vector.shape_cast %437 : vector<8x8x32xbf16> to vector<64x32xbf16>
    %c0_114 = arith.constant 0 : index
    %c0_115 = arith.constant 0 : index
    %439 = vector.load %arg7[%c0_114, %c0_115] : memref<32x32xbf16, #tpu.memory_space<vmem>>, vector<32x32xbf16>
    %cst_116 = arith.constant dense<0.000000e+00> : vector<64x32xf32>
    %440 = tpu.matmul %438, %439, %cst_116 {dimension_numbers = #tpu.dot_dimension_numbers<[1], [0], [0], [1], [0, 0, 1, 1], [], []>} : vector<64x32xbf16>, vector<32x32xbf16>, vector<64x32xf32> -> vector<64x32xf32>
    %441 = vector.shape_cast %440 : vector<64x32xf32> to vector<8x8x32xf32>
    %c0_117 = arith.constant 0 : index
    %c0_118 = arith.constant 0 : index
    %c0_119 = arith.constant 0 : index
    %442 = vector.load %arg15[%c0_117, %c0_118, %c0_119] : memref<4x8x32xbf16, #tpu.memory_space<vmem>>, vector<4x8x32xbf16>
    %443 = vector.shape_cast %442 : vector<4x8x32xbf16> to vector<32x32xbf16>
    %c0_120 = arith.constant 0 : index
    %c0_121 = arith.constant 0 : index
    %444 = vector.load %arg8[%c0_120, %c0_121] : memref<32x32xbf16, #tpu.memory_space<vmem>>, vector<32x32xbf16>
    %cst_122 = arith.constant dense<0.000000e+00> : vector<32x32xf32>
    %445 = tpu.matmul %443, %444, %cst_122 {dimension_numbers = #tpu.dot_dimension_numbers<[1], [0], [0], [1], [0, 0, 1, 1], [], []>} : vector<32x32xbf16>, vector<32x32xbf16>, vector<32x32xf32> -> vector<32x32xf32>
    %c0_123 = arith.constant 0 : index
    %c0_124 = arith.constant 0 : index
    %446 = vector.load %arg9[%c0_123, %c0_124] : memref<1x32xf32, #tpu.memory_space<vmem>>, vector<1x32xf32>
    %447 = vector.broadcast %446 : vector<1x32xf32> to vector<32x32xf32>
    %448 = arith.addf %445, %447 : vector<32x32xf32>
    %449 = vector.shape_cast %448 : vector<32x32xf32> to vector<4x8x32xf32>
    %450 = arith.truncf %441 : vector<8x8x32xf32> to vector<8x8x32xbf16>
    %451 = arith.truncf %449 : vector<4x8x32xf32> to vector<4x8x32xbf16>
    %c0_125 = arith.constant 0 : index
    %c0_126 = arith.constant 0 : index
    %452 = vector.load %arg10[%c0_125, %c0_126] : memref<1x32xf32, #tpu.memory_space<vmem>>, vector<1x32xf32>
    %453 = arith.truncf %452 : vector<1x32xf32> to vector<1x32xbf16>
    %c0_127 = arith.constant 0 : index
    %c0_128 = arith.constant 0 : index
    %454 = vector.load %arg11[%c0_127, %c0_128] : memref<1x1xf32, #tpu.memory_space<vmem>>, vector<1x1xf32>
    %455 = vector.extract_strided_slice %451 {offsets = [0, 0, 0], sizes = [1, 8, 32], strides = [1, 1, 1]} : vector<4x8x32xbf16> to vector<1x8x32xbf16>
    %456 = vector.shape_cast %455 : vector<1x8x32xbf16> to vector<8x32xbf16>
    %457 = vector.shape_cast %456 : vector<8x32xbf16> to vector<1x8x32xbf16>
    %458 = vector.broadcast %457 : vector<1x8x32xbf16> to vector<8x8x32xbf16>
    %459 = arith.addf %450, %458 : vector<8x8x32xbf16>
    %460 = math.tanh %459 : vector<8x8x32xbf16>
    %461 = vector.shape_cast %453 : vector<1x32xbf16> to vector<1x1x32xbf16>
    %462 = vector.broadcast %461 : vector<1x1x32xbf16> to vector<8x8x32xbf16>
    %463 = arith.mulf %460, %462 : vector<8x8x32xbf16>
    %464 = arith.extf %463 : vector<8x8x32xbf16> to vector<8x8x32xf32>
    %cst_129 = arith.constant dense<0.000000e+00> : vector<8x8xf32>
    %465 = vector.multi_reduction <add>, %464, %cst_129 [2] : vector<8x8x32xf32> to vector<8x8xf32>
    %466 = vector.broadcast %454 : vector<1x1xf32> to vector<8x8xf32>
    %467 = arith.addf %465, %466 : vector<8x8xf32>
    %468 = tpu.transpose %467, [1, 0] : vector<8x8xf32> -> vector<8x8xf32>
    %cst_130 = arith.constant dense<0xFF800000> : vector<8xf32>
    %469 = vector.multi_reduction <maximumf>, %468, %cst_130 [1] : vector<8x8xf32> to vector<8xf32>
    %470 = vector.shape_cast %469 : vector<8xf32> to vector<8x1xf32>
    %471 = vector.broadcast %470 : vector<8x1xf32> to vector<8x8xf32>
    %472 = arith.subf %468, %471 : vector<8x8xf32>
    %473 = math.exp %472 : vector<8x8xf32>
    %cst_131 = arith.constant dense<0.000000e+00> : vector<8xf32>
    %474 = vector.multi_reduction <add>, %473, %cst_131 [1] : vector<8x8xf32> to vector<8xf32>
    %475 = vector.shape_cast %474 : vector<8xf32> to vector<8x1xf32>
    %476 = math.log %475 : vector<8x1xf32>
    %477 = vector.broadcast %476 : vector<8x1xf32> to vector<8x8xf32>
    %478 = arith.subf %472, %477 : vector<8x8xf32>
    %c0_132 = arith.constant 0 : index
    %c0_133 = arith.constant 0 : index
    %c0_134 = arith.constant 0 : index
    %479 = vector.load %arg12[%c0_132, %c0_133, %c0_134] : memref<4x8x8xf32, #tpu.memory_space<vmem>>, vector<1x8x8xf32>
    %480 = vector.shape_cast %479 : vector<1x8x8xf32> to vector<8x8xf32>
    %481 = vector.shape_cast %478 : vector<8x8xf32> to vector<1x8x8xf32>
    tpu.vector_store %arg12[%c0_132, %c0_133, %c0_134], %481 {strides = array<i32>} : memref<4x8x8xf32, #tpu.memory_space<vmem>>, vector<1x8x8xf32>,
    %482 = vector.extract_strided_slice %451 {offsets = [1, 0, 0], sizes = [1, 8, 32], strides = [1, 1, 1]} : vector<4x8x32xbf16> to vector<1x8x32xbf16>
    %483 = vector.shape_cast %482 : vector<1x8x32xbf16> to vector<8x32xbf16>
    %484 = vector.shape_cast %483 : vector<8x32xbf16> to vector<1x8x32xbf16>
    %485 = vector.broadcast %484 : vector<1x8x32xbf16> to vector<8x8x32xbf16>
    %486 = arith.addf %450, %485 : vector<8x8x32xbf16>
    %487 = math.tanh %486 : vector<8x8x32xbf16>
    %488 = vector.shape_cast %453 : vector<1x32xbf16> to vector<1x1x32xbf16>
    %489 = vector.broadcast %488 : vector<1x1x32xbf16> to vector<8x8x32xbf16>
    %490 = arith.mulf %487, %489 : vector<8x8x32xbf16>
    %491 = arith.extf %490 : vector<8x8x32xbf16> to vector<8x8x32xf32>
    %cst_135 = arith.constant dense<0.000000e+00> : vector<8x8xf32>
    %492 = vector.multi_reduction <add>, %491, %cst_135 [2] : vector<8x8x32xf32> to vector<8x8xf32>
    %493 = vector.broadcast %454 : vector<1x1xf32> to vector<8x8xf32>
    %494 = arith.addf %492, %493 : vector<8x8xf32>
    %495 = tpu.transpose %494, [1, 0] : vector<8x8xf32> -> vector<8x8xf32>
    %cst_136 = arith.constant dense<0xFF800000> : vector<8xf32>
    %496 = vector.multi_reduction <maximumf>, %495, %cst_136 [1] : vector<8x8xf32> to vector<8xf32>
    %497 = vector.shape_cast %496 : vector<8xf32> to vector<8x1xf32>
    %498 = vector.broadcast %497 : vector<8x1xf32> to vector<8x8xf32>
    %499 = arith.subf %495, %498 : vector<8x8xf32>
    %500 = math.exp %499 : vector<8x8xf32>
    %cst_137 = arith.constant dense<0.000000e+00> : vector<8xf32>
    %501 = vector.multi_reduction <add>, %500, %cst_137 [1] : vector<8x8xf32> to vector<8xf32>
    %502 = vector.shape_cast %501 : vector<8xf32> to vector<8x1xf32>
    %503 = math.log %502 : vector<8x1xf32>
    %504 = vector.broadcast %503 : vector<8x1xf32> to vector<8x8xf32>
    %505 = arith.subf %499, %504 : vector<8x8xf32>
    %c1 = arith.constant 1 : index
    %c0_138 = arith.constant 0 : index
    %c0_139 = arith.constant 0 : index
    %506 = vector.load %arg12[%c1, %c0_138, %c0_139] : memref<4x8x8xf32, #tpu.memory_space<vmem>>, vector<1x8x8xf32>
    %507 = vector.shape_cast %506 : vector<1x8x8xf32> to vector<8x8xf32>
    %508 = vector.shape_cast %505 : vector<8x8xf32> to vector<1x8x8xf32>
    tpu.vector_store %arg12[%c1, %c0_138, %c0_139], %508 {strides = array<i32>} : memref<4x8x8xf32, #tpu.memory_space<vmem>>, vector<1x8x8xf32>,
    %509 = vector.extract_strided_slice %451 {offsets = [2, 0, 0], sizes = [1, 8, 32], strides = [1, 1, 1]} : vector<4x8x32xbf16> to vector<1x8x32xbf16>
    %510 = vector.shape_cast %509 : vector<1x8x32xbf16> to vector<8x32xbf16>
    %511 = vector.shape_cast %510 : vector<8x32xbf16> to vector<1x8x32xbf16>
    %512 = vector.broadcast %511 : vector<1x8x32xbf16> to vector<8x8x32xbf16>
    %513 = arith.addf %450, %512 : vector<8x8x32xbf16>
    %514 = math.tanh %513 : vector<8x8x32xbf16>
    %515 = vector.shape_cast %453 : vector<1x32xbf16> to vector<1x1x32xbf16>
    %516 = vector.broadcast %515 : vector<1x1x32xbf16> to vector<8x8x32xbf16>
    %517 = arith.mulf %514, %516 : vector<8x8x32xbf16>
    %518 = arith.extf %517 : vector<8x8x32xbf16> to vector<8x8x32xf32>
    %cst_140 = arith.constant dense<0.000000e+00> : vector<8x8xf32>
    %519 = vector.multi_reduction <add>, %518, %cst_140 [2] : vector<8x8x32xf32> to vector<8x8xf32>
    %520 = vector.broadcast %454 : vector<1x1xf32> to vector<8x8xf32>
    %521 = arith.addf %519, %520 : vector<8x8xf32>
    %522 = tpu.transpose %521, [1, 0] : vector<8x8xf32> -> vector<8x8xf32>
    %cst_141 = arith.constant dense<0xFF800000> : vector<8xf32>
    %523 = vector.multi_reduction <maximumf>, %522, %cst_141 [1] : vector<8x8xf32> to vector<8xf32>
    %524 = vector.shape_cast %523 : vector<8xf32> to vector<8x1xf32>
    %525 = vector.broadcast %524 : vector<8x1xf32> to vector<8x8xf32>
    %526 = arith.subf %522, %525 : vector<8x8xf32>
    %527 = math.exp %526 : vector<8x8xf32>
    %cst_142 = arith.constant dense<0.000000e+00> : vector<8xf32>
    %528 = vector.multi_reduction <add>, %527, %cst_142 [1] : vector<8x8xf32> to vector<8xf32>
    %529 = vector.shape_cast %528 : vector<8xf32> to vector<8x1xf32>
    %530 = math.log %529 : vector<8x1xf32>
    %531 = vector.broadcast %530 : vector<8x1xf32> to vector<8x8xf32>
    %532 = arith.subf %526, %531 : vector<8x8xf32>
    %c2 = arith.constant 2 : index
    %c0_143 = arith.constant 0 : index
    %c0_144 = arith.constant 0 : index
    %533 = vector.load %arg12[%c2, %c0_143, %c0_144] : memref<4x8x8xf32, #tpu.memory_space<vmem>>, vector<1x8x8xf32>
    %534 = vector.shape_cast %533 : vector<1x8x8xf32> to vector<8x8xf32>
    %535 = vector.shape_cast %532 : vector<8x8xf32> to vector<1x8x8xf32>
    tpu.vector_store %arg12[%c2, %c0_143, %c0_144], %535 {strides = array<i32>} : memref<4x8x8xf32, #tpu.memory_space<vmem>>, vector<1x8x8xf32>,
    %536 = vector.extract_strided_slice %451 {offsets = [3, 0, 0], sizes = [1, 8, 32], strides = [1, 1, 1]} : vector<4x8x32xbf16> to vector<1x8x32xbf16>
    %537 = vector.shape_cast %536 : vector<1x8x32xbf16> to vector<8x32xbf16>
    %538 = vector.shape_cast %537 : vector<8x32xbf16> to vector<1x8x32xbf16>
    %539 = vector.broadcast %538 : vector<1x8x32xbf16> to vector<8x8x32xbf16>
    %540 = arith.addf %450, %539 : vector<8x8x32xbf16>
    %541 = math.tanh %540 : vector<8x8x32xbf16>
    %542 = vector.shape_cast %453 : vector<1x32xbf16> to vector<1x1x32xbf16>
    %543 = vector.broadcast %542 : vector<1x1x32xbf16> to vector<8x8x32xbf16>
    %544 = arith.mulf %541, %543 : vector<8x8x32xbf16>
    %545 = arith.extf %544 : vector<8x8x32xbf16> to vector<8x8x32xf32>
    %cst_145 = arith.constant dense<0.000000e+00> : vector<8x8xf32>
    %546 = vector.multi_reduction <add>, %545, %cst_145 [2] : vector<8x8x32xf32> to vector<8x8xf32>
    %547 = vector.broadcast %454 : vector<1x1xf32> to vector<8x8xf32>
    %548 = arith.addf %546, %547 : vector<8x8xf32>
    %549 = tpu.transpose %548, [1, 0] : vector<8x8xf32> -> vector<8x8xf32>
    %cst_146 = arith.constant dense<0xFF800000> : vector<8xf32>
    %550 = vector.multi_reduction <maximumf>, %549, %cst_146 [1] : vector<8x8xf32> to vector<8xf32>
    %551 = vector.shape_cast %550 : vector<8xf32> to vector<8x1xf32>
    %552 = vector.broadcast %551 : vector<8x1xf32> to vector<8x8xf32>
    %553 = arith.subf %549, %552 : vector<8x8xf32>
    %554 = math.exp %553 : vector<8x8xf32>
    %cst_147 = arith.constant dense<0.000000e+00> : vector<8xf32>
    %555 = vector.multi_reduction <add>, %554, %cst_147 [1] : vector<8x8xf32> to vector<8xf32>
    %556 = vector.shape_cast %555 : vector<8xf32> to vector<8x1xf32>
    %557 = math.log %556 : vector<8x1xf32>
    %558 = vector.broadcast %557 : vector<8x1xf32> to vector<8x8xf32>
    %559 = arith.subf %553, %558 : vector<8x8xf32>
    %c3 = arith.constant 3 : index
    %c0_148 = arith.constant 0 : index
    %c0_149 = arith.constant 0 : index
    %560 = vector.load %arg12[%c3, %c0_148, %c0_149] : memref<4x8x8xf32, #tpu.memory_space<vmem>>, vector<1x8x8xf32>
    %561 = vector.shape_cast %560 : vector<1x8x8xf32> to vector<8x8xf32>
    %562 = vector.shape_cast %559 : vector<8x8xf32> to vector<1x8x8xf32>
    tpu.vector_store %arg12[%c3, %c0_148, %c0_149], %562 {strides = array<i32>} : memref<4x8x8xf32, #tpu.memory_space<vmem>>, vector<1x8x8xf32>,
    return
  }
  func.func @transform_0(%arg0: i32) -> (i32, i32, i32) {
    %c0_i32 = arith.constant 0 : i32
    %c0_i32_0 = arith.constant 0 : i32
    %c0_i32_1 = arith.constant 0 : i32
    return %c0_i32, %arg0, %c0_i32_0 : i32, i32, i32
  }
  func.func @transform_1(%arg0: i32) -> (i32, i32) {
    %c0_i32 = arith.constant 0 : i32
    %c0_i32_0 = arith.constant 0 : i32
    %c0_i32_1 = arith.constant 0 : i32
    return %c0_i32, %c0_i32_0 : i32, i32
  }
  func.func @transform_2(%arg0: i32) -> (i32, i32) {
    %c0_i32 = arith.constant 0 : i32
    %c0_i32_0 = arith.constant 0 : i32
    %c0_i32_1 = arith.constant 0 : i32
    return %c0_i32, %c0_i32_0 : i32, i32
  }
  func.func @transform_3(%arg0: i32) -> (i32, i32) {
    %c0_i32 = arith.constant 0 : i32
    %c0_i32_0 = arith.constant 0 : i32
    %c0_i32_1 = arith.constant 0 : i32
    return %c0_i32, %c0_i32_0 : i32, i32
  }
  func.func @transform_4(%arg0: i32) -> (i32, i32) {
    %c0_i32 = arith.constant 0 : i32
    %c0_i32_0 = arith.constant 0 : i32
    %c0_i32_1 = arith.constant 0 : i32
    return %c0_i32, %c0_i32_0 : i32, i32
  }
  func.func @transform_5(%arg0: i32) -> (i32, i32) {
    %c0_i32 = arith.constant 0 : i32
    %c0_i32_0 = arith.constant 0 : i32
    %c0_i32_1 = arith.constant 0 : i32
    return %c0_i32, %c0_i32_0 : i32, i32
  }
  func.func @transform_6(%arg0: i32) -> (i32, i32) {
    %c0_i32 = arith.constant 0 : i32
    %c0_i32_0 = arith.constant 0 : i32
    %c0_i32_1 = arith.constant 0 : i32
    return %c0_i32, %c0_i32_0 : i32, i32
  }
  func.func @transform_7(%arg0: i32) -> (i32, i32) {
    %c0_i32 = arith.constant 0 : i32
    %c0_i32_0 = arith.constant 0 : i32
    %c0_i32_1 = arith.constant 0 : i32
    return %c0_i32, %c0_i32_0 : i32, i32
  }
  func.func @transform_8(%arg0: i32) -> (i32, i32) {
    %c0_i32 = arith.constant 0 : i32
    %c0_i32_0 = arith.constant 0 : i32
    %c0_i32_1 = arith.constant 0 : i32
    return %c0_i32, %c0_i32_0 : i32, i32
  }
  func.func @transform_9(%arg0: i32) -> (i32, i32) {
    %c0_i32 = arith.constant 0 : i32
    %c0_i32_0 = arith.constant 0 : i32
    %c0_i32_1 = arith.constant 0 : i32
    return %c0_i32, %c0_i32_0 : i32, i32
  }
  func.func @transform_10(%arg0: i32) -> (i32, i32) {
    %c0_i32 = arith.constant 0 : i32
    %c0_i32_0 = arith.constant 0 : i32
    %c0_i32_1 = arith.constant 0 : i32
    return %c0_i32, %c0_i32_0 : i32, i32
  }
  func.func @transform_11(%arg0: i32) -> (i32, i32, i32) {
    %c0_i32 = arith.constant 0 : i32
    %c0_i32_0 = arith.constant 0 : i32
    %c0_i32_1 = arith.constant 0 : i32
    return %c0_i32, %arg0, %c0_i32_0 : i32, i32, i32
  }
}

</mosaic_0001>

<llo_original>
// kernel: tpu_custom_call.1
$region0: #{tpu_custom_call.1}
  #allocation0 [shape = 'u32[]', space=smem, size = 0x4, offset = 0x4, fixed_abs, tag = 'smem constant byte address 0x4 - core index']
  #allocation1 [shape = 'u32[144,128]{1,0:T(1,128)}', space=vmem, size = 0x12000, scoped, tag = 'internal scratch']
  #allocation2 [shape = 'f32[8,8,128]{2,1,0:T(8,128)}', space=vmem, size = 0x8000, scoped, tag = 'scratch operand']
  #allocation3 [shape = 'bf16[8,8,32]{2,1,0:T(8,128)(2,1)}', space=vmem, size = 0x4000, scoped, tag = 'scratch operand']
  #allocation4 [shape = 'bf16[4,8,32]{2,1,0:T(8,128)(2,1)}', space=vmem, size = 0x2000, scoped, tag = 'scratch operand']
  #allocation5 [shape = 'f32[1,1]{1,0:T(1,128)S(1)}', space=vmem, size = 0x200, scoped, tag = 'scoped memory for tpu_custom_call.1']
  %s0 = inlined_call_operand.hbm [shape: bf16[8,8,32], index: 0, kind: input, shape index: {}]
  %s1 = inlined_call_operand.hbm [shape: bf16[32,128], index: 1, kind: input, shape index: {}]
  %s2 = inlined_call_operand.hbm [shape: bf16[32,128], index: 2, kind: input, shape index: {}]
  %s3 = inlined_call_operand.vmem [shape: f32[1,128], index: 3, kind: input, shape index: {}]
  %s4 = inlined_call_operand.vmem [shape: bf16[32,128], index: 4, kind: input, shape index: {}]
  %s5 = inlined_call_operand.vmem [shape: f32[1,128], index: 5, kind: input, shape index: {}]
  %s6 = inlined_call_operand.hbm [shape: bf16[32,32], index: 6, kind: input, shape index: {}]
  %s7 = inlined_call_operand.hbm [shape: bf16[32,32], index: 7, kind: input, shape index: {}]
  %s8 = inlined_call_operand.vmem [shape: f32[1,32], index: 8, kind: input, shape index: {}]
  %s9 = inlined_call_operand.vmem [shape: f32[1,32], index: 9, kind: input, shape index: {}]
  %s10 = inlined_call_operand.<no memory space> [shape: f32[1,1], index: 10, kind: input, shape index: {}]
  %s11 = inlined_call_operand.hbm [shape: f32[4,8,8], index: 11, kind: output, shape index: {}]
  %s12 = sld [smem:[#allocation0]]
  $region74: #{tpu_custom_call.1} parent=0
    _
  %s14 = ssub.s32 1, %s12
  %s15 = scalar_select 0, %s14, %s12
  %v16 = vstv %s10
  %17 = vst [vmem:[#allocation5] sm:$0x1] %v16
  $region1: #{tpu_custom_call.1} parent=0
    #allocation6 [shape = 'u8[16384]{0}', space=vmem, size = 0x4000, scoped, tag = 'input window, operand 0, single buffered']
    #allocation7 [shape = 's32[1]{0}', space=sflag, size = 0x4, scoped, tag = 'scoped memory for tpu_custom_call.1']
    #allocation8 [shape = 's32[1]{0}', space=sflag, size = 0x4, scoped, tag = 'scoped memory for tpu_custom_call.1']
    #allocation9 [shape = 'u8[8192]{0}', space=vmem, size = 0x2000, scoped, tag = 'input window, operand 1, single buffered']
    #allocation10 [shape = 's32[1]{0}', space=sflag, size = 0x4, scoped, tag = 'scoped memory for tpu_custom_call.1']
    #allocation11 [shape = 'u8[8192]{0}', space=vmem, size = 0x2000, scoped, tag = 'input window, operand 2, single buffered']
    #allocation12 [shape = 'u8[8192]{0}', space=vmem, size = 0x2000, scoped, tag = 'input window, operand 6, single buffered']
    #allocation13 [shape = 's32[1]{0}', space=sflag, size = 0x4, scoped, tag = 'scoped memory for tpu_custom_call.1']
    #allocation14 [shape = 'u8[8192]{0}', space=vmem, size = 0x2000, scoped, tag = 'input window, operand 7, single buffered']
    #allocation15 [shape = 'u8[16384]{0}', space=vmem, size = 0x4000, scoped, tag = 'output window, operand 0, single buffered']
    %18 = vsyncpa [#allocation7], 0
    %19 = vsyncpa [#allocation10], 0
    %20 = vsyncpa [#allocation13], 0
    %21 = vsyncpa [#allocation8], 0
    // Predicated region
    $region2: #{tpu_custom_call.1} parent=1 // pred_check
      _
    $region3: #{tpu_custom_call.1} parent=1 // pred_check_branch
      %23 = sbr.rel (0) target = $region5
    $region4: #{tpu_custom_call.1} parent=1 // pred_region
      %s25 = ssub.s32 512, 512
      %26 = vsyncadd [#allocation7], %s25
      %s27 = sshll.u32 [#allocation6], 4
      %s28 = int_to_ptr.vmem [resolvable:$true] %s27
      %33 = dma.hbm_to_vmem [thread:$0]  %s0, 512, %s28, [#allocation7], 64, 64, 4
    $region5: #{tpu_custom_call.1} parent=1 // pred_fallthru
      _
    // Predicated region
    $region6: #{tpu_custom_call.1} parent=1 // pred_check
      _
    $region7: #{tpu_custom_call.1} parent=1 // pred_check_branch
      %35 = sbr.rel (0) target = $region9
    $region8: #{tpu_custom_call.1} parent=1 // pred_region
      %s37 = ssub.s32 256, 256
      %38 = vsyncadd [#allocation10], %s37
      %s39 = sshll.u32 [#allocation9], 4
      %s40 = int_to_ptr.vmem [resolvable:$true] %s39
      %45 = dma.hbm_to_vmem [thread:$0]  %s1, 256, %s40, [#allocation10], 64, 64, 4
    $region9: #{tpu_custom_call.1} parent=1 // pred_fallthru
      _
    // Predicated region
    $region10: #{tpu_custom_call.1} parent=1 // pred_check
      _
    $region11: #{tpu_custom_call.1} parent=1 // pred_check_branch
      %47 = sbr.rel (0) target = $region13
    $region12: #{tpu_custom_call.1} parent=1 // pred_region
      %s49 = ssub.s32 256, 256
      %50 = vsyncadd [#allocation10], %s49
      %s51 = sshll.u32 [#allocation11], 4
      %s52 = int_to_ptr.vmem [resolvable:$true] %s51
      %57 = dma.hbm_to_vmem [thread:$0]  %s2, 256, %s52, [#allocation10], 64, 64, 4
    $region13: #{tpu_custom_call.1} parent=1 // pred_fallthru
      _
    // Predicated region
    $region14: #{tpu_custom_call.1} parent=1 // pred_check
      _
    $region15: #{tpu_custom_call.1} parent=1 // pred_check_branch
      %59 = sbr.rel (0) target = $region17
    $region16: #{tpu_custom_call.1} parent=1 // pred_region
      _
    $region17: #{tpu_custom_call.1} parent=1 // pred_fallthru
      _
    // Predicated region
    $region18: #{tpu_custom_call.1} parent=1 // pred_check
      _
    $region19: #{tpu_custom_call.1} parent=1 // pred_check_branch
      %61 = sbr.rel (0) target = $region21
    $region20: #{tpu_custom_call.1} parent=1 // pred_region
      _
    $region21: #{tpu_custom_call.1} parent=1 // pred_fallthru
      _
    // Predicated region
    $region22: #{tpu_custom_call.1} parent=1 // pred_check
      _
    $region23: #{tpu_custom_call.1} parent=1 // pred_check_branch
      %63 = sbr.rel (0) target = $region25
    $region24: #{tpu_custom_call.1} parent=1 // pred_region
      _
    $region25: #{tpu_custom_call.1} parent=1 // pred_fallthru
      _
    // Predicated region
    $region26: #{tpu_custom_call.1} parent=1 // pred_check
      _
    $region27: #{tpu_custom_call.1} parent=1 // pred_check_branch
      %65 = sbr.rel (0) target = $region29
    $region28: #{tpu_custom_call.1} parent=1 // pred_region
      %s67 = ssub.s32 256, 256
      %68 = vsyncadd [#allocation13], %s67
      %s69 = sshll.u32 [#allocation12], 4
      %s70 = int_to_ptr.vmem [resolvable:$true] %s69
      %75 = dma.hbm_to_vmem [thread:$0]  %s6, 256, %s70, [#allocation13], 64, 64, 4
    $region29: #{tpu_custom_call.1} parent=1 // pred_fallthru
      _
    // Predicated region
    $region30: #{tpu_custom_call.1} parent=1 // pred_check
      _
    $region31: #{tpu_custom_call.1} parent=1 // pred_check_branch
      %77 = sbr.rel (0) target = $region33
    $region32: #{tpu_custom_call.1} parent=1 // pred_region
      %s79 = ssub.s32 256, 256
      %80 = vsyncadd [#allocation13], %s79
      %s81 = sshll.u32 [#allocation14], 4
      %s82 = int_to_ptr.vmem [resolvable:$true] %s81
      %87 = dma.hbm_to_vmem [thread:$0]  %s7, 256, %s82, [#allocation13], 64, 64, 4
    $region33: #{tpu_custom_call.1} parent=1 // pred_fallthru
      _
    // Predicated region
    $region34: #{tpu_custom_call.1} parent=1 // pred_check
      _
    $region35: #{tpu_custom_call.1} parent=1 // pred_check_branch
      %89 = sbr.rel (0) target = $region37
    $region36: #{tpu_custom_call.1} parent=1 // pred_region
      _
    $region37: #{tpu_custom_call.1} parent=1 // pred_fallthru
      _
    // Predicated region
    $region38: #{tpu_custom_call.1} parent=1 // pred_check
      _
    $region39: #{tpu_custom_call.1} parent=1 // pred_check_branch
      %91 = sbr.rel (0) target = $region41
    $region40: #{tpu_custom_call.1} parent=1 // pred_region
      _
    $region41: #{tpu_custom_call.1} parent=1 // pred_fallthru
      _
    // Predicated region
    $region42: #{tpu_custom_call.1} parent=1 // pred_check
      _
    $region43: #{tpu_custom_call.1} parent=1 // pred_check_branch
      %93 = sbr.rel (0) target = $region45
    $region44: #{tpu_custom_call.1} parent=1 // pred_region
      _
    $region45: #{tpu_custom_call.1} parent=1 // pred_fallthru
      _
    // Predicated region
    $region46: #{tpu_custom_call.1} parent=1 // pred_check
      _
    $region47: #{tpu_custom_call.1} parent=1 // pred_check_branch
      %95 = sbr.rel (0) target = $region49
    $region48: #{tpu_custom_call.1} parent=1 // pred_region
      %96 = dma.done [#allocation7], 512
    $region49: #{tpu_custom_call.1} parent=1 // pred_fallthru
      _
    // Predicated region
    $region50: #{tpu_custom_call.1} parent=1 // pred_check
      _
    $region51: #{tpu_custom_call.1} parent=1 // pred_check_branch
      %98 = sbr.rel (0) target = $region53
    $region52: #{tpu_custom_call.1} parent=1 // pred_region
      %99 = dma.done [#allocation10], 256
    $region53: #{tpu_custom_call.1} parent=1 // pred_fallthru
      _
    // Predicated region
    $region54: #{tpu_custom_call.1} parent=1 // pred_check
      _
    $region55: #{tpu_custom_call.1} parent=1 // pred_check_branch
      %101 = sbr.rel (0) target = $region57
    $region56: #{tpu_custom_call.1} parent=1 // pred_region
      %102 = dma.done [#allocation10], 256
    $region57: #{tpu_custom_call.1} parent=1 // pred_fallthru
      _
    // Predicated region
    $region58: #{tpu_custom_call.1} parent=1 // pred_check
      _
    $region59: #{tpu_custom_call.1} parent=1 // pred_check_branch
      %104 = sbr.rel (0) target = $region61
    $region60: #{tpu_custom_call.1} parent=1 // pred_region
      %105 = dma.done [#allocation13], 256
    $region61: #{tpu_custom_call.1} parent=1 // pred_fallthru
      _
    // Predicated region
    $region62: #{tpu_custom_call.1} parent=1 // pred_check
      _
    $region63: #{tpu_custom_call.1} parent=1 // pred_check_branch
      %107 = sbr.rel (0) target = $region65
    $region64: #{tpu_custom_call.1} parent=1 // pred_region
      %108 = dma.done [#allocation13], 256
    $region65: #{tpu_custom_call.1} parent=1 // pred_fallthru
      _
    %v110 = vld [vmem:[#allocation6] sm:$0xf]
    %v111 = vld [vmem:[#allocation6 + $0x4] sm:$0xf]
    %v112 = vld [vmem:[#allocation6 + $0x8] sm:$0xf]
    %v113 = vld [vmem:[#allocation6 + $0xc] sm:$0xf]
    %v114 = vld [vmem:[#allocation6 + $0x10] sm:$0xf]
    %v115 = vld [vmem:[#allocation6 + $0x14] sm:$0xf]
    %v116 = vld [vmem:[#allocation6 + $0x18] sm:$0xf]
    %v117 = vld [vmem:[#allocation6 + $0x1c] sm:$0xf]
    %v118 = vld [vmem:[#allocation9] sm:$0xf]
    %v119 = vld [vmem:[#allocation9 + $0x4] sm:$0xf]
    %v120 = vld [vmem:[#allocation9 + $0x8] sm:$0xf]
    %v121 = vld [vmem:[#allocation9 + $0xc] sm:$0xf]
    %v122 = vld [vmem:[#allocation11] sm:$0xf]
    %v123 = vld [vmem:[#allocation11 + $0x4] sm:$0xf]
    %v124 = vld [vmem:[#allocation11 + $0x8] sm:$0xf]
    %v125 = vld [vmem:[#allocation11 + $0xc] sm:$0xf]
    %v126 = vld [vmem:[%s3] sm:$0x1]
    %v128 = vlaneseq
    %v129 = vshrl.u32 %v128, 7
    %v130 = vsub.s32 0, %v129
    %v131 = vrot.slane %v126, %v130
    %v141 = vunpack.c.l.b16 %v110
    %v142 = vunpack.c.l.b16 %v111
    %v143 = vunpack.c.l.b16 %v112
    %v144 = vunpack.c.l.b16 %v113
    %v145 = vunpack.c.l.b16 %v114
    %v146 = vunpack.c.l.b16 %v115
    %v147 = vunpack.c.l.b16 %v116
    %v148 = vunpack.c.l.b16 %v117
    %v149 = vpack.c.b16 %v142, %v141
    %v150 = vpack.c.b16 %v144, %v143
    %v151 = vpack.c.b16 %v146, %v145
    %v152 = vpack.c.b16 %v148, %v147
    %v157 = vunpack.c.l.b16 %v118
    %v158 = vunpack.c.l.b16 %v119
    %v159 = vunpack.c.l.b16 %v120
    %v160 = vunpack.c.l.b16 %v121
    %v161 = vpack.c.b16 %v158, %v157
    %v162 = vpack.c.b16 %v160, %v159
    %vm165 = vcmask 261120
    %v167 = vsel %vm165, %v149, 0
    %v170 = vsel %vm165, %v150, 0
    %v173 = vsel %vm165, %v151, 0
    %v176 = vsel %vm165, %v152, 0
    %178 = vmatprep.subr.bf16.mxu0 0
    %179 = vmatpush1.bf16.msra.mxu0 %v161
    %180 = vmatprep.subr.bf16.mxu0 0
    %181 = vmatpush1.bf16.msra.mxu0 %v162
    %182 = vmatprep.subr.bf16.mxu0 0
    %183 = vmatpush1.bf16.msra.mxu0 0
    %184 = vmatprep.subr.bf16.mxu0 0
    %185 = vmatpush1.bf16.msra.mxu0 0
    %186 = vmatprep.subr.bf16.mxu0 0
    %187 = vmatpush1.bf16.msra.mxu0 0
    %188 = vmatprep.subr.bf16.mxu0 0
    %189 = vmatpush1.bf16.msra.mxu0 0
    %190 = vmatprep.subr.bf16.mxu0 0
    %191 = vmatpush1.bf16.msra.mxu0 0
    %192 = vmatprep.subr.bf16.mxu0 0
    %193 = vmatpush1.bf16.msra.mxu0 0
    %194 = vmatprep.subr.bf16.mxu0 0
    %195 = vmatpush1.bf16.msra.mxu0 0
    %196 = vmatprep.subr.bf16.mxu0 0
    %197 = vmatpush1.bf16.msra.mxu0 0
    %198 = vmatprep.subr.bf16.mxu0 0
    %199 = vmatpush1.bf16.msra.mxu0 0
    %200 = vmatprep.subr.bf16.mxu0 0
    %201 = vmatpush1.bf16.msra.mxu0 0
    %202 = vmatprep.subr.bf16.mxu0 0
    %203 = vmatpush1.bf16.msra.mxu0 0
    %204 = vmatprep.subr.bf16.mxu0 0
    %205 = vmatpush1.bf16.msra.mxu0 0
    %206 = vmatprep.subr.bf16.mxu0 0
    %207 = vmatpush1.bf16.msra.mxu0 0
    %208 = vmatprep.subr.bf16.mxu0 0
    %209 = vmatpush1.bf16.msra.mxu0 0
    %210 = vmatprep.mubr.bf16.mxu0 0
    %211 = vmatmul.mubr.bf16.gmra.mrb[0].mxu0 %v167
    %v212 = vpop.f32.mrb[0].mxu0
    %v213 = vadd.f32 %v131, %v212
    %v214 = vpop.f32.mrb[0].mxu0
    %v215 = vpop.f32.mrb[0].mxu0
    %v216 = vadd.f32 %v131, %v215
    %v217 = vpop.f32.mrb[0].mxu0
    %218 = vmatprep.mubr.bf16.mxu0 0
    %219 = vmatmul.mubr.bf16.gmra.mrb[0].mxu0 %v170
    %v220 = vpop.f32.mrb[0].mxu0
    %v221 = vadd.f32 %v131, %v220
    %v222 = vpop.f32.mrb[0].mxu0
    %v223 = vpop.f32.mrb[0].mxu0
    %v224 = vadd.f32 %v131, %v223
    %v225 = vpop.f32.mrb[0].mxu0
    %226 = vmatprep.mubr.bf16.mxu0 0
    %227 = vmatmul.mubr.bf16.gmra.mrb[0].mxu0 %v173
    %v228 = vpop.f32.mrb[0].mxu0
    %v229 = vadd.f32 %v131, %v228
    %v230 = vpop.f32.mrb[0].mxu0
    %v231 = vpop.f32.mrb[0].mxu0
    %v232 = vadd.f32 %v131, %v231
    %v233 = vpop.f32.mrb[0].mxu0
    %234 = vmatprep.mubr.bf16.mxu0 0
    %235 = vmatmul.mubr.bf16.gmra.mrb[0].mxu0 %v176
    %v236 = vpop.f32.mrb[0].mxu0
    %v237 = vadd.f32 %v131, %v236
    %v238 = vpop.f32.mrb[0].mxu0
    %v239 = vpop.f32.mrb[0].mxu0
    %v240 = vadd.f32 %v131, %v239
    %v241 = vpop.f32.mrb[0].mxu0
    %242 = vdwg.mxu0
    %243 = vst [vmem:[#allocation2] sm:$0xff] %v213
    %244 = vst [vmem:[#allocation2 + $0x8] sm:$0xff] %v216
    %245 = vst [vmem:[#allocation2 + $0x10] sm:$0xff] %v221
    %246 = vst [vmem:[#allocation2 + $0x18] sm:$0xff] %v224
    %247 = vst [vmem:[#allocation2 + $0x20] sm:$0xff] %v229
    %248 = vst [vmem:[#allocation2 + $0x28] sm:$0xff] %v232
    %249 = vst [vmem:[#allocation2 + $0x30] sm:$0xff] %v237
    %250 = vst [vmem:[#allocation2 + $0x38] sm:$0xff] %v240
    %v251 = vld [vmem:[#allocation2] sm:$0xff]
    %v256 = vunpack.c.l.b16 %v122
    %v257 = vunpack.c.l.b16 %v123
    %v258 = vunpack.c.l.b16 %v124
    %v259 = vunpack.c.l.b16 %v125
    %v260 = vpack.c.b16 %v257, %v256
    %v261 = vpack.c.b16 %v259, %v258
    %v265 = vsel %vm165, 0, 0
    %267 = vmatprep.subr.bf16.mxu0 0
    %268 = vmatpush1.bf16.msra.mxu0 %v260
    %269 = vmatprep.subr.bf16.mxu0 0
    %270 = vmatpush1.bf16.msra.mxu0 %v261
    %271 = vmatprep.subr.bf16.mxu0 0
    %272 = vmatpush1.bf16.msra.mxu0 0
    %273 = vmatprep.subr.bf16.mxu0 0
    %274 = vmatpush1.bf16.msra.mxu0 0
    %275 = vmatprep.subr.bf16.mxu0 0
    %276 = vmatpush1.bf16.msra.mxu0 0
    %277 = vmatprep.subr.bf16.mxu0 0
    %278 = vmatpush1.bf16.msra.mxu0 0
    %279 = vmatprep.subr.bf16.mxu0 0
    %280 = vmatpush1.bf16.msra.mxu0 0
    %281 = vmatprep.subr.bf16.mxu0 0
    %282 = vmatpush1.bf16.msra.mxu0 0
    %283 = vmatprep.subr.bf16.mxu0 0
    %284 = vmatpush1.bf16.msra.mxu0 0
    %285 = vmatprep.subr.bf16.mxu0 0
    %286 = vmatpush1.bf16.msra.mxu0 0
    %287 = vmatprep.subr.bf16.mxu0 0
    %288 = vmatpush1.bf16.msra.mxu0 0
    %289 = vmatprep.subr.bf16.mxu0 0
    %290 = vmatpush1.bf16.msra.mxu0 0
    %291 = vmatprep.subr.bf16.mxu0 0
    %292 = vmatpush1.bf16.msra.mxu0 0
    %293 = vmatprep.subr.bf16.mxu0 0
    %294 = vmatpush1.bf16.msra.mxu0 0
    %295 = vmatprep.subr.bf16.mxu0 0
    %296 = vmatpush1.bf16.msra.mxu0 0
    %297 = vmatprep.subr.bf16.mxu0 0
    %298 = vmatpush1.bf16.msra.mxu0 0
    %299 = vmatprep.mubr.bf16.mxu0 0
    %300 = vmatmul.mubr.bf16.gmra.mrb[0].mxu0 %v265
    %v301 = vpop.f32.mrb[0].mxu0
    %v302 = vadd.f32 0.0, %v301
    %v303 = vpop.f32.mrb[0].mxu0
    %v304 = vpop.f32.mrb[0].mxu0
    %v305 = vpop.f32.mrb[0].mxu0
    %306 = vdwg.mxu0
    %v307 = vadd.f32 %v251, %v302
    %v308 = vxor.u32 %v307, 2147483648
    %v309 = vmul.f32 %v308, 1.442695
    %v310 = vpow.pop %v309
    %v311 = vadd.f32 %v310, 1.0
    %v312 = vrcp.pop %v311
    %v313 = vmul.f32 1.0, %v312
    %v314 = vtanh.pop %v307
    %v315 = vmul.f32 %v313, 0.0
    %317 = vrot.lane.b32.xlu0 %v314, 64
    %v318 = vpop.permute.xlu0 %317
    %v320 = vmul.f32 %v313, %v318
    %322 = vrot.lane.b32.xlu0 %v320, 32
    %v323 = vpop.permute.xlu0 %322
    %v325 = vadd.f32 %v315, %v323
    %v326 = vtanh.pop %v325
    %328 = vrot.lane.b32.xlu0 %v326, 64
    %v329 = vpop.permute.xlu0 %328
    %v331 = vmul.f32 %v313, %v329
    %v332 = vpack.c.bf16 %v331, %v331
    %v334 = vunpack.c.l.b16 %v332
    %v335 = vpack.c.b16 %v334, %v334
    %336 = vrot.lane.b32.xlu0 %v335, 32
    %v337 = vpop.permute.xlu0 %336
    %vm339 = vcmask 257024
    %340 = vst.msk [vmem:[#allocation3] sm:$0xf] %vm339, %v337
    %s341 = scalar_lea.vmem [#allocation2], 8
    %v342 = vld [vmem:[%s341] sm:$0xff]
    %343 = vrot.lane.b32.xlu0 %v332, 32
    %v344 = vpop.permute.xlu0 %343
    %v346 = vsel %vm165, %v344, 0
    %348 = vmatprep.subr.bf16.mxu0 0
    %349 = vmatpush1.bf16.msra.mxu0 %v260
    %350 = vmatprep.subr.bf16.mxu0 0
    %351 = vmatpush1.bf16.msra.mxu0 %v261
    %352 = vmatprep.subr.bf16.mxu0 0
    %353 = vmatpush1.bf16.msra.mxu0 0
    %354 = vmatprep.subr.bf16.mxu0 0
    %355 = vmatpush1.bf16.msra.mxu0 0
    %356 = vmatprep.subr.bf16.mxu0 0
    %357 = vmatpush1.bf16.msra.mxu0 0
    %358 = vmatprep.subr.bf16.mxu0 0
    %359 = vmatpush1.bf16.msra.mxu0 0
    %360 = vmatprep.subr.bf16.mxu0 0
    %361 = vmatpush1.bf16.msra.mxu0 0
    %362 = vmatprep.subr.bf16.mxu0 0
    %363 = vmatpush1.bf16.msra.mxu0 0
    %364 = vmatprep.subr.bf16.mxu0 0
    %365 = vmatpush1.bf16.msra.mxu0 0
    %366 = vmatprep.subr.bf16.mxu0 0
    %367 = vmatpush1.bf16.msra.mxu0 0
    %368 = vmatprep.subr.bf16.mxu0 0
    %369 = vmatpush1.bf16.msra.mxu0 0
    %370 = vmatprep.subr.bf16.mxu0 0
    %371 = vmatpush1.bf16.msra.mxu0 0
    %372 = vmatprep.subr.bf16.mxu0 0
    %373 = vmatpush1.bf16.msra.mxu0 0
    %374 = vmatprep.subr.bf16.mxu0 0
    %375 = vmatpush1.bf16.msra.mxu0 0
    %376 = vmatprep.subr.bf16.mxu0 0
    %377 = vmatpush1.bf16.msra.mxu0 0
    %378 = vmatprep.subr.bf16.mxu0 0
    %379 = vmatpush1.bf16.msra.mxu0 0
    %380 = vmatprep.mubr.bf16.mxu0 0
    %381 = vmatmul.mubr.bf16.gmra.mrb[0].mxu0 %v346
    %v382 = vpop.f32.mrb[0].mxu0
    %v383 = vadd.f32 0.0, %v382
    %v384 = vpop.f32.mrb[0].mxu0
    %v385 = vpop.f32.mrb[0].mxu0
    %v386 = vpop.f32.mrb[0].mxu0
    %387 = vdwg.mxu0
    %v388 = vadd.f32 %v342, %v383
    %v389 = vxor.u32 %v388, 2147483648
    %v390 = vmul.f32 %v389, 1.442695
    %v391 = vpow.pop %v390
    %v392 = vadd.f32 %v391, 1.0
    %v393 = vrcp.pop %v392
    %v394 = vmul.f32 1.0, %v393
    %v395 = vtanh.pop %v388
    %v396 = vmul.f32 %v394, %v325
    %398 = vrot.lane.b32.xlu0 %v395, 64
    %v399 = vpop.permute.xlu0 %398
    %v401 = vmul.f32 %v394, %v399
    %403 = vrot.lane.b32.xlu0 %v401, 32
    %v404 = vpop.permute.xlu0 %403
    %v406 = vadd.f32 %v396, %v404
    %v407 = vtanh.pop %v406
    %409 = vrot.lane.b32.xlu0 %v407, 64
    %v410 = vpop.permute.xlu0 %409
    %v412 = vmul.f32 %v394, %v410
    %v413 = vpack.c.bf16 %v412, %v412
    %v415 = vunpack.c.l.b16 %v413
    %v416 = vpack.c.b16 %v415, %v415
    %417 = vrot.lane.b32.xlu0 %v416, 32
    %v418 = vpop.permute.xlu0 %417
    %s420 = scalar_lea.vmem [#allocation3], 4
    %421 = vst.msk [vmem:[%s420] sm:$0xf] %vm339, %v418
    %s422 = scalar_lea.vmem [#allocation2], 16
    %v423 = vld [vmem:[%s422] sm:$0xff]
    %424 = vrot.lane.b32.xlu0 %v413, 32
    %v425 = vpop.permute.xlu0 %424
    %v427 = vsel %vm165, %v425, 0
    %429 = vmatprep.subr.bf16.mxu0 0
    %430 = vmatpush1.bf16.msra.mxu0 %v260
    %431 = vmatprep.subr.bf16.mxu0 0
    %432 = vmatpush1.bf16.msra.mxu0 %v261
    %433 = vmatprep.subr.bf16.mxu0 0
    %434 = vmatpush1.bf16.msra.mxu0 0
    %435 = vmatprep.subr.bf16.mxu0 0
    %436 = vmatpush1.bf16.msra.mxu0 0
    %437 = vmatprep.subr.bf16.mxu0 0
    %438 = vmatpush1.bf16.msra.mxu0 0
    %439 = vmatprep.subr.bf16.mxu0 0
    %440 = vmatpush1.bf16.msra.mxu0 0
    %441 = vmatprep.subr.bf16.mxu0 0
    %442 = vmatpush1.bf16.msra.mxu0 0
    %443 = vmatprep.subr.bf16.mxu0 0
    %444 = vmatpush1.bf16.msra.mxu0 0
    %445 = vmatprep.subr.bf16.mxu0 0
    %446 = vmatpush1.bf16.msra.mxu0 0
    %447 = vmatprep.subr.bf16.mxu0 0
    %448 = vmatpush1.bf16.msra.mxu0 0
    %449 = vmatprep.subr.bf16.mxu0 0
    %450 = vmatpush1.bf16.msra.mxu0 0
    %451 = vmatprep.subr.bf16.mxu0 0
    %452 = vmatpush1.bf16.msra.mxu0 0
    %453 = vmatprep.subr.bf16.mxu0 0
    %454 = vmatpush1.bf16.msra.mxu0 0
    %455 = vmatprep.subr.bf16.mxu0 0
    %456 = vmatpush1.bf16.msra.mxu0 0
    %457 = vmatprep.subr.bf16.mxu0 0
    %458 = vmatpush1.bf16.msra.mxu0 0
    %459 = vmatprep.subr.bf16.mxu0 0
    %460 = vmatpush1.bf16.msra.mxu0 0
    %461 = vmatprep.mubr.bf16.mxu0 0
    %462 = vmatmul.mubr.bf16.gmra.mrb[0].mxu0 %v427
    %v463 = vpop.f32.mrb[0].mxu0
    %v464 = vadd.f32 0.0, %v463
    %v465 = vpop.f32.mrb[0].mxu0
    %v466 = vpop.f32.mrb[0].mxu0
    %v467 = vpop.f32.mrb[0].mxu0
    %468 = vdwg.mxu0
    %v469 = vadd.f32 %v423, %v464
    %v470 = vxor.u32 %v469, 2147483648
    %v471 = vmul.f32 %v470, 1.442695
    %v472 = vpow.pop %v471
    %v473 = vadd.f32 %v472, 1.0
    %v474 = vrcp.pop %v473
    %v475 = vmul.f32 1.0, %v474
    %v476 = vtanh.pop %v469
    %v477 = vmul.f32 %v475, %v406
    %479 = vrot.lane.b32.xlu0 %v476, 64
    %v480 = vpop.permute.xlu0 %479
    %v482 = vmul.f32 %v475, %v480
    %484 = vrot.lane.b32.xlu0 %v482, 32
    %v485 = vpop.permute.xlu0 %484
    %v487 = vadd.f32 %v477, %v485
    %v488 = vtanh.pop %v487
    %490 = vrot.lane.b32.xlu0 %v488, 64
    %v491 = vpop.permute.xlu0 %490
    %v493 = vmul.f32 %v475, %v491
    %v494 = vpack.c.bf16 %v493, %v493
    %v496 = vunpack.c.l.b16 %v494
    %v497 = vpack.c.b16 %v496, %v496
    %498 = vrot.lane.b32.xlu0 %v497, 32
    %v499 = vpop.permute.xlu0 %498
    %s501 = scalar_lea.vmem [#allocation3], 8
    %502 = vst.msk [vmem:[%s501] sm:$0xf] %vm339, %v499
    %s503 = scalar_lea.vmem [#allocation2], 24
    %v504 = vld [vmem:[%s503] sm:$0xff]
    %505 = vrot.lane.b32.xlu0 %v494, 32
    %v506 = vpop.permute.xlu0 %505
    %v508 = vsel %vm165, %v506, 0
    %510 = vmatprep.subr.bf16.mxu0 0
    %511 = vmatpush1.bf16.msra.mxu0 %v260
    %512 = vmatprep.subr.bf16.mxu0 0
    %513 = vmatpush1.bf16.msra.mxu0 %v261
    %514 = vmatprep.subr.bf16.mxu0 0
    %515 = vmatpush1.bf16.msra.mxu0 0
    %516 = vmatprep.subr.bf16.mxu0 0
    %517 = vmatpush1.bf16.msra.mxu0 0
    %518 = vmatprep.subr.bf16.mxu0 0
    %519 = vmatpush1.bf16.msra.mxu0 0
    %520 = vmatprep.subr.bf16.mxu0 0
    %521 = vmatpush1.bf16.msra.mxu0 0
    %522 = vmatprep.subr.bf16.mxu0 0
    %523 = vmatpush1.bf16.msra.mxu0 0
    %524 = vmatprep.subr.bf16.mxu0 0
    %525 = vmatpush1.bf16.msra.mxu0 0
    %526 = vmatprep.subr.bf16.mxu0 0
    %527 = vmatpush1.bf16.msra.mxu0 0
    %528 = vmatprep.subr.bf16.mxu0 0
    %529 = vmatpush1.bf16.msra.mxu0 0
    %530 = vmatprep.subr.bf16.mxu0 0
    %531 = vmatpush1.bf16.msra.mxu0 0
    %532 = vmatprep.subr.bf16.mxu0 0
    %533 = vmatpush1.bf16.msra.mxu0 0
    %534 = vmatprep.subr.bf16.mxu0 0
    %535 = vmatpush1.bf16.msra.mxu0 0
    %536 = vmatprep.subr.bf16.mxu0 0
    %537 = vmatpush1.bf16.msra.mxu0 0
    %538 = vmatprep.subr.bf16.mxu0 0
    %539 = vmatpush1.bf16.msra.mxu0 0
    %540 = vmatprep.subr.bf16.mxu0 0
    %541 = vmatpush1.bf16.msra.mxu0 0
    %542 = vmatprep.mubr.bf16.mxu0 0
    %543 = vmatmul.mubr.bf16.gmra.mrb[0].mxu0 %v508
    %v544 = vpop.f32.mrb[0].mxu0
    %v545 = vadd.f32 0.0, %v544
    %v546 = vpop.f32.mrb[0].mxu0
    %v547 = vpop.f32.mrb[0].mxu0
    %v548 = vpop.f32.mrb[0].mxu0
    %549 = vdwg.mxu0
    %v550 = vadd.f32 %v504, %v545
    %v551 = vxor.u32 %v550, 2147483648
    %v552 = vmul.f32 %v551, 1.442695
    %v553 = vpow.pop %v552
    %v554 = vadd.f32 %v553, 1.0
    %v555 = vrcp.pop %v554
    %v556 = vmul.f32 1.0, %v555
    %v557 = vtanh.pop %v550
    %v558 = vmul.f32 %v556, %v487
    %560 = vrot.lane.b32.xlu0 %v557, 64
    %v561 = vpop.permute.xlu0 %560
    %v563 = vmul.f32 %v556, %v561
    %565 = vrot.lane.b32.xlu0 %v563, 32
    %v566 = vpop.permute.xlu0 %565
    %v568 = vadd.f32 %v558, %v566
    %v569 = vtanh.pop %v568
    %571 = vrot.lane.b32.xlu0 %v569, 64
    %v572 = vpop.permute.xlu0 %571
    %v574 = vmul.f32 %v556, %v572
    %v575 = vpack.c.bf16 %v574, %v574
    %v577 = vunpack.c.l.b16 %v575
    %v578 = vpack.c.b16 %v577, %v577
    %579 = vrot.lane.b32.xlu0 %v578, 32
    %v580 = vpop.permute.xlu0 %579
    %s582 = scalar_lea.vmem [#allocation3], 12
    %583 = vst.msk [vmem:[%s582] sm:$0xf] %vm339, %v580
    %s584 = scalar_lea.vmem [#allocation2], 32
    %v585 = vld [vmem:[%s584] sm:$0xff]
    %586 = vrot.lane.b32.xlu0 %v575, 32
    %v587 = vpop.permute.xlu0 %586
    %v589 = vsel %vm165, %v587, 0
    %591 = vmatprep.subr.bf16.mxu0 0
    %592 = vmatpush1.bf16.msra.mxu0 %v260
    %593 = vmatprep.subr.bf16.mxu0 0
    %594 = vmatpush1.bf16.msra.mxu0 %v261
    %595 = vmatprep.subr.bf16.mxu0 0
    %596 = vmatpush1.bf16.msra.mxu0 0
    %597 = vmatprep.subr.bf16.mxu0 0
    %598 = vmatpush1.bf16.msra.mxu0 0
    %599 = vmatprep.subr.bf16.mxu0 0
    %600 = vmatpush1.bf16.msra.mxu0 0
    %601 = vmatprep.subr.bf16.mxu0 0
    %602 = vmatpush1.bf16.msra.mxu0 0
    %603 = vmatprep.subr.bf16.mxu0 0
    %604 = vmatpush1.bf16.msra.mxu0 0
    %605 = vmatprep.subr.bf16.mxu0 0
    %606 = vmatpush1.bf16.msra.mxu0 0
    %607 = vmatprep.subr.bf16.mxu0 0
    %608 = vmatpush1.bf16.msra.mxu0 0
    %609 = vmatprep.subr.bf16.mxu0 0
    %610 = vmatpush1.bf16.msra.mxu0 0
    %611 = vmatprep.subr.bf16.mxu0 0
    %612 = vmatpush1.bf16.msra.mxu0 0
    %613 = vmatprep.subr.bf16.mxu0 0
    %614 = vmatpush1.bf16.msra.mxu0 0
    %615 = vmatprep.subr.bf16.mxu0 0
    %616 = vmatpush1.bf16.msra.mxu0 0
    %617 = vmatprep.subr.bf16.mxu0 0
    %618 = vmatpush1.bf16.msra.mxu0 0
    %619 = vmatprep.subr.bf16.mxu0 0
    %620 = vmatpush1.bf16.msra.mxu0 0
    %621 = vmatprep.subr.bf16.mxu0 0
    %622 = vmatpush1.bf16.msra.mxu0 0
    %623 = vmatprep.mubr.bf16.mxu0 0
    %624 = vmatmul.mubr.bf16.gmra.mrb[0].mxu0 %v589
    %v625 = vpop.f32.mrb[0].mxu0
    %v626 = vadd.f32 0.0, %v625
    %v627 = vpop.f32.mrb[0].mxu0
    %v628 = vpop.f32.mrb[0].mxu0
    %v629 = vpop.f32.mrb[0].mxu0
    %630 = vdwg.mxu0
    %v631 = vadd.f32 %v585, %v626
    %v632 = vxor.u32 %v631, 2147483648
    %v633 = vmul.f32 %v632, 1.442695
    %v634 = vpow.pop %v633
    %v635 = vadd.f32 %v634, 1.0
    %v636 = vrcp.pop %v635
    %v637 = vmul.f32 1.0, %v636
    %v638 = vtanh.pop %v631
    %v639 = vmul.f32 %v637, %v568
    %641 = vrot.lane.b32.xlu0 %v638, 64
    %v642 = vpop.permute.xlu0 %641
    %v644 = vmul.f32 %v637, %v642
    %646 = vrot.lane.b32.xlu0 %v644, 32
    %v647 = vpop.permute.xlu0 %646
    %v649 = vadd.f32 %v639, %v647
    %v650 = vtanh.pop %v649
    %652 = vrot.lane.b32.xlu0 %v650, 64
    %v653 = vpop.permute.xlu0 %652
    %v655 = vmul.f32 %v637, %v653
    %v656 = vpack.c.bf16 %v655, %v655
    %v658 = vunpack.c.l.b16 %v656
    %v659 = vpack.c.b16 %v658, %v658
    %660 = vrot.lane.b32.xlu0 %v659, 32
    %v661 = vpop.permute.xlu0 %660
    %s663 = scalar_lea.vmem [#allocation3], 16
    %664 = vst.msk [vmem:[%s663] sm:$0xf] %vm339, %v661
    %s665 = scalar_lea.vmem [#allocation2], 40
    %v666 = vld [vmem:[%s665] sm:$0xff]
    %667 = vrot.lane.b32.xlu0 %v656, 32
    %v668 = vpop.permute.xlu0 %667
    %v670 = vsel %vm165, %v668, 0
    %672 = vmatprep.subr.bf16.mxu0 0
    %673 = vmatpush1.bf16.msra.mxu0 %v260
    %674 = vmatprep.subr.bf16.mxu0 0
    %675 = vmatpush1.bf16.msra.mxu0 %v261
    %676 = vmatprep.subr.bf16.mxu0 0
    %677 = vmatpush1.bf16.msra.mxu0 0
    %678 = vmatprep.subr.bf16.mxu0 0
    %679 = vmatpush1.bf16.msra.mxu0 0
    %680 = vmatprep.subr.bf16.mxu0 0
    %681 = vmatpush1.bf16.msra.mxu0 0
    %682 = vmatprep.subr.bf16.mxu0 0
    %683 = vmatpush1.bf16.msra.mxu0 0
    %684 = vmatprep.subr.bf16.mxu0 0
    %685 = vmatpush1.bf16.msra.mxu0 0
    %686 = vmatprep.subr.bf16.mxu0 0
    %687 = vmatpush1.bf16.msra.mxu0 0
    %688 = vmatprep.subr.bf16.mxu0 0
    %689 = vmatpush1.bf16.msra.mxu0 0
    %690 = vmatprep.subr.bf16.mxu0 0
    %691 = vmatpush1.bf16.msra.mxu0 0
    %692 = vmatprep.subr.bf16.mxu0 0
    %693 = vmatpush1.bf16.msra.mxu0 0
    %694 = vmatprep.subr.bf16.mxu0 0
    %695 = vmatpush1.bf16.msra.mxu0 0
    %696 = vmatprep.subr.bf16.mxu0 0
    %697 = vmatpush1.bf16.msra.mxu0 0
    %698 = vmatprep.subr.bf16.mxu0 0
    %699 = vmatpush1.bf16.msra.mxu0 0
    %700 = vmatprep.subr.bf16.mxu0 0
    %701 = vmatpush1.bf16.msra.mxu0 0
    %702 = vmatprep.subr.bf16.mxu0 0
    %703 = vmatpush1.bf16.msra.mxu0 0
    %704 = vmatprep.mubr.bf16.mxu0 0
    %705 = vmatmul.mubr.bf16.gmra.mrb[0].mxu0 %v670
    %v706 = vpop.f32.mrb[0].mxu0
    %v707 = vadd.f32 0.0, %v706
    %v708 = vpop.f32.mrb[0].mxu0
    %v709 = vpop.f32.mrb[0].mxu0
    %v710 = vpop.f32.mrb[0].mxu0
    %711 = vdwg.mxu0
    %v712 = vadd.f32 %v666, %v707
    %v713 = vxor.u32 %v712, 2147483648
    %v714 = vmul.f32 %v713, 1.442695
    %v715 = vpow.pop %v714
    %v716 = vadd.f32 %v715, 1.0
    %v717 = vrcp.pop %v716
    %v718 = vmul.f32 1.0, %v717
    %v719 = vtanh.pop %v712
    %v720 = vmul.f32 %v718, %v649
    %722 = vrot.lane.b32.xlu0 %v719, 64
    %v723 = vpop.permute.xlu0 %722
    %v725 = vmul.f32 %v718, %v723
    %727 = vrot.lane.b32.xlu0 %v725, 32
    %v728 = vpop.permute.xlu0 %727
    %v730 = vadd.f32 %v720, %v728
    %v731 = vtanh.pop %v730
    %733 = vrot.lane.b32.xlu0 %v731, 64
    %v734 = vpop.permute.xlu0 %733
    %v736 = vmul.f32 %v718, %v734
    %v737 = vpack.c.bf16 %v736, %v736
    %v739 = vunpack.c.l.b16 %v737
    %v740 = vpack.c.b16 %v739, %v739
    %741 = vrot.lane.b32.xlu0 %v740, 32
    %v742 = vpop.permute.xlu0 %741
    %s744 = scalar_lea.vmem [#allocation3], 20
    %745 = vst.msk [vmem:[%s744] sm:$0xf] %vm339, %v742
    %s746 = scalar_lea.vmem [#allocation2], 48
    %v747 = vld [vmem:[%s746] sm:$0xff]
    %748 = vrot.lane.b32.xlu0 %v737, 32
    %v749 = vpop.permute.xlu0 %748
    %v751 = vsel %vm165, %v749, 0
    %753 = vmatprep.subr.bf16.mxu0 0
    %754 = vmatpush1.bf16.msra.mxu0 %v260
    %755 = vmatprep.subr.bf16.mxu0 0
    %756 = vmatpush1.bf16.msra.mxu0 %v261
    %757 = vmatprep.subr.bf16.mxu0 0
    %758 = vmatpush1.bf16.msra.mxu0 0
    %759 = vmatprep.subr.bf16.mxu0 0
    %760 = vmatpush1.bf16.msra.mxu0 0
    %761 = vmatprep.subr.bf16.mxu0 0
    %762 = vmatpush1.bf16.msra.mxu0 0
    %763 = vmatprep.subr.bf16.mxu0 0
    %764 = vmatpush1.bf16.msra.mxu0 0
    %765 = vmatprep.subr.bf16.mxu0 0
    %766 = vmatpush1.bf16.msra.mxu0 0
    %767 = vmatprep.subr.bf16.mxu0 0
    %768 = vmatpush1.bf16.msra.mxu0 0
    %769 = vmatprep.subr.bf16.mxu0 0
    %770 = vmatpush1.bf16.msra.mxu0 0
    %771 = vmatprep.subr.bf16.mxu0 0
    %772 = vmatpush1.bf16.msra.mxu0 0
    %773 = vmatprep.subr.bf16.mxu0 0
    %774 = vmatpush1.bf16.msra.mxu0 0
    %775 = vmatprep.subr.bf16.mxu0 0
    %776 = vmatpush1.bf16.msra.mxu0 0
    %777 = vmatprep.subr.bf16.mxu0 0
    %778 = vmatpush1.bf16.msra.mxu0 0
    %779 = vmatprep.subr.bf16.mxu0 0
    %780 = vmatpush1.bf16.msra.mxu0 0
    %781 = vmatprep.subr.bf16.mxu0 0
    %782 = vmatpush1.bf16.msra.mxu0 0
    %783 = vmatprep.subr.bf16.mxu0 0
    %784 = vmatpush1.bf16.msra.mxu0 0
    %785 = vmatprep.mubr.bf16.mxu0 0
    %786 = vmatmul.mubr.bf16.gmra.mrb[0].mxu0 %v751
    %v787 = vpop.f32.mrb[0].mxu0
    %v788 = vadd.f32 0.0, %v787
    %v789 = vpop.f32.mrb[0].mxu0
    %v790 = vpop.f32.mrb[0].mxu0
    %v791 = vpop.f32.mrb[0].mxu0
    %792 = vdwg.mxu0
    %v793 = vadd.f32 %v747, %v788
    %v794 = vxor.u32 %v793, 2147483648
    %v795 = vmul.f32 %v794, 1.442695
    %v796 = vpow.pop %v795
    %v797 = vadd.f32 %v796, 1.0
    %v798 = vrcp.pop %v797
    %v799 = vmul.f32 1.0, %v798
    %v800 = vtanh.pop %v793
    %v801 = vmul.f32 %v799, %v730
    %803 = vrot.lane.b32.xlu0 %v800, 64
    %v804 = vpop.permute.xlu0 %803
    %v806 = vmul.f32 %v799, %v804
    %808 = vrot.lane.b32.xlu0 %v806, 32
    %v809 = vpop.permute.xlu0 %808
    %v811 = vadd.f32 %v801, %v809
    %v812 = vtanh.pop %v811
    %814 = vrot.lane.b32.xlu0 %v812, 64
    %v815 = vpop.permute.xlu0 %814
    %v817 = vmul.f32 %v799, %v815
    %v818 = vpack.c.bf16 %v817, %v817
    %v820 = vunpack.c.l.b16 %v818
    %v821 = vpack.c.b16 %v820, %v820
    %822 = vrot.lane.b32.xlu0 %v821, 32
    %v823 = vpop.permute.xlu0 %822
    %s825 = scalar_lea.vmem [#allocation3], 24
    %826 = vst.msk [vmem:[%s825] sm:$0xf] %vm339, %v823
    %s827 = scalar_lea.vmem [#allocation2], 56
    %v828 = vld [vmem:[%s827] sm:$0xff]
    %829 = vrot.lane.b32.xlu0 %v818, 32
    %v830 = vpop.permute.xlu0 %829
    %v832 = vsel %vm165, %v830, 0
    %834 = vmatprep.subr.bf16.mxu0 0
    %835 = vmatpush1.bf16.msra.mxu0 %v260
    %836 = vmatprep.subr.bf16.mxu0 0
    %837 = vmatpush1.bf16.msra.mxu0 %v261
    %838 = vmatprep.subr.bf16.mxu0 0
    %839 = vmatpush1.bf16.msra.mxu0 0
    %840 = vmatprep.subr.bf16.mxu0 0
    %841 = vmatpush1.bf16.msra.mxu0 0
    %842 = vmatprep.subr.bf16.mxu0 0
    %843 = vmatpush1.bf16.msra.mxu0 0
    %844 = vmatprep.subr.bf16.mxu0 0
    %845 = vmatpush1.bf16.msra.mxu0 0
    %846 = vmatprep.subr.bf16.mxu0 0
    %847 = vmatpush1.bf16.msra.mxu0 0
    %848 = vmatprep.subr.bf16.mxu0 0
    %849 = vmatpush1.bf16.msra.mxu0 0
    %850 = vmatprep.subr.bf16.mxu0 0
    %851 = vmatpush1.bf16.msra.mxu0 0
    %852 = vmatprep.subr.bf16.mxu0 0
    %853 = vmatpush1.bf16.msra.mxu0 0
    %854 = vmatprep.subr.bf16.mxu0 0
    %855 = vmatpush1.bf16.msra.mxu0 0
    %856 = vmatprep.subr.bf16.mxu0 0
    %857 = vmatpush1.bf16.msra.mxu0 0
    %858 = vmatprep.subr.bf16.mxu0 0
    %859 = vmatpush1.bf16.msra.mxu0 0
    %860 = vmatprep.subr.bf16.mxu0 0
    %861 = vmatpush1.bf16.msra.mxu0 0
    %862 = vmatprep.subr.bf16.mxu0 0
    %863 = vmatpush1.bf16.msra.mxu0 0
    %864 = vmatprep.subr.bf16.mxu0 0
    %865 = vmatpush1.bf16.msra.mxu0 0
    %866 = vmatprep.mubr.bf16.mxu0 0
    %867 = vmatmul.mubr.bf16.gmra.mrb[0].mxu0 %v832
    %v868 = vpop.f32.mrb[0].mxu0
    %v869 = vadd.f32 0.0, %v868
    %v870 = vpop.f32.mrb[0].mxu0
    %v871 = vpop.f32.mrb[0].mxu0
    %v872 = vpop.f32.mrb[0].mxu0
    %873 = vdwg.mxu0
    %v874 = vadd.f32 %v828, %v869
    %v875 = vxor.u32 %v874, 2147483648
    %v876 = vmul.f32 %v875, 1.442695
    %v877 = vpow.pop %v876
    %v878 = vadd.f32 %v877, 1.0
    %v879 = vrcp.pop %v878
    %v880 = vmul.f32 1.0, %v879
    %v881 = vtanh.pop %v874
    %v882 = vmul.f32 %v880, %v811
    %884 = vrot.lane.b32.xlu0 %v881, 64
    %v885 = vpop.permute.xlu0 %884
    %v887 = vmul.f32 %v880, %v885
    %889 = vrot.lane.b32.xlu0 %v887, 32
    %v890 = vpop.permute.xlu0 %889
    %v892 = vadd.f32 %v882, %v890
    %v893 = vtanh.pop %v892
    %895 = vrot.lane.b32.xlu0 %v893, 64
    %v896 = vpop.permute.xlu0 %895
    %v898 = vmul.f32 %v880, %v896
    %v899 = vpack.c.bf16 %v898, %v898
    %v901 = vunpack.c.l.b16 %v899
    %v902 = vpack.c.b16 %v901, %v901
    %903 = vrot.lane.b32.xlu0 %v902, 32
    %v904 = vpop.permute.xlu0 %903
    %s906 = scalar_lea.vmem [#allocation3], 28
    %907 = vst.msk [vmem:[%s906] sm:$0xf] %vm339, %v904
    %v908 = vld [vmem:[%s4] sm:$0xf]
    %v909 = vld [vmem:[%s4 + $0x4] sm:$0xf]
    %v910 = vld [vmem:[%s4 + $0x8] sm:$0xf]
    %v911 = vld [vmem:[%s4 + $0xc] sm:$0xf]
    %v912 = vld [vmem:[%s5] sm:$0x1]
    %v914 = vlaneseq
    %v915 = vshrl.u32 %v914, 7
    %v916 = vsub.s32 0, %v915
    %v917 = vrot.slane %v912, %v916
    %v923 = vunpack.c.l.b16 %v908
    %v924 = vunpack.c.l.b16 %v909
    %v925 = vunpack.c.l.b16 %v910
    %v926 = vunpack.c.l.b16 %v911
    %v927 = vpack.c.b16 %v924, %v923
    %v928 = vpack.c.b16 %v926, %v925
    %931 = vmatprep.subr.bf16.mxu0 0
    %932 = vmatpush1.bf16.msra.mxu0 %v927
    %933 = vmatprep.subr.bf16.mxu0 0
    %934 = vmatpush1.bf16.msra.mxu0 %v928
    %935 = vmatprep.subr.bf16.mxu0 0
    %936 = vmatpush1.bf16.msra.mxu0 0
    %937 = vmatprep.subr.bf16.mxu0 0
    %938 = vmatpush1.bf16.msra.mxu0 0
    %939 = vmatprep.subr.bf16.mxu0 0
    %940 = vmatpush1.bf16.msra.mxu0 0
    %941 = vmatprep.subr.bf16.mxu0 0
    %942 = vmatpush1.bf16.msra.mxu0 0
    %943 = vmatprep.subr.bf16.mxu0 0
    %944 = vmatpush1.bf16.msra.mxu0 0
    %945 = vmatprep.subr.bf16.mxu0 0
    %946 = vmatpush1.bf16.msra.mxu0 0
    %947 = vmatprep.subr.bf16.mxu0 0
    %948 = vmatpush1.bf16.msra.mxu0 0
    %949 = vmatprep.subr.bf16.mxu0 0
    %950 = vmatpush1.bf16.msra.mxu0 0
    %951 = vmatprep.subr.bf16.mxu0 0
    %952 = vmatpush1.bf16.msra.mxu0 0
    %953 = vmatprep.subr.bf16.mxu0 0
    %954 = vmatpush1.bf16.msra.mxu0 0
    %955 = vmatprep.subr.bf16.mxu0 0
    %956 = vmatpush1.bf16.msra.mxu0 0
    %957 = vmatprep.subr.bf16.mxu0 0
    %958 = vmatpush1.bf16.msra.mxu0 0
    %959 = vmatprep.subr.bf16.mxu0 0
    %960 = vmatpush1.bf16.msra.mxu0 0
    %961 = vmatprep.subr.bf16.mxu0 0
    %962 = vmatpush1.bf16.msra.mxu0 0
    %963 = vmatprep.mubr.bf16.mxu0 0
    %964 = vmatmul.mubr.bf16.gmra.mrb[0].mxu0 %v265
    %v965 = vpop.f32.mrb[0].mxu0
    %v966 = vadd.f32 %v917, %v965
    %v967 = vpop.f32.mrb[0].mxu0
    %v968 = vpop.f32.mrb[0].mxu0
    %v969 = vpop.f32.mrb[0].mxu0
    %970 = vdwg.mxu0
    %v971 = vxor.u32 %v966, 2147483648
    %v972 = vmul.f32 %v971, 1.442695
    %v973 = vpow.pop %v972
    %v974 = vadd.f32 %v973, 1.0
    %v975 = vrcp.pop %v974
    %v976 = vmul.f32 1.0, %v975
    %v977 = vtanh.pop %v966
    %979 = vrot.lane.b32.xlu0 %v898, 64
    %v980 = vpop.permute.xlu0 %979
    %v982 = vmul.f32 %v976, %v980
    %984 = vrot.lane.b32.xlu0 %v977, 64
    %v985 = vpop.permute.xlu0 %984
    %v987 = vmul.f32 %v976, %v985
    %989 = vrot.lane.b32.xlu0 %v987, 32
    %v990 = vpop.permute.xlu0 %989
    %v992 = vadd.f32 %v982, %v990
    %v993 = vtanh.pop %v992
    %995 = vrot.lane.b32.xlu0 %v993, 64
    %v996 = vpop.permute.xlu0 %995
    %v998 = vmul.f32 %v976, %v996
    %v999 = vpack.c.bf16 %v998, %v998
    %v1001 = vunpack.c.l.b16 %v999
    %v1002 = vpack.c.b16 %v1001, %v1001
    %1003 = vrot.lane.b32.xlu0 %v1002, 32
    %v1004 = vpop.permute.xlu0 %1003
    %1006 = vst.msk [vmem:[#allocation4] sm:$0xf] %vm339, %v1004
    %1007 = vrot.lane.b32.xlu0 %v999, 32
    %v1008 = vpop.permute.xlu0 %1007
    %v1010 = vsel %vm165, %v1008, 0
    %1012 = vmatprep.subr.bf16.mxu0 0
    %1013 = vmatpush1.bf16.msra.mxu0 %v927
    %1014 = vmatprep.subr.bf16.mxu0 0
    %1015 = vmatpush1.bf16.msra.mxu0 %v928
    %1016 = vmatprep.subr.bf16.mxu0 0
    %1017 = vmatpush1.bf16.msra.mxu0 0
    %1018 = vmatprep.subr.bf16.mxu0 0
    %1019 = vmatpush1.bf16.msra.mxu0 0
    %1020 = vmatprep.subr.bf16.mxu0 0
    %1021 = vmatpush1.bf16.msra.mxu0 0
    %1022 = vmatprep.subr.bf16.mxu0 0
    %1023 = vmatpush1.bf16.msra.mxu0 0
    %1024 = vmatprep.subr.bf16.mxu0 0
    %1025 = vmatpush1.bf16.msra.mxu0 0
    %1026 = vmatprep.subr.bf16.mxu0 0
    %1027 = vmatpush1.bf16.msra.mxu0 0
    %1028 = vmatprep.subr.bf16.mxu0 0
    %1029 = vmatpush1.bf16.msra.mxu0 0
    %1030 = vmatprep.subr.bf16.mxu0 0
    %1031 = vmatpush1.bf16.msra.mxu0 0
    %1032 = vmatprep.subr.bf16.mxu0 0
    %1033 = vmatpush1.bf16.msra.mxu0 0
    %1034 = vmatprep.subr.bf16.mxu0 0
    %1035 = vmatpush1.bf16.msra.mxu0 0
    %1036 = vmatprep.subr.bf16.mxu0 0
    %1037 = vmatpush1.bf16.msra.mxu0 0
    %1038 = vmatprep.subr.bf16.mxu0 0
    %1039 = vmatpush1.bf16.msra.mxu0 0
    %1040 = vmatprep.subr.bf16.mxu0 0
    %1041 = vmatpush1.bf16.msra.mxu0 0
    %1042 = vmatprep.subr.bf16.mxu0 0
    %1043 = vmatpush1.bf16.msra.mxu0 0
    %1044 = vmatprep.mubr.bf16.mxu0 0
    %1045 = vmatmul.mubr.bf16.gmra.mrb[0].mxu0 %v1010
    %v1046 = vpop.f32.mrb[0].mxu0
    %v1047 = vadd.f32 %v917, %v1046
    %v1048 = vpop.f32.mrb[0].mxu0
    %v1049 = vpop.f32.mrb[0].mxu0
    %v1050 = vpop.f32.mrb[0].mxu0
    %1051 = vdwg.mxu0
    %v1052 = vxor.u32 %v1047, 2147483648
    %v1053 = vmul.f32 %v1052, 1.442695
    %v1054 = vpow.pop %v1053
    %v1055 = vadd.f32 %v1054, 1.0
    %v1056 = vrcp.pop %v1055
    %v1057 = vmul.f32 1.0, %v1056
    %v1058 = vtanh.pop %v1047
    %v1059 = vmul.f32 %v1057, %v992
    %1061 = vrot.lane.b32.xlu0 %v1058, 64
    %v1062 = vpop.permute.xlu0 %1061
    %v1064 = vmul.f32 %v1057, %v1062
    %1066 = vrot.lane.b32.xlu0 %v1064, 32
    %v1067 = vpop.permute.xlu0 %1066
    %v1069 = vadd.f32 %v1059, %v1067
    %v1070 = vtanh.pop %v1069
    %1072 = vrot.lane.b32.xlu0 %v1070, 64
    %v1073 = vpop.permute.xlu0 %1072
    %v1075 = vmul.f32 %v1057, %v1073
    %v1076 = vpack.c.bf16 %v1075, %v1075
    %v1078 = vunpack.c.l.b16 %v1076
    %v1079 = vpack.c.b16 %v1078, %v1078
    %1080 = vrot.lane.b32.xlu0 %v1079, 32
    %v1081 = vpop.permute.xlu0 %1080
    %s1083 = scalar_lea.vmem [#allocation4], 4
    %1084 = vst.msk [vmem:[%s1083] sm:$0xf] %vm339, %v1081
    %1085 = vrot.lane.b32.xlu0 %v1076, 32
    %v1086 = vpop.permute.xlu0 %1085
    %v1088 = vsel %vm165, %v1086, 0
    %1090 = vmatprep.subr.bf16.mxu0 0
    %1091 = vmatpush1.bf16.msra.mxu0 %v927
    %1092 = vmatprep.subr.bf16.mxu0 0
    %1093 = vmatpush1.bf16.msra.mxu0 %v928
    %1094 = vmatprep.subr.bf16.mxu0 0
    %1095 = vmatpush1.bf16.msra.mxu0 0
    %1096 = vmatprep.subr.bf16.mxu0 0
    %1097 = vmatpush1.bf16.msra.mxu0 0
    %1098 = vmatprep.subr.bf16.mxu0 0
    %1099 = vmatpush1.bf16.msra.mxu0 0
    %1100 = vmatprep.subr.bf16.mxu0 0
    %1101 = vmatpush1.bf16.msra.mxu0 0
    %1102 = vmatprep.subr.bf16.mxu0 0
    %1103 = vmatpush1.bf16.msra.mxu0 0
    %1104 = vmatprep.subr.bf16.mxu0 0
    %1105 = vmatpush1.bf16.msra.mxu0 0
    %1106 = vmatprep.subr.bf16.mxu0 0
    %1107 = vmatpush1.bf16.msra.mxu0 0
    %1108 = vmatprep.subr.bf16.mxu0 0
    %1109 = vmatpush1.bf16.msra.mxu0 0
    %1110 = vmatprep.subr.bf16.mxu0 0
    %1111 = vmatpush1.bf16.msra.mxu0 0
    %1112 = vmatprep.subr.bf16.mxu0 0
    %1113 = vmatpush1.bf16.msra.mxu0 0
    %1114 = vmatprep.subr.bf16.mxu0 0
    %1115 = vmatpush1.bf16.msra.mxu0 0
    %1116 = vmatprep.subr.bf16.mxu0 0
    %1117 = vmatpush1.bf16.msra.mxu0 0
    %1118 = vmatprep.subr.bf16.mxu0 0
    %1119 = vmatpush1.bf16.msra.mxu0 0
    %1120 = vmatprep.subr.bf16.mxu0 0
    %1121 = vmatpush1.bf16.msra.mxu0 0
    %1122 = vmatprep.mubr.bf16.mxu0 0
    %1123 = vmatmul.mubr.bf16.gmra.mrb[0].mxu0 %v1088
    %v1124 = vpop.f32.mrb[0].mxu0
    %v1125 = vadd.f32 %v917, %v1124
    %v1126 = vpop.f32.mrb[0].mxu0
    %v1127 = vpop.f32.mrb[0].mxu0
    %v1128 = vpop.f32.mrb[0].mxu0
    %1129 = vdwg.mxu0
    %v1130 = vxor.u32 %v1125, 2147483648
    %v1131 = vmul.f32 %v1130, 1.442695
    %v1132 = vpow.pop %v1131
    %v1133 = vadd.f32 %v1132, 1.0
    %v1134 = vrcp.pop %v1133
    %v1135 = vmul.f32 1.0, %v1134
    %v1136 = vtanh.pop %v1125
    %v1137 = vmul.f32 %v1135, %v1069
    %1139 = vrot.lane.b32.xlu0 %v1136, 64
    %v1140 = vpop.permute.xlu0 %1139
    %v1142 = vmul.f32 %v1135, %v1140
    %1144 = vrot.lane.b32.xlu0 %v1142, 32
    %v1145 = vpop.permute.xlu0 %1144
    %v1147 = vadd.f32 %v1137, %v1145
    %v1148 = vtanh.pop %v1147
    %1150 = vrot.lane.b32.xlu0 %v1148, 64
    %v1151 = vpop.permute.xlu0 %1150
    %v1153 = vmul.f32 %v1135, %v1151
    %v1154 = vpack.c.bf16 %v1153, %v1153
    %v1156 = vunpack.c.l.b16 %v1154
    %v1157 = vpack.c.b16 %v1156, %v1156
    %1158 = vrot.lane.b32.xlu0 %v1157, 32
    %v1159 = vpop.permute.xlu0 %1158
    %s1161 = scalar_lea.vmem [#allocation4], 8
    %1162 = vst.msk [vmem:[%s1161] sm:$0xf] %vm339, %v1159
    %1163 = vrot.lane.b32.xlu0 %v1154, 32
    %v1164 = vpop.permute.xlu0 %1163
    %v1166 = vsel %vm165, %v1164, 0
    %1168 = vmatprep.subr.bf16.mxu0 0
    %1169 = vmatpush1.bf16.msra.mxu0 %v927
    %1170 = vmatprep.subr.bf16.mxu0 0
    %1171 = vmatpush1.bf16.msra.mxu0 %v928
    %1172 = vmatprep.subr.bf16.mxu0 0
    %1173 = vmatpush1.bf16.msra.mxu0 0
    %1174 = vmatprep.subr.bf16.mxu0 0
    %1175 = vmatpush1.bf16.msra.mxu0 0
    %1176 = vmatprep.subr.bf16.mxu0 0
    %1177 = vmatpush1.bf16.msra.mxu0 0
    %1178 = vmatprep.subr.bf16.mxu0 0
    %1179 = vmatpush1.bf16.msra.mxu0 0
    %1180 = vmatprep.subr.bf16.mxu0 0
    %1181 = vmatpush1.bf16.msra.mxu0 0
    %1182 = vmatprep.subr.bf16.mxu0 0
    %1183 = vmatpush1.bf16.msra.mxu0 0
    %1184 = vmatprep.subr.bf16.mxu0 0
    %1185 = vmatpush1.bf16.msra.mxu0 0
    %1186 = vmatprep.subr.bf16.mxu0 0
    %1187 = vmatpush1.bf16.msra.mxu0 0
    %1188 = vmatprep.subr.bf16.mxu0 0
    %1189 = vmatpush1.bf16.msra.mxu0 0
    %1190 = vmatprep.subr.bf16.mxu0 0
    %1191 = vmatpush1.bf16.msra.mxu0 0
    %1192 = vmatprep.subr.bf16.mxu0 0
    %1193 = vmatpush1.bf16.msra.mxu0 0
    %1194 = vmatprep.subr.bf16.mxu0 0
    %1195 = vmatpush1.bf16.msra.mxu0 0
    %1196 = vmatprep.subr.bf16.mxu0 0
    %1197 = vmatpush1.bf16.msra.mxu0 0
    %1198 = vmatprep.subr.bf16.mxu0 0
    %1199 = vmatpush1.bf16.msra.mxu0 0
    %1200 = vmatprep.mubr.bf16.mxu0 0
    %1201 = vmatmul.mubr.bf16.gmra.mrb[0].mxu0 %v1166
    %v1202 = vpop.f32.mrb[0].mxu0
    %v1203 = vadd.f32 %v917, %v1202
    %v1204 = vpop.f32.mrb[0].mxu0
    %v1205 = vpop.f32.mrb[0].mxu0
    %v1206 = vpop.f32.mrb[0].mxu0
    %1207 = vdwg.mxu0
    %v1208 = vxor.u32 %v1203, 2147483648
    %v1209 = vmul.f32 %v1208, 1.442695
    %v1210 = vpow.pop %v1209
    %v1211 = vadd.f32 %v1210, 1.0
    %v1212 = vrcp.pop %v1211
    %v1213 = vmul.f32 1.0, %v1212
    %v1214 = vtanh.pop %v1203
    %v1215 = vmul.f32 %v1213, %v1147
    %1217 = vrot.lane.b32.xlu0 %v1214, 64
    %v1218 = vpop.permute.xlu0 %1217
    %v1220 = vmul.f32 %v1213, %v1218
    %1222 = vrot.lane.b32.xlu0 %v1220, 32
    %v1223 = vpop.permute.xlu0 %1222
    %v1225 = vadd.f32 %v1215, %v1223
    %v1226 = vtanh.pop %v1225
    %1228 = vrot.lane.b32.xlu0 %v1226, 64
    %v1229 = vpop.permute.xlu0 %1228
    %v1231 = vmul.f32 %v1213, %v1229
    %v1232 = vpack.c.bf16 %v1231, %v1231
    %v1234 = vunpack.c.l.b16 %v1232
    %v1235 = vpack.c.b16 %v1234, %v1234
    %1236 = vrot.lane.b32.xlu0 %v1235, 32
    %v1237 = vpop.permute.xlu0 %1236
    %s1239 = scalar_lea.vmem [#allocation4], 12
    %1240 = vst.msk [vmem:[%s1239] sm:$0xf] %vm339, %v1237
    %v1241 = vld [vmem:[#allocation3] sm:$0xf]
    %v1242 = vld [vmem:[#allocation3 + $0x4] sm:$0xf]
    %v1243 = vld [vmem:[#allocation3 + $0x8] sm:$0xf]
    %v1244 = vld [vmem:[#allocation3 + $0xc] sm:$0xf]
    %v1245 = vld [vmem:[#allocation3 + $0x10] sm:$0xf]
    %v1246 = vld [vmem:[#allocation3 + $0x14] sm:$0xf]
    %v1247 = vld [vmem:[#allocation3 + $0x18] sm:$0xf]
    %v1248 = vld [vmem:[#allocation3 + $0x1c] sm:$0xf]
    %v1249 = vld [vmem:[#allocation12] sm:$0xf]
    %v1250 = vld [vmem:[#allocation12 + $0x4] sm:$0xf]
    %v1251 = vld [vmem:[#allocation12 + $0x8] sm:$0xf]
    %v1252 = vld [vmem:[#allocation12 + $0xc] sm:$0xf]
    %v1261 = vunpack.c.l.b16 %v1241
    %v1262 = vunpack.c.l.b16 %v1242
    %v1263 = vunpack.c.l.b16 %v1243
    %v1264 = vunpack.c.l.b16 %v1244
    %v1265 = vunpack.c.l.b16 %v1245
    %v1266 = vunpack.c.l.b16 %v1246
    %v1267 = vunpack.c.l.b16 %v1247
    %v1268 = vunpack.c.l.b16 %v1248
    %v1269 = vpack.c.b16 %v1262, %v1261
    %v1270 = vpack.c.b16 %v1264, %v1263
    %v1271 = vpack.c.b16 %v1266, %v1265
    %v1272 = vpack.c.b16 %v1268, %v1267
    %v1277 = vunpack.c.l.b16 %v1249
    %v1278 = vunpack.c.l.b16 %v1250
    %v1279 = vunpack.c.l.b16 %v1251
    %v1280 = vunpack.c.l.b16 %v1252
    %v1281 = vpack.c.b16 %v1278, %v1277
    %v1282 = vpack.c.b16 %v1280, %v1279
    %v1286 = vsel %vm165, %v1269, 0
    %v1289 = vsel %vm165, %v1270, 0
    %v1292 = vsel %vm165, %v1271, 0
    %v1295 = vsel %vm165, %v1272, 0
    %1297 = vmatprep.subr.bf16.mxu0 0
    %1298 = vmatpush1.bf16.msra.mxu0 %v1281
    %1299 = vmatprep.subr.bf16.mxu0 0
    %1300 = vmatpush1.bf16.msra.mxu0 %v1282
    %1301 = vmatprep.subr.bf16.mxu0 0
    %1302 = vmatpush1.bf16.msra.mxu0 0
    %1303 = vmatprep.subr.bf16.mxu0 0
    %1304 = vmatpush1.bf16.msra.mxu0 0
    %1305 = vmatprep.subr.bf16.mxu0 0
    %1306 = vmatpush1.bf16.msra.mxu0 0
    %1307 = vmatprep.subr.bf16.mxu0 0
    %1308 = vmatpush1.bf16.msra.mxu0 0
    %1309 = vmatprep.subr.bf16.mxu0 0
    %1310 = vmatpush1.bf16.msra.mxu0 0
    %1311 = vmatprep.subr.bf16.mxu0 0
    %1312 = vmatpush1.bf16.msra.mxu0 0
    %1313 = vmatprep.subr.bf16.mxu0 0
    %1314 = vmatpush1.bf16.msra.mxu0 0
    %1315 = vmatprep.subr.bf16.mxu0 0
    %1316 = vmatpush1.bf16.msra.mxu0 0
    %1317 = vmatprep.subr.bf16.mxu0 0
    %1318 = vmatpush1.bf16.msra.mxu0 0
    %1319 = vmatprep.subr.bf16.mxu0 0
    %1320 = vmatpush1.bf16.msra.mxu0 0
    %1321 = vmatprep.subr.bf16.mxu0 0
    %1322 = vmatpush1.bf16.msra.mxu0 0
    %1323 = vmatprep.subr.bf16.mxu0 0
    %1324 = vmatpush1.bf16.msra.mxu0 0
    %1325 = vmatprep.subr.bf16.mxu0 0
    %1326 = vmatpush1.bf16.msra.mxu0 0
    %1327 = vmatprep.subr.bf16.mxu0 0
    %1328 = vmatpush1.bf16.msra.mxu0 0
    %1329 = vmatprep.mubr.bf16.mxu0 0
    %1330 = vmatmul.mubr.bf16.gmra.mrb[0].mxu0 %v1286
    %v1331 = vpop.f32.mrb[0].mxu0
    %v1332 = vadd.f32 0.0, %v1331
    %v1333 = vpop.f32.mrb[0].mxu0
    %v1334 = vpop.f32.mrb[0].mxu0
    %v1335 = vadd.f32 0.0, %v1334
    %v1336 = vpop.f32.mrb[0].mxu0
    %1337 = vmatprep.mubr.bf16.mxu0 0
    %1338 = vmatmul.mubr.bf16.gmra.mrb[0].mxu0 %v1289
    %v1339 = vpop.f32.mrb[0].mxu0
    %v1340 = vadd.f32 0.0, %v1339
    %v1341 = vpop.f32.mrb[0].mxu0
    %v1342 = vpop.f32.mrb[0].mxu0
    %v1343 = vadd.f32 0.0, %v1342
    %v1344 = vpop.f32.mrb[0].mxu0
    %1345 = vmatprep.mubr.bf16.mxu0 0
    %1346 = vmatmul.mubr.bf16.gmra.mrb[0].mxu0 %v1292
    %v1347 = vpop.f32.mrb[0].mxu0
    %v1348 = vadd.f32 0.0, %v1347
    %v1349 = vpop.f32.mrb[0].mxu0
    %v1350 = vpop.f32.mrb[0].mxu0
    %v1351 = vadd.f32 0.0, %v1350
    %v1352 = vpop.f32.mrb[0].mxu0
    %1353 = vmatprep.mubr.bf16.mxu0 0
    %1354 = vmatmul.mubr.bf16.gmra.mrb[0].mxu0 %v1295
    %v1355 = vpop.f32.mrb[0].mxu0
    %v1356 = vadd.f32 0.0, %v1355
    %v1357 = vpop.f32.mrb[0].mxu0
    %v1358 = vpop.f32.mrb[0].mxu0
    %v1359 = vadd.f32 0.0, %v1358
    %v1360 = vpop.f32.mrb[0].mxu0
    %1361 = vdwg.mxu0
    %v1362 = vld [vmem:[#allocation4] sm:$0xf]
    %v1363 = vld [vmem:[#allocation4 + $0x4] sm:$0xf]
    %v1364 = vld [vmem:[#allocation4 + $0x8] sm:$0xf]
    %v1365 = vld [vmem:[#allocation4 + $0xc] sm:$0xf]
    %v1366 = vld [vmem:[#allocation14] sm:$0xf]
    %v1367 = vld [vmem:[#allocation14 + $0x4] sm:$0xf]
    %v1368 = vld [vmem:[#allocation14 + $0x8] sm:$0xf]
    %v1369 = vld [vmem:[#allocation14 + $0xc] sm:$0xf]
    %v1370 = vld [vmem:[%s8] sm:$0x1]
    %v1372 = vlaneseq
    %v1373 = vshrl.u32 %v1372, 7
    %v1374 = vsub.s32 0, %v1373
    %v1375 = vrot.slane %v1370, %v1374
    %v1381 = vunpack.c.l.b16 %v1362
    %v1382 = vunpack.c.l.b16 %v1363
    %v1383 = vunpack.c.l.b16 %v1364
    %v1384 = vunpack.c.l.b16 %v1365
    %v1385 = vpack.c.b16 %v1382, %v1381
    %v1386 = vpack.c.b16 %v1384, %v1383
    %v1391 = vunpack.c.l.b16 %v1366
    %v1392 = vunpack.c.l.b16 %v1367
    %v1393 = vunpack.c.l.b16 %v1368
    %v1394 = vunpack.c.l.b16 %v1369
    %v1395 = vpack.c.b16 %v1392, %v1391
    %v1396 = vpack.c.b16 %v1394, %v1393
    %v1400 = vsel %vm165, %v1385, 0
    %v1403 = vsel %vm165, %v1386, 0
    %1405 = vmatprep.subr.bf16.mxu0 0
    %1406 = vmatpush1.bf16.msra.mxu0 %v1395
    %1407 = vmatprep.subr.bf16.mxu0 0
    %1408 = vmatpush1.bf16.msra.mxu0 %v1396
    %1409 = vmatprep.subr.bf16.mxu0 0
    %1410 = vmatpush1.bf16.msra.mxu0 0
    %1411 = vmatprep.subr.bf16.mxu0 0
    %1412 = vmatpush1.bf16.msra.mxu0 0
    %1413 = vmatprep.subr.bf16.mxu0 0
    %1414 = vmatpush1.bf16.msra.mxu0 0
    %1415 = vmatprep.subr.bf16.mxu0 0
    %1416 = vmatpush1.bf16.msra.mxu0 0
    %1417 = vmatprep.subr.bf16.mxu0 0
    %1418 = vmatpush1.bf16.msra.mxu0 0
    %1419 = vmatprep.subr.bf16.mxu0 0
    %1420 = vmatpush1.bf16.msra.mxu0 0
    %1421 = vmatprep.subr.bf16.mxu0 0
    %1422 = vmatpush1.bf16.msra.mxu0 0
    %1423 = vmatprep.subr.bf16.mxu0 0
    %1424 = vmatpush1.bf16.msra.mxu0 0
    %1425 = vmatprep.subr.bf16.mxu0 0
    %1426 = vmatpush1.bf16.msra.mxu0 0
    %1427 = vmatprep.subr.bf16.mxu0 0
    %1428 = vmatpush1.bf16.msra.mxu0 0
    %1429 = vmatprep.subr.bf16.mxu0 0
    %1430 = vmatpush1.bf16.msra.mxu0 0
    %1431 = vmatprep.subr.bf16.mxu0 0
    %1432 = vmatpush1.bf16.msra.mxu0 0
    %1433 = vmatprep.subr.bf16.mxu0 0
    %1434 = vmatpush1.bf16.msra.mxu0 0
    %1435 = vmatprep.subr.bf16.mxu0 0
    %1436 = vmatpush1.bf16.msra.mxu0 0
    %1437 = vmatprep.mubr.bf16.mxu0 0
    %1438 = vmatmul.mubr.bf16.gmra.mrb[0].mxu0 %v1400
    %v1439 = vpop.f32.mrb[0].mxu0
    %v1440 = vadd.f32 %v1375, %v1439
    %v1441 = vpop.f32.mrb[0].mxu0
    %v1442 = vpop.f32.mrb[0].mxu0
    %v1443 = vadd.f32 %v1375, %v1442
    %v1444 = vpop.f32.mrb[0].mxu0
    %1445 = vmatprep.mubr.bf16.mxu0 0
    %1446 = vmatmul.mubr.bf16.gmra.mrb[0].mxu0 %v1403
    %v1447 = vpop.f32.mrb[0].mxu0
    %v1448 = vadd.f32 %v1375, %v1447
    %v1449 = vpop.f32.mrb[0].mxu0
    %v1450 = vpop.f32.mrb[0].mxu0
    %v1451 = vadd.f32 %v1375, %v1450
    %v1452 = vpop.f32.mrb[0].mxu0
    %1453 = vdwg.mxu0
    %v1454 = vpack.c.bf16 %v1332, %v1332
    %v1455 = vpack.c.bf16 %v1335, %v1335
    %v1456 = vpack.c.bf16 %v1340, %v1340
    %v1457 = vpack.c.bf16 %v1343, %v1343
    %v1458 = vpack.c.bf16 %v1348, %v1348
    %v1459 = vpack.c.bf16 %v1351, %v1351
    %v1460 = vpack.c.bf16 %v1356, %v1356
    %v1461 = vpack.c.bf16 %v1359, %v1359
    %v1462 = vpack.c.bf16 %v1440, %v1440
    %v1463 = vpack.c.bf16 %v1443, %v1443
    %v1464 = vpack.c.bf16 %v1448, %v1448
    %v1465 = vpack.c.bf16 %v1451, %v1451
    %v1466 = vld [vmem:[%s9] sm:$0x1]
    %v1467 = vpack.c.bf16 %v1466, %v1466
    %v1468 = vld [vmem:[#allocation5] sm:$0x1]
    %v1469 = vadd.bf16 %v1454, %v1462
    %v1470 = vadd.bf16 %v1455, %v1462
    %v1471 = vadd.bf16 %v1456, %v1462
    %v1472 = vadd.bf16 %v1457, %v1462
    %v1473 = vadd.bf16 %v1458, %v1462
    %v1474 = vadd.bf16 %v1459, %v1462
    %v1475 = vadd.bf16 %v1460, %v1462
    %v1476 = vadd.bf16 %v1461, %v1462
    %v1477 = vtanh.bf16.pop %v1469
    %v1478 = vtanh.bf16.pop %v1470
    %v1479 = vtanh.bf16.pop %v1471
    %v1480 = vtanh.bf16.pop %v1472
    %v1481 = vtanh.bf16.pop %v1473
    %v1482 = vtanh.bf16.pop %v1474
    %v1483 = vtanh.bf16.pop %v1475
    %v1484 = vtanh.bf16.pop %v1476
    %v1486 = vpack.i.b16 %v1467, %v1467
    %v1488 = vlaneseq
    %v1489 = vshrl.u32 %v1488, 7
    %v1490 = vsub.s32 0, %v1489
    %v1491 = vrot.slane %v1486, %v1490
    %v1492 = vmul.bf16 %v1477, %v1491
    %v1493 = vmul.bf16 %v1478, %v1491
    %v1494 = vmul.bf16 %v1479, %v1491
    %v1495 = vmul.bf16 %v1480, %v1491
    %v1496 = vmul.bf16 %v1481, %v1491
    %v1497 = vmul.bf16 %v1482, %v1491
    %v1498 = vmul.bf16 %v1483, %v1491
    %v1499 = vmul.bf16 %v1484, %v1491
    %v1500 = vunpack.c.l.bf16 %v1492
    %v1501 = vunpack.c.l.bf16 %v1493
    %v1502 = vunpack.c.l.bf16 %v1494
    %v1503 = vunpack.c.l.bf16 %v1495
    %v1504 = vunpack.c.l.bf16 %v1496
    %v1505 = vunpack.c.l.bf16 %v1497
    %v1506 = vunpack.c.l.bf16 %v1498
    %v1507 = vunpack.c.l.bf16 %v1499
    %v1508 = vsel %vm165, %v1500, 0.0
    %1509 = vadd.xlane.f32.xlu0 %v1508
    %v1510 = vpop.xlane.xlu0 %1509
    %v1511 = vsel %vm165, %v1501, 0.0
    %1512 = vadd.xlane.f32.xlu0 %v1511
    %v1513 = vpop.xlane.xlu0 %1512
    %v1514 = vsel %vm165, %v1502, 0.0
    %1515 = vadd.xlane.f32.xlu0 %v1514
    %v1516 = vpop.xlane.xlu0 %1515
    %v1517 = vsel %vm165, %v1503, 0.0
    %1518 = vadd.xlane.f32.xlu0 %v1517
    %v1519 = vpop.xlane.xlu0 %1518
    %v1520 = vsel %vm165, %v1504, 0.0
    %1521 = vadd.xlane.f32.xlu0 %v1520
    %v1522 = vpop.xlane.xlu0 %1521
    %v1523 = vsel %vm165, %v1505, 0.0
    %1524 = vadd.xlane.f32.xlu0 %v1523
    %v1525 = vpop.xlane.xlu0 %1524
    %v1526 = vsel %vm165, %v1506, 0.0
    %1527 = vadd.xlane.f32.xlu0 %v1526
    %v1528 = vpop.xlane.xlu0 %1527
    %v1529 = vsel %vm165, %v1507, 0.0
    %1530 = vadd.xlane.f32.xlu0 %v1529
    %v1531 = vpop.xlane.xlu0 %1530
    %v1533 = vlaneseq
    %v1534 = vshrl.u32 %v1533, 7
    %v1535 = vsub.s32 0, %v1534
    %v1536 = vrot.slane %v1468, %v1535
    %1537 = vset.pattern.permute.xlu0 0
    %1538 = vperm.xlu0 %1537, %v1536
    %v1539 = vpop.permute.xlu0 %1538
    %v1541 = vadd.f32 %v1510, %v1539
    %v1542 = vadd.f32 %v1513, %v1539
    %v1543 = vadd.f32 %v1516, %v1539
    %v1544 = vadd.f32 %v1519, %v1539
    %v1545 = vadd.f32 %v1522, %v1539
    %v1546 = vadd.f32 %v1525, %v1539
    %v1547 = vadd.f32 %v1528, %v1539
    %v1548 = vadd.f32 %v1531, %v1539
    %v1557 = vlaneseq
    %v1558 = vand.u32 %v1557, 127
    %v1559 = vlaneseq
    %v1560 = vshrl.u32 %v1559, 7
    %v1561 = vsub.s32 %v1558, %v1560
    %v1562 = vrot.slane %v1541, %v1561
    %v1563 = vlaneseq
    %v1564 = vshrl.u32 %v1563, 7
    %v1565 = vsub.s32 %v1558, %v1564
    %v1566 = vrot.slane %v1542, %v1565
    %v1567 = vlaneseq
    %v1568 = vshrl.u32 %v1567, 7
    %v1569 = vsub.s32 %v1558, %v1568
    %v1570 = vrot.slane %v1543, %v1569
    %v1571 = vlaneseq
    %v1572 = vshrl.u32 %v1571, 7
    %v1573 = vsub.s32 %v1558, %v1572
    %v1574 = vrot.slane %v1544, %v1573
    %v1575 = vlaneseq
    %v1576 = vshrl.u32 %v1575, 7
    %v1577 = vsub.s32 %v1558, %v1576
    %v1578 = vrot.slane %v1545, %v1577
    %v1579 = vlaneseq
    %v1580 = vshrl.u32 %v1579, 7
    %v1581 = vsub.s32 %v1558, %v1580
    %v1582 = vrot.slane %v1546, %v1581
    %v1583 = vlaneseq
    %v1584 = vshrl.u32 %v1583, 7
    %v1585 = vsub.s32 %v1558, %v1584
    %v1586 = vrot.slane %v1547, %v1585
    %v1587 = vlaneseq
    %v1588 = vshrl.u32 %v1587, 7
    %v1589 = vsub.s32 %v1558, %v1588
    %v1590 = vrot.slane %v1548, %v1589
    %vm1591 = vcmask 1041409
    %v1592 = vsel %vm1591, %v1566, %v1562
    %vm1593 = vcmask 1042434
    %v1594 = vsel %vm1593, %v1570, %v1592
    %vm1595 = vcmask 1043459
    %v1596 = vsel %vm1595, %v1574, %v1594
    %vm1597 = vcmask 1044484
    %v1598 = vsel %vm1597, %v1578, %v1596
    %vm1599 = vcmask 1045509
    %v1600 = vsel %vm1599, %v1582, %v1598
    %vm1601 = vcmask 1046534
    %v1602 = vsel %vm1601, %v1586, %v1600
    %vm1603 = vcmask 1047559
    %v1604 = vsel %vm1603, %v1590, %v1602
    %1606 = vxpose.xlu0.b32.start [1/16] %v1604, 128
    %1607 = vxpose.xlu0.b32.cont [2/16] 0.0, 128
    %1608 = vxpose.xlu0.b32.cont [3/16] 0.0, 128
    %1609 = vxpose.xlu0.b32.cont [4/16] 0.0, 128
    %1610 = vxpose.xlu0.b32.cont [5/16] 0.0, 128
    %1611 = vxpose.xlu0.b32.cont [6/16] 0.0, 128
    %1612 = vxpose.xlu0.b32.cont [7/16] 0.0, 128
    %1613 = vxpose.xlu0.b32.cont [8/16] 0.0, 128
    %1614 = vxpose.xlu0.b32.cont [9/16] 0.0, 128
    %1615 = vxpose.xlu0.b32.cont [10/16] 0.0, 128
    %1616 = vxpose.xlu0.b32.cont [11/16] 0.0, 128
    %1617 = vxpose.xlu0.b32.cont [12/16] 0.0, 128
    %1618 = vxpose.xlu0.b32.cont [13/16] 0.0, 128
    %1619 = vxpose.xlu0.b32.cont [14/16] 0.0, 128
    %1620 = vxpose.xlu0.b32.cont [15/16] 0.0, 128
    %1621 = vxpose.xlu0.b32.end [16/16] 0.0, 128
    %v1622 = vpop.trf.xlu0
    %v1623 = vpop.trf.xlu0
    %v1624 = vpop.trf.xlu0
    %v1625 = vpop.trf.xlu0
    %v1626 = vpop.trf.xlu0
    %v1627 = vpop.trf.xlu0
    %v1628 = vpop.trf.xlu0
    %v1629 = vpop.trf.xlu0
    %v1630 = vpop.trf.xlu0
    %v1631 = vpop.trf.xlu0
    %v1632 = vpop.trf.xlu0
    %v1633 = vpop.trf.xlu0
    %v1634 = vpop.trf.xlu0
    %v1635 = vpop.trf.xlu0
    %v1636 = vpop.trf.xlu0
    %v1637 = vpop.trf.xlu0
    %vm1638 = vcmask 64512
    %v1639 = vsel %vm1638, %v1622, -inf
    %1640 = vmax.xlane.f32.xlu0 %v1639
    %v1641 = vpop.xlane.xlu0 %1640
    %v1642 = vsub.f32 %v1622, %v1641
    %v1643 = vmul.f32 %v1642, 1.442695
    %v1644 = vpow.pop %v1643
    %v1645 = vsel %vm1638, %v1644, 0.0
    %1646 = vadd.xlane.f32.xlu0 %v1645
    %v1647 = vpop.xlane.xlu0 %1646
    %v1648 = vlog2.pop %v1647
    %v1649 = vmul.f32 %v1648, 0.6931472
    %v1650 = vsub.f32 %v1642, %v1649
    %1651 = vst.msk [vmem:[#allocation15] sm:$0xff] %vm1638, %v1650
    %v1652 = vadd.bf16 %v1454, %v1463
    %v1653 = vadd.bf16 %v1455, %v1463
    %v1654 = vadd.bf16 %v1456, %v1463
    %v1655 = vadd.bf16 %v1457, %v1463
    %v1656 = vadd.bf16 %v1458, %v1463
    %v1657 = vadd.bf16 %v1459, %v1463
    %v1658 = vadd.bf16 %v1460, %v1463
    %v1659 = vadd.bf16 %v1461, %v1463
    %v1660 = vtanh.bf16.pop %v1652
    %v1661 = vtanh.bf16.pop %v1653
    %v1662 = vtanh.bf16.pop %v1654
    %v1663 = vtanh.bf16.pop %v1655
    %v1664 = vtanh.bf16.pop %v1656
    %v1665 = vtanh.bf16.pop %v1657
    %v1666 = vtanh.bf16.pop %v1658
    %v1667 = vtanh.bf16.pop %v1659
    %v1668 = vmul.bf16 %v1660, %v1491
    %v1669 = vmul.bf16 %v1661, %v1491
    %v1670 = vmul.bf16 %v1662, %v1491
    %v1671 = vmul.bf16 %v1663, %v1491
    %v1672 = vmul.bf16 %v1664, %v1491
    %v1673 = vmul.bf16 %v1665, %v1491
    %v1674 = vmul.bf16 %v1666, %v1491
    %v1675 = vmul.bf16 %v1667, %v1491
    %v1676 = vunpack.c.l.bf16 %v1668
    %v1677 = vunpack.c.l.bf16 %v1669
    %v1678 = vunpack.c.l.bf16 %v1670
    %v1679 = vunpack.c.l.bf16 %v1671
    %v1680 = vunpack.c.l.bf16 %v1672
    %v1681 = vunpack.c.l.bf16 %v1673
    %v1682 = vunpack.c.l.bf16 %v1674
    %v1683 = vunpack.c.l.bf16 %v1675
    %v1684 = vsel %vm165, %v1676, 0.0
    %1685 = vadd.xlane.f32.xlu0 %v1684
    %v1686 = vpop.xlane.xlu0 %1685
    %v1687 = vsel %vm165, %v1677, 0.0
    %1688 = vadd.xlane.f32.xlu0 %v1687
    %v1689 = vpop.xlane.xlu0 %1688
    %v1690 = vsel %vm165, %v1678, 0.0
    %1691 = vadd.xlane.f32.xlu0 %v1690
    %v1692 = vpop.xlane.xlu0 %1691
    %v1693 = vsel %vm165, %v1679, 0.0
    %1694 = vadd.xlane.f32.xlu0 %v1693
    %v1695 = vpop.xlane.xlu0 %1694
    %v1696 = vsel %vm165, %v1680, 0.0
    %1697 = vadd.xlane.f32.xlu0 %v1696
    %v1698 = vpop.xlane.xlu0 %1697
    %v1699 = vsel %vm165, %v1681, 0.0
    %1700 = vadd.xlane.f32.xlu0 %v1699
    %v1701 = vpop.xlane.xlu0 %1700
    %v1702 = vsel %vm165, %v1682, 0.0
    %1703 = vadd.xlane.f32.xlu0 %v1702
    %v1704 = vpop.xlane.xlu0 %1703
    %v1705 = vsel %vm165, %v1683, 0.0
    %1706 = vadd.xlane.f32.xlu0 %v1705
    %v1707 = vpop.xlane.xlu0 %1706
    %v1708 = vadd.f32 %v1686, %v1539
    %v1709 = vadd.f32 %v1689, %v1539
    %v1710 = vadd.f32 %v1692, %v1539
    %v1711 = vadd.f32 %v1695, %v1539
    %v1712 = vadd.f32 %v1698, %v1539
    %v1713 = vadd.f32 %v1701, %v1539
    %v1714 = vadd.f32 %v1704, %v1539
    %v1715 = vadd.f32 %v1707, %v1539
    %v1724 = vlaneseq
    %v1725 = vshrl.u32 %v1724, 7
    %v1726 = vsub.s32 %v1558, %v1725
    %v1727 = vrot.slane %v1708, %v1726
    %v1728 = vlaneseq
    %v1729 = vshrl.u32 %v1728, 7
    %v1730 = vsub.s32 %v1558, %v1729
    %v1731 = vrot.slane %v1709, %v1730
    %v1732 = vlaneseq
    %v1733 = vshrl.u32 %v1732, 7
    %v1734 = vsub.s32 %v1558, %v1733
    %v1735 = vrot.slane %v1710, %v1734
    %v1736 = vlaneseq
    %v1737 = vshrl.u32 %v1736, 7
    %v1738 = vsub.s32 %v1558, %v1737
    %v1739 = vrot.slane %v1711, %v1738
    %v1740 = vlaneseq
    %v1741 = vshrl.u32 %v1740, 7
    %v1742 = vsub.s32 %v1558, %v1741
    %v1743 = vrot.slane %v1712, %v1742
    %v1744 = vlaneseq
    %v1745 = vshrl.u32 %v1744, 7
    %v1746 = vsub.s32 %v1558, %v1745
    %v1747 = vrot.slane %v1713, %v1746
    %v1748 = vlaneseq
    %v1749 = vshrl.u32 %v1748, 7
    %v1750 = vsub.s32 %v1558, %v1749
    %v1751 = vrot.slane %v1714, %v1750
    %v1752 = vlaneseq
    %v1753 = vshrl.u32 %v1752, 7
    %v1754 = vsub.s32 %v1558, %v1753
    %v1755 = vrot.slane %v1715, %v1754
    %v1756 = vsel %vm1591, %v1731, %v1727
    %v1757 = vsel %vm1593, %v1735, %v1756
    %v1758 = vsel %vm1595, %v1739, %v1757
    %v1759 = vsel %vm1597, %v1743, %v1758
    %v1760 = vsel %vm1599, %v1747, %v1759
    %v1761 = vsel %vm1601, %v1751, %v1760
    %v1762 = vsel %vm1603, %v1755, %v1761
    %1764 = vxpose.xlu0.b32.start [1/16] %v1762, 128
    %1765 = vxpose.xlu0.b32.cont [2/16] 0.0, 128
    %1766 = vxpose.xlu0.b32.cont [3/16] 0.0, 128
    %1767 = vxpose.xlu0.b32.cont [4/16] 0.0, 128
    %1768 = vxpose.xlu0.b32.cont [5/16] 0.0, 128
    %1769 = vxpose.xlu0.b32.cont [6/16] 0.0, 128
    %1770 = vxpose.xlu0.b32.cont [7/16] 0.0, 128
    %1771 = vxpose.xlu0.b32.cont [8/16] 0.0, 128
    %1772 = vxpose.xlu0.b32.cont [9/16] 0.0, 128
    %1773 = vxpose.xlu0.b32.cont [10/16] 0.0, 128
    %1774 = vxpose.xlu0.b32.cont [11/16] 0.0, 128
    %1775 = vxpose.xlu0.b32.cont [12/16] 0.0, 128
    %1776 = vxpose.xlu0.b32.cont [13/16] 0.0, 128
    %1777 = vxpose.xlu0.b32.cont [14/16] 0.0, 128
    %1778 = vxpose.xlu0.b32.cont [15/16] 0.0, 128
    %1779 = vxpose.xlu0.b32.end [16/16] 0.0, 128
    %v1780 = vpop.trf.xlu0
    %v1781 = vpop.trf.xlu0
    %v1782 = vpop.trf.xlu0
    %v1783 = vpop.trf.xlu0
    %v1784 = vpop.trf.xlu0
    %v1785 = vpop.trf.xlu0
    %v1786 = vpop.trf.xlu0
    %v1787 = vpop.trf.xlu0
    %v1788 = vpop.trf.xlu0
    %v1789 = vpop.trf.xlu0
    %v1790 = vpop.trf.xlu0
    %v1791 = vpop.trf.xlu0
    %v1792 = vpop.trf.xlu0
    %v1793 = vpop.trf.xlu0
    %v1794 = vpop.trf.xlu0
    %v1795 = vpop.trf.xlu0
    %v1796 = vsel %vm1638, %v1780, -inf
    %1797 = vmax.xlane.f32.xlu0 %v1796
    %v1798 = vpop.xlane.xlu0 %1797
    %v1799 = vsub.f32 %v1780, %v1798
    %v1800 = vmul.f32 %v1799, 1.442695
    %v1801 = vpow.pop %v1800
    %v1802 = vsel %vm1638, %v1801, 0.0
    %1803 = vadd.xlane.f32.xlu0 %v1802
    %v1804 = vpop.xlane.xlu0 %1803
    %v1805 = vlog2.pop %v1804
    %v1806 = vmul.f32 %v1805, 0.6931472
    %v1807 = vsub.f32 %v1799, %v1806
    %s1808 = scalar_lea.vmem [#allocation15], 8
    %1809 = vst.msk [vmem:[%s1808] sm:$0xff] %vm1638, %v1807
    %v1810 = vadd.bf16 %v1454, %v1464
    %v1811 = vadd.bf16 %v1455, %v1464
    %v1812 = vadd.bf16 %v1456, %v1464
    %v1813 = vadd.bf16 %v1457, %v1464
    %v1814 = vadd.bf16 %v1458, %v1464
    %v1815 = vadd.bf16 %v1459, %v1464
    %v1816 = vadd.bf16 %v1460, %v1464
    %v1817 = vadd.bf16 %v1461, %v1464
    %v1818 = vtanh.bf16.pop %v1810
    %v1819 = vtanh.bf16.pop %v1811
    %v1820 = vtanh.bf16.pop %v1812
    %v1821 = vtanh.bf16.pop %v1813
    %v1822 = vtanh.bf16.pop %v1814
    %v1823 = vtanh.bf16.pop %v1815
    %v1824 = vtanh.bf16.pop %v1816
    %v1825 = vtanh.bf16.pop %v1817
    %v1826 = vmul.bf16 %v1818, %v1491
    %v1827 = vmul.bf16 %v1819, %v1491
    %v1828 = vmul.bf16 %v1820, %v1491
    %v1829 = vmul.bf16 %v1821, %v1491
    %v1830 = vmul.bf16 %v1822, %v1491
    %v1831 = vmul.bf16 %v1823, %v1491
    %v1832 = vmul.bf16 %v1824, %v1491
    %v1833 = vmul.bf16 %v1825, %v1491
    %v1834 = vunpack.c.l.bf16 %v1826
    %v1835 = vunpack.c.l.bf16 %v1827
    %v1836 = vunpack.c.l.bf16 %v1828
    %v1837 = vunpack.c.l.bf16 %v1829
    %v1838 = vunpack.c.l.bf16 %v1830
    %v1839 = vunpack.c.l.bf16 %v1831
    %v1840 = vunpack.c.l.bf16 %v1832
    %v1841 = vunpack.c.l.bf16 %v1833
    %v1842 = vsel %vm165, %v1834, 0.0
    %1843 = vadd.xlane.f32.xlu0 %v1842
    %v1844 = vpop.xlane.xlu0 %1843
    %v1845 = vsel %vm165, %v1835, 0.0
    %1846 = vadd.xlane.f32.xlu0 %v1845
    %v1847 = vpop.xlane.xlu0 %1846
    %v1848 = vsel %vm165, %v1836, 0.0
    %1849 = vadd.xlane.f32.xlu0 %v1848
    %v1850 = vpop.xlane.xlu0 %1849
    %v1851 = vsel %vm165, %v1837, 0.0
    %1852 = vadd.xlane.f32.xlu0 %v1851
    %v1853 = vpop.xlane.xlu0 %1852
    %v1854 = vsel %vm165, %v1838, 0.0
    %1855 = vadd.xlane.f32.xlu0 %v1854
    %v1856 = vpop.xlane.xlu0 %1855
    %v1857 = vsel %vm165, %v1839, 0.0
    %1858 = vadd.xlane.f32.xlu0 %v1857
    %v1859 = vpop.xlane.xlu0 %1858
    %v1860 = vsel %vm165, %v1840, 0.0
    %1861 = vadd.xlane.f32.xlu0 %v1860
    %v1862 = vpop.xlane.xlu0 %1861
    %v1863 = vsel %vm165, %v1841, 0.0
    %1864 = vadd.xlane.f32.xlu0 %v1863
    %v1865 = vpop.xlane.xlu0 %1864
    %v1866 = vadd.f32 %v1844, %v1539
    %v1867 = vadd.f32 %v1847, %v1539
    %v1868 = vadd.f32 %v1850, %v1539
    %v1869 = vadd.f32 %v1853, %v1539
    %v1870 = vadd.f32 %v1856, %v1539
    %v1871 = vadd.f32 %v1859, %v1539
    %v1872 = vadd.f32 %v1862, %v1539
    %v1873 = vadd.f32 %v1865, %v1539
    %v1882 = vlaneseq
    %v1883 = vshrl.u32 %v1882, 7
    %v1884 = vsub.s32 %v1558, %v1883
    %v1885 = vrot.slane %v1866, %v1884
    %v1886 = vlaneseq
    %v1887 = vshrl.u32 %v1886, 7
    %v1888 = vsub.s32 %v1558, %v1887
    %v1889 = vrot.slane %v1867, %v1888
    %v1890 = vlaneseq
    %v1891 = vshrl.u32 %v1890, 7
    %v1892 = vsub.s32 %v1558, %v1891
    %v1893 = vrot.slane %v1868, %v1892
    %v1894 = vlaneseq
    %v1895 = vshrl.u32 %v1894, 7
    %v1896 = vsub.s32 %v1558, %v1895
    %v1897 = vrot.slane %v1869, %v1896
    %v1898 = vlaneseq
    %v1899 = vshrl.u32 %v1898, 7
    %v1900 = vsub.s32 %v1558, %v1899
    %v1901 = vrot.slane %v1870, %v1900
    %v1902 = vlaneseq
    %v1903 = vshrl.u32 %v1902, 7
    %v1904 = vsub.s32 %v1558, %v1903
    %v1905 = vrot.slane %v1871, %v1904
    %v1906 = vlaneseq
    %v1907 = vshrl.u32 %v1906, 7
    %v1908 = vsub.s32 %v1558, %v1907
    %v1909 = vrot.slane %v1872, %v1908
    %v1910 = vlaneseq
    %v1911 = vshrl.u32 %v1910, 7
    %v1912 = vsub.s32 %v1558, %v1911
    %v1913 = vrot.slane %v1873, %v1912
    %v1914 = vsel %vm1591, %v1889, %v1885
    %v1915 = vsel %vm1593, %v1893, %v1914
    %v1916 = vsel %vm1595, %v1897, %v1915
    %v1917 = vsel %vm1597, %v1901, %v1916
    %v1918 = vsel %vm1599, %v1905, %v1917
    %v1919 = vsel %vm1601, %v1909, %v1918
    %v1920 = vsel %vm1603, %v1913, %v1919
    %1922 = vxpose.xlu0.b32.start [1/16] %v1920, 128
    %1923 = vxpose.xlu0.b32.cont [2/16] 0.0, 128
    %1924 = vxpose.xlu0.b32.cont [3/16] 0.0, 128
    %1925 = vxpose.xlu0.b32.cont [4/16] 0.0, 128
    %1926 = vxpose.xlu0.b32.cont [5/16] 0.0, 128
    %1927 = vxpose.xlu0.b32.cont [6/16] 0.0, 128
    %1928 = vxpose.xlu0.b32.cont [7/16] 0.0, 128
    %1929 = vxpose.xlu0.b32.cont [8/16] 0.0, 128
    %1930 = vxpose.xlu0.b32.cont [9/16] 0.0, 128
    %1931 = vxpose.xlu0.b32.cont [10/16] 0.0, 128
    %1932 = vxpose.xlu0.b32.cont [11/16] 0.0, 128
    %1933 = vxpose.xlu0.b32.cont [12/16] 0.0, 128
    %1934 = vxpose.xlu0.b32.cont [13/16] 0.0, 128
    %1935 = vxpose.xlu0.b32.cont [14/16] 0.0, 128
    %1936 = vxpose.xlu0.b32.cont [15/16] 0.0, 128
    %1937 = vxpose.xlu0.b32.end [16/16] 0.0, 128
    %v1938 = vpop.trf.xlu0
    %v1939 = vpop.trf.xlu0
    %v1940 = vpop.trf.xlu0
    %v1941 = vpop.trf.xlu0
    %v1942 = vpop.trf.xlu0
    %v1943 = vpop.trf.xlu0
    %v1944 = vpop.trf.xlu0
    %v1945 = vpop.trf.xlu0
    %v1946 = vpop.trf.xlu0
    %v1947 = vpop.trf.xlu0
    %v1948 = vpop.trf.xlu0
    %v1949 = vpop.trf.xlu0
    %v1950 = vpop.trf.xlu0
    %v1951 = vpop.trf.xlu0
    %v1952 = vpop.trf.xlu0
    %v1953 = vpop.trf.xlu0
    %v1954 = vsel %vm1638, %v1938, -inf
    %1955 = vmax.xlane.f32.xlu0 %v1954
    %v1956 = vpop.xlane.xlu0 %1955
    %v1957 = vsub.f32 %v1938, %v1956
    %v1958 = vmul.f32 %v1957, 1.442695
    %v1959 = vpow.pop %v1958
    %v1960 = vsel %vm1638, %v1959, 0.0
    %1961 = vadd.xlane.f32.xlu0 %v1960
    %v1962 = vpop.xlane.xlu0 %1961
    %v1963 = vlog2.pop %v1962
    %v1964 = vmul.f32 %v1963, 0.6931472
    %v1965 = vsub.f32 %v1957, %v1964
    %s1966 = scalar_lea.vmem [#allocation15], 16
    %1967 = vst.msk [vmem:[%s1966] sm:$0xff] %vm1638, %v1965
    %v1968 = vadd.bf16 %v1454, %v1465
    %v1969 = vadd.bf16 %v1455, %v1465
    %v1970 = vadd.bf16 %v1456, %v1465
    %v1971 = vadd.bf16 %v1457, %v1465
    %v1972 = vadd.bf16 %v1458, %v1465
    %v1973 = vadd.bf16 %v1459, %v1465
    %v1974 = vadd.bf16 %v1460, %v1465
    %v1975 = vadd.bf16 %v1461, %v1465
    %v1976 = vtanh.bf16.pop %v1968
    %v1977 = vtanh.bf16.pop %v1969
    %v1978 = vtanh.bf16.pop %v1970
    %v1979 = vtanh.bf16.pop %v1971
    %v1980 = vtanh.bf16.pop %v1972
    %v1981 = vtanh.bf16.pop %v1973
    %v1982 = vtanh.bf16.pop %v1974
    %v1983 = vtanh.bf16.pop %v1975
    %v1984 = vmul.bf16 %v1976, %v1491
    %v1985 = vmul.bf16 %v1977, %v1491
    %v1986 = vmul.bf16 %v1978, %v1491
    %v1987 = vmul.bf16 %v1979, %v1491
    %v1988 = vmul.bf16 %v1980, %v1491
    %v1989 = vmul.bf16 %v1981, %v1491
    %v1990 = vmul.bf16 %v1982, %v1491
    %v1991 = vmul.bf16 %v1983, %v1491
    %v1992 = vunpack.c.l.bf16 %v1984
    %v1993 = vunpack.c.l.bf16 %v1985
    %v1994 = vunpack.c.l.bf16 %v1986
    %v1995 = vunpack.c.l.bf16 %v1987
    %v1996 = vunpack.c.l.bf16 %v1988
    %v1997 = vunpack.c.l.bf16 %v1989
    %v1998 = vunpack.c.l.bf16 %v1990
    %v1999 = vunpack.c.l.bf16 %v1991
    %v2000 = vsel %vm165, %v1992, 0.0
    %2001 = vadd.xlane.f32.xlu0 %v2000
    %v2002 = vpop.xlane.xlu0 %2001
    %v2003 = vsel %vm165, %v1993, 0.0
    %2004 = vadd.xlane.f32.xlu0 %v2003
    %v2005 = vpop.xlane.xlu0 %2004
    %v2006 = vsel %vm165, %v1994, 0.0
    %2007 = vadd.xlane.f32.xlu0 %v2006
    %v2008 = vpop.xlane.xlu0 %2007
    %v2009 = vsel %vm165, %v1995, 0.0
    %2010 = vadd.xlane.f32.xlu0 %v2009
    %v2011 = vpop.xlane.xlu0 %2010
    %v2012 = vsel %vm165, %v1996, 0.0
    %2013 = vadd.xlane.f32.xlu0 %v2012
    %v2014 = vpop.xlane.xlu0 %2013
    %v2015 = vsel %vm165, %v1997, 0.0
    %2016 = vadd.xlane.f32.xlu0 %v2015
    %v2017 = vpop.xlane.xlu0 %2016
    %v2018 = vsel %vm165, %v1998, 0.0
    %2019 = vadd.xlane.f32.xlu0 %v2018
    %v2020 = vpop.xlane.xlu0 %2019
    %v2021 = vsel %vm165, %v1999, 0.0
    %2022 = vadd.xlane.f32.xlu0 %v2021
    %v2023 = vpop.xlane.xlu0 %2022
    %v2024 = vadd.f32 %v2002, %v1539
    %v2025 = vadd.f32 %v2005, %v1539
    %v2026 = vadd.f32 %v2008, %v1539
    %v2027 = vadd.f32 %v2011, %v1539
    %v2028 = vadd.f32 %v2014, %v1539
    %v2029 = vadd.f32 %v2017, %v1539
    %v2030 = vadd.f32 %v2020, %v1539
    %v2031 = vadd.f32 %v2023, %v1539
    %v2040 = vlaneseq
    %v2041 = vshrl.u32 %v2040, 7
    %v2042 = vsub.s32 %v1558, %v2041
    %v2043 = vrot.slane %v2024, %v2042
    %v2044 = vlaneseq
    %v2045 = vshrl.u32 %v2044, 7
    %v2046 = vsub.s32 %v1558, %v2045
    %v2047 = vrot.slane %v2025, %v2046
    %v2048 = vlaneseq
    %v2049 = vshrl.u32 %v2048, 7
    %v2050 = vsub.s32 %v1558, %v2049
    %v2051 = vrot.slane %v2026, %v2050
    %v2052 = vlaneseq
    %v2053 = vshrl.u32 %v2052, 7
    %v2054 = vsub.s32 %v1558, %v2053
    %v2055 = vrot.slane %v2027, %v2054
    %v2056 = vlaneseq
    %v2057 = vshrl.u32 %v2056, 7
    %v2058 = vsub.s32 %v1558, %v2057
    %v2059 = vrot.slane %v2028, %v2058
    %v2060 = vlaneseq
    %v2061 = vshrl.u32 %v2060, 7
    %v2062 = vsub.s32 %v1558, %v2061
    %v2063 = vrot.slane %v2029, %v2062
    %v2064 = vlaneseq
    %v2065 = vshrl.u32 %v2064, 7
    %v2066 = vsub.s32 %v1558, %v2065
    %v2067 = vrot.slane %v2030, %v2066
    %v2068 = vlaneseq
    %v2069 = vshrl.u32 %v2068, 7
    %v2070 = vsub.s32 %v1558, %v2069
    %v2071 = vrot.slane %v2031, %v2070
    %v2072 = vsel %vm1591, %v2047, %v2043
    %v2073 = vsel %vm1593, %v2051, %v2072
    %v2074 = vsel %vm1595, %v2055, %v2073
    %v2075 = vsel %vm1597, %v2059, %v2074
    %v2076 = vsel %vm1599, %v2063, %v2075
    %v2077 = vsel %vm1601, %v2067, %v2076
    %v2078 = vsel %vm1603, %v2071, %v2077
    %2080 = vxpose.xlu0.b32.start [1/16] %v2078, 128
    %2081 = vxpose.xlu0.b32.cont [2/16] 0.0, 128
    %2082 = vxpose.xlu0.b32.cont [3/16] 0.0, 128
    %2083 = vxpose.xlu0.b32.cont [4/16] 0.0, 128
    %2084 = vxpose.xlu0.b32.cont [5/16] 0.0, 128
    %2085 = vxpose.xlu0.b32.cont [6/16] 0.0, 128
    %2086 = vxpose.xlu0.b32.cont [7/16] 0.0, 128
    %2087 = vxpose.xlu0.b32.cont [8/16] 0.0, 128
    %2088 = vxpose.xlu0.b32.cont [9/16] 0.0, 128
    %2089 = vxpose.xlu0.b32.cont [10/16] 0.0, 128
    %2090 = vxpose.xlu0.b32.cont [11/16] 0.0, 128
    %2091 = vxpose.xlu0.b32.cont [12/16] 0.0, 128
    %2092 = vxpose.xlu0.b32.cont [13/16] 0.0, 128
    %2093 = vxpose.xlu0.b32.cont [14/16] 0.0, 128
    %2094 = vxpose.xlu0.b32.cont [15/16] 0.0, 128
    %2095 = vxpose.xlu0.b32.end [16/16] 0.0, 128
    %v2096 = vpop.trf.xlu0
    %v2097 = vpop.trf.xlu0
    %v2098 = vpop.trf.xlu0
    %v2099 = vpop.trf.xlu0
    %v2100 = vpop.trf.xlu0
    %v2101 = vpop.trf.xlu0
    %v2102 = vpop.trf.xlu0
    %v2103 = vpop.trf.xlu0
    %v2104 = vpop.trf.xlu0
    %v2105 = vpop.trf.xlu0
    %v2106 = vpop.trf.xlu0
    %v2107 = vpop.trf.xlu0
    %v2108 = vpop.trf.xlu0
    %v2109 = vpop.trf.xlu0
    %v2110 = vpop.trf.xlu0
    %v2111 = vpop.trf.xlu0
    %v2112 = vsel %vm1638, %v2096, -inf
    %2113 = vmax.xlane.f32.xlu0 %v2112
    %v2114 = vpop.xlane.xlu0 %2113
    %v2115 = vsub.f32 %v2096, %v2114
    %v2116 = vmul.f32 %v2115, 1.442695
    %v2117 = vpow.pop %v2116
    %v2118 = vsel %vm1638, %v2117, 0.0
    %2119 = vadd.xlane.f32.xlu0 %v2118
    %v2120 = vpop.xlane.xlu0 %2119
    %v2121 = vlog2.pop %v2120
    %v2122 = vmul.f32 %v2121, 0.6931472
    %v2123 = vsub.f32 %v2115, %v2122
    %s2124 = scalar_lea.vmem [#allocation15], 24
    %2125 = vst.msk [vmem:[%s2124] sm:$0xff] %vm1638, %v2123
    // Predicated region
    $region66: #{tpu_custom_call.1} parent=1 // pred_check
      _
    $region67: #{tpu_custom_call.1} parent=1 // pred_check_branch
      %2127 = sbr.rel (0) target = $region69
    $region68: #{tpu_custom_call.1} parent=1 // pred_region
      %s2129 = ssub.s32 512, 512
      %2130 = vsyncadd [#allocation8], %s2129
      %s2131 = sshll.u32 [#allocation15], 4
      %s2132 = int_to_ptr.vmem [resolvable:$true] %s2131
      %2137 = dma.vmem_to_hbm [thread:$0]  %s2132, 512, %s11, [#allocation8], 128, 128, 8
    $region69: #{tpu_custom_call.1} parent=1 // pred_fallthru
      _
    // Predicated region
    $region70: #{tpu_custom_call.1} parent=1 // pred_check
      _
    $region71: #{tpu_custom_call.1} parent=1 // pred_check_branch
      %2139 = sbr.rel (0) target = $region73
    $region72: #{tpu_custom_call.1} parent=1 // pred_region
      %2140 = dma.done [#allocation8], 512
    $region73: #{tpu_custom_call.1} parent=1 // pred_fallthru
      _
    %2141 = vsyncpa [#allocation7], 1
    %2142 = vsyncpa [#allocation10], 1
    %2143 = vsyncpa [#allocation13], 1
    %2144 = vsyncpa [#allocation8], 1

</llo_original>
